<compile_context>
chip_gen: v5e
topology: v5e:2x2
jax: 0.10.0
libtpu: 0.0.40
codegen_flags: <defaults>
</compile_context>

<pallas_src>
import jax
import jax.numpy as jnp
from jax.experimental import pallas as pl
from jax.experimental.pallas import tpu as pltpu


# ------------------------------ fused kernel ------------------------------

def _r_net_kernel(x_ref,
                  c1w, c1b, r1w1, r1b1, r1w2, r1b2,
                  c2w, c2b, r2w1, r2b1, r2w2, r2b2,
                  c3w, c3b, fcw, fcb, hw, hb, al,
                  conf_ref, off_ref,
                  s_c1, s_p1, s_m1, s_c2, s_p2, s_m2, s_c3):
    """One grid step == one image.  All refs are VMEM; activations in scratch."""
    f32 = jnp.float32

    def conv(src, dst, w, b, *, kh, kw, ho, wo,
             alpha=None, dst_pad=0, residual=False):
        """VALID conv src->dst, one output row per loop step (2-D MXU dots).

        `src` must already contain any zero padding it needs.  `dst_pad` writes
        the result into the interior of a zero-initialised padded dst (so the
        following 3x3 'same' conv can read it without in-kernel jnp.pad).
        `residual` adds dst's existing contents in place (ResNet skip)."""
        cout = w.shape[2]
        bias = b[...]                                    # (1, cout), hoisted

        def row(y, carry):
            acc = jnp.zeros((wo, cout), f32)
            for di in range(kh):                         # unrolled taps
                for dj in range(kw):
                    acc = acc + jnp.dot(src[y + di, dj:dj + wo, :],
                                        w[di * kw + dj],
                                        preferred_element_type=f32)
            acc = acc + bias
            if alpha is not None:                        # scalar PReLU
                acc = jnp.where(acc > 0, acc, alpha * acc)
            if residual:
                acc = acc + dst[y, 0:wo, :]
            dst[y + dst_pad, dst_pad:dst_pad + wo, :] = acc
            return carry

        jax.lax.fori_loop(0, ho, row, 0)

    def maxpool_3x3_s2(src, dst, ho, wo):
        """MaxPool2d(kernel=3, stride=2), floor mode, fully in VMEM."""
        w_in = src.shape[1]

        def row(oy, carry):
            r = jnp.maximum(jnp.maximum(src[2 * oy, :, :],
                                        src[2 * oy + 1, :, :]),
                            src[2 * oy + 2, :, :])                 # (w_in, C)
            m = jnp.maximum(jnp.maximum(r[0:w_in - 2, :], r[1:w_in - 1, :]),
                            r[2:w_in, :])                          # (w_in-2, C)
            for ox in range(wo):                                   # stride-2 pick
                dst[oy, ox:ox + 1, :] = m[2 * ox:2 * ox + 1, :]
            return carry

        jax.lax.fori_loop(0, ho, row, 0)

    # scalar PReLU slopes (broadcast from a tiny resident (1, 4) VMEM block)
    a1 = al[0:1, 0:1]
    a2 = al[0:1, 1:2]
    a3 = al[0:1, 2:3]
    a4 = al[0:1, 3:4]

    # ---- layer1 ----
    conv(x_ref, s_c1, c1w, c1b, kh=3, kw=3, ho=24, wo=24, alpha=a1)  # Conv(3,28,3,1,1)+PReLU
    maxpool_3x3_s2(s_c1, s_p1, 11, 11)                               # MaxPool(3,2)

    s_m1[...] = jnp.zeros(s_m1.shape, f32)                           # ResNet(28)
    conv(s_p1, s_m1, r1w1, r1b1, kh=1, kw=1, ho=11, wo=11, dst_pad=1)
    conv(s_m1, s_p1, r1w2, r1b2, kh=3, kw=3, ho=11, wo=11, residual=True)

    conv(s_p1, s_c2, c2w, c2b, kh=3, kw=3, ho=9, wo=9, alpha=a2)     # Conv(28,48,3,1)+PReLU
    maxpool_3x3_s2(s_c2, s_p2, 4, 4)                                 # MaxPool(3,2)

    s_m2[...] = jnp.zeros(s_m2.shape, f32)                           # ResNet(48)
    conv(s_p2, s_m2, r2w1, r2b1, kh=1, kw=1, ho=4, wo=4, dst_pad=1)
    conv(s_m2, s_p2, r2w2, r2b2, kh=3, kw=3, ho=4, wo=4, residual=True)

    conv(s_p2, s_c3, c3w, c3b, kh=2, kw=2, ho=3, wo=3, alpha=a3)     # Conv(48,64,2,1)+PReLU

    # ---- layer2: Linear(3*3*64, 128) + PReLU over the 3x3x64 map ----
    acc = fcb[...]                                                   # (1, 128)
    for t in range(9):
        h_, w_ = t // 3, t % 3
        acc = acc + jnp.dot(s_c3[h_, w_:w_ + 1, :], fcw[t],
                            preferred_element_type=f32)
    acc = jnp.where(acc > 0, acc, a4 * acc)

    # ---- fused heads: [confidence | offset] in a single (128, 5) matmul ----
    head = jnp.dot(acc, hw[...], preferred_element_type=f32) + hb[...]   # (1, 5)
    conf_ref[...] = jax.nn.sigmoid(head[:, 0:1])
    off_ref[...] = head[:, 1:5]


# ------------------------------ host wrapper ------------------------------

def r_net_forward(params, x_nchw):
    """R_Net forward.  x_nchw: (N, 3, 24, 24) float32 (PyTorch layout)."""
    n = x_nchw.shape[0]
    x = jnp.transpose(x_nchw, (0, 2, 3, 1)).astype(jnp.float32)   # NHWC
    x = jnp.pad(x, ((0, 0), (1, 1), (1, 1), (0, 0)))              # conv1 pad=1

    def cw(w):      # OIHW -> (kh*kw, Cin, Cout), per-tap matmul layout
        co, ci, kh, kw = w.shape
        return jnp.transpose(w, (2, 3, 1, 0)).reshape(kh * kw, ci, co)

    def cb(b):
        return b.reshape(1, -1)

    # PyTorch flattens conv3's output in (C, H, W) order; permute the FC weight
    # so the kernel's NHWC per-position dots compute the identical contraction.
    fcw = (params["fc1_w"].reshape(128, 64, 3, 3)
           .transpose(2, 3, 1, 0).reshape(9, 64, 128))
    fcb = params["fc1_b"].reshape(1, 128)
    hw = jnp.concatenate([params["conf_w"], params["off_w"]], axis=0).T  # (128, 5)
    hb = jnp.concatenate([params["conf_b"], params["off_b"]]).reshape(1, 5)
    alphas = jnp.concatenate([params["a1"], params["a2"],
                              params["a3"], params["a4"]]).reshape(1, 4)

    inputs = (
        x,
        cw(params["c1_w"]), cb(params["c1_b"]),
        cw(params["r1_w1"]), cb(params["r1_b1"]),
        cw(params["r1_w2"]), cb(params["r1_b2"]),
        cw(params["c2_w"]), cb(params["c2_b"]),
        cw(params["r2_w1"]), cb(params["r2_b1"]),
        cw(params["r2_w2"]), cb(params["r2_b2"]),
        cw(params["c3_w"]), cb(params["c3_b"]),
        fcw, fcb, hw, hb, alphas,
    )

    def resident(shape):      # whole array, same VMEM block every grid step
        return pl.BlockSpec(shape, lambda i: (0,) * len(shape))

    in_specs = [pl.BlockSpec((None, 26, 26, 3), lambda i: (i, 0, 0, 0))]
    in_specs += [resident(a.shape) for a in inputs[1:]]

    out_shape = (jax.ShapeDtypeStruct((n, 1, 1), jnp.float32),
                 jax.ShapeDtypeStruct((n, 1, 4), jnp.float32))
    out_specs = [pl.BlockSpec((None, 1, 1), lambda i: (i, 0, 0)),
                 pl.BlockSpec((None, 1, 4), lambda i: (i, 0, 0))]

    scratch = [
        pltpu.VMEM((24, 24, 28), jnp.float32),   # conv1 output
        pltpu.VMEM((11, 11, 28), jnp.float32),   # pool1 / ResNet(28) output
        pltpu.VMEM((13, 13, 14), jnp.float32),   # ResNet(28) mid (zero-padded)
        pltpu.VMEM((9, 9, 48), jnp.float32),     # conv2 output
        pltpu.VMEM((4, 4, 48), jnp.float32),     # pool2 / ResNet(48) output
        pltpu.VMEM((6, 6, 24), jnp.float32),     # ResNet(48) mid (zero-padded)
        pltpu.VMEM((3, 3, 64), jnp.float32),     # conv3 output
    ]

    conf, off = pl.pallas_call(
        _r_net_kernel,
        out_shape=out_shape,
        grid_spec=pltpu.PrefetchScalarGridSpec(
            num_scalar_prefetch=0,
            grid=(n,),
            in_specs=in_specs,
            out_specs=out_specs,
            scratch_shapes=scratch),
        compiler_params=pltpu.CompilerParams(
            dimension_semantics=("parallel",)),
    )(*inputs)
    return conf[:, 0, :], off[:, 0, :]


# ----------------------------- pure-JAX reference -----------------------------

def r_net_ref(params, x):
    P = jax.lax.Precision.HIGHEST

    def conv(h, w, b, pad):
        y = jax.lax.conv_general_dilated(
            h, w, (1, 1), [(pad, pad), (pad, pad)],
            dimension_numbers=("NCHW", "OIHW", "NCHW"), precision=P)
        return y + b[None, :, None, None]

    def prelu(h, a):
        return jnp.where(h > 0, h, a * h)

    def pool(h):
        return jax.lax.reduce_window(h, -jnp.inf, jax.lax.max,
                                     (1, 1, 3, 3), (1, 1, 2, 2), "VALID")

    h = prelu(conv(x, params["c1_w"], params["c1_b"], 1), params["a1"][0])
    h = pool(h)
    h = h + conv(conv(h, params["r1_w1"], params["r1_b1"], 0),
                 params["r1_w2"], params["r1_b2"], 1)
    h = prelu(conv(h, params["c2_w"], params["c2_b"], 0), params["a2"][0])
    h = pool(h)
    h = h + conv(conv(h, params["r2_w1"], params["r2_b1"], 0),
                 params["r2_w2"], params["r2_b2"], 1)
    h = prelu(conv(h, params["c3_w"], params["c3_b"], 0), params["a3"][0])
    flat = h.reshape(h.shape[0], -1)                     # PyTorch (C,H,W) flatten
    f = prelu(jnp.dot(flat, params["fc1_w"].T, precision=P) + params["fc1_b"],
              params["a4"][0])
    conf = jax.nn.sigmoid(jnp.dot(f, params["conf_w"].T, precision=P)
                          + params["conf_b"])
    off = jnp.dot(f, params["off_w"].T, precision=P) + params["off_b"]
    return conf, off


# ----------------------------- parameter init -----------------------------

def init_params(key):
    ks = iter(jax.random.split(key, 24))

    def conv_p(cout, cin, k):
        w = jax.random.normal(next(ks), (cout, cin, k, k), jnp.float32) * 0.1
        b = jax.random.normal(next(ks), (cout,), jnp.float32) * 0.1
        return w, b

    def lin_p(cout, cin):
        w = jax.random.normal(next(ks), (cout, cin), jnp.float32) * 0.1
        b = jax.random.normal(next(ks), (cout,), jnp.float32) * 0.1
        return w, b

    p = {}
    p["c1_w"], p["c1_b"] = conv_p(28, 3, 3)
    p["a1"] = jnp.full((1,), 0.25, jnp.float32)            # nn.PReLU() default
    p["r1_w1"], p["r1_b1"] = conv_p(14, 28, 1)
    p["r1_w2"], p["r1_b2"] = conv_p(28, 14, 3)
    p["c2_w"], p["c2_b"] = conv_p(48, 28, 3)
    p["a2"] = jnp.full((1,), 0.25, jnp.float32)
    p["r2_w1"], p["r2_b1"] = conv_p(24, 48, 1)
    p["r2_w2"], p["r2_b2"] = conv_p(48, 24, 3)
    p["c3_w"], p["c3_b"] = conv_p(64, 48, 2)
    p["a3"] = jnp.full((1,), 0.25, jnp.float32)
    p["fc1_w"], p["fc1_b"] = lin_p(128, 576)
    p["a4"] = jnp.full((1,), 0.25, jnp.float32)
    p["conf_w"], p["conf_b"] = lin_p(1, 128)
    p["off_w"], p["off_b"] = lin_p(4, 128)
    return p


# ----------------------------------- main -----------------------------------

if __name__ == "__main__":
    key = jax.random.PRNGKey(0)
    kp, kx = jax.random.split(key)
    params = init_params(kp)
    # R_Net requires 24x24 input so the conv stack ends at 3x3x64 (=576) before
    # the flatten; batch=2, NCHW like PyTorch.
    x = jax.random.normal(kx, (2, 3, 24, 24), jnp.float32)

    conf, off = jax.jit(r_net_forward)(params, x)
    jax.block_until_ready((conf, off))

    assert conf.shape == (2, 1), conf.shape
    assert off.shape == (2, 4), off.shape

    conf_ref, off_ref = jax.jit(r_net_ref)(params, x)
    # Kernel matmuls run at DEFAULT (bf16-input) MXU precision per the perf
    # guidance, while the reference runs at HIGHEST; allow the accumulated
    # bf16-class error across the 9 stacked matmul layers.
    assert jnp.allclose(conf, conf_ref, atol=3e-2, rtol=3e-2), \
        float(jnp.max(jnp.abs(conf - conf_ref)))
    assert jnp.allclose(off, off_ref, atol=3e-2, rtol=3e-2), \
        float(jnp.max(jnp.abs(off - off_ref)))

    print("KERNEL_OK")
</pallas_src>

<mosaic_0001>
module attributes {stable_mosaic.version = 11 : i64} {
  func.func @_r_net_kernel(%arg0: i32, %arg1: memref<1x26x26x3xf32, #tpu.memory_space<vmem>>, %arg2: memref<9x3x28xf32, #tpu.memory_space<vmem>>, %arg3: memref<1x28xf32, #tpu.memory_space<vmem>>, %arg4: memref<1x28x14xf32, #tpu.memory_space<vmem>>, %arg5: memref<1x14xf32, #tpu.memory_space<vmem>>, %arg6: memref<9x14x28xf32, #tpu.memory_space<vmem>>, %arg7: memref<1x28xf32, #tpu.memory_space<vmem>>, %arg8: memref<9x28x48xf32, #tpu.memory_space<vmem>>, %arg9: memref<1x48xf32, #tpu.memory_space<vmem>>, %arg10: memref<1x48x24xf32, #tpu.memory_space<vmem>>, %arg11: memref<1x24xf32, #tpu.memory_space<vmem>>, %arg12: memref<9x24x48xf32, #tpu.memory_space<vmem>>, %arg13: memref<1x48xf32, #tpu.memory_space<vmem>>, %arg14: memref<4x48x64xf32, #tpu.memory_space<vmem>>, %arg15: memref<1x64xf32, #tpu.memory_space<vmem>>, %arg16: memref<9x64x128xf32, #tpu.memory_space<vmem>>, %arg17: memref<1x128xf32, #tpu.memory_space<vmem>>, %arg18: memref<128x5xf32, #tpu.memory_space<vmem>>, %arg19: memref<1x5xf32, #tpu.memory_space<vmem>>, %arg20: memref<1x4xf32, #tpu.memory_space<vmem>>, %arg21: memref<1x1x1xf32, #tpu.memory_space<vmem>>, %arg22: memref<1x1x4xf32, #tpu.memory_space<vmem>>, %arg23: memref<24x24x28xf32, #tpu.memory_space<vmem>>, %arg24: memref<11x11x28xf32, #tpu.memory_space<vmem>>, %arg25: memref<13x13x14xf32, #tpu.memory_space<vmem>>, %arg26: memref<9x9x48xf32, #tpu.memory_space<vmem>>, %arg27: memref<4x4x48xf32, #tpu.memory_space<vmem>>, %arg28: memref<6x6x24xf32, #tpu.memory_space<vmem>>, %arg29: memref<3x3x64xf32, #tpu.memory_space<vmem>>) attributes {dimension_semantics = [#tpu.dimension_semantics<parallel>], iteration_bounds = array<i64: 2>, scalar_prefetch = 0 : i64, scratch_operands = 7 : i64, tpu.core_type = #tpu.core_type<tc>, window_params = [{transform_indices = @transform_0, window_bounds = array<i64: 1, 26, 26, 3>}, {pipeline_mode = #tpu.pipeline_mode<synchronous>, transform_indices = @transform_1, window_bounds = array<i64: 9, 3, 28>}, {pipeline_mode = #tpu.pipeline_mode<synchronous>, transform_indices = @transform_2, window_bounds = array<i64: 1, 28>}, {pipeline_mode = #tpu.pipeline_mode<synchronous>, transform_indices = @transform_3, window_bounds = array<i64: 1, 28, 14>}, {pipeline_mode = #tpu.pipeline_mode<synchronous>, transform_indices = @transform_4, window_bounds = array<i64: 1, 14>}, {pipeline_mode = #tpu.pipeline_mode<synchronous>, transform_indices = @transform_5, window_bounds = array<i64: 9, 14, 28>}, {pipeline_mode = #tpu.pipeline_mode<synchronous>, transform_indices = @transform_6, window_bounds = array<i64: 1, 28>}, {pipeline_mode = #tpu.pipeline_mode<synchronous>, transform_indices = @transform_7, window_bounds = array<i64: 9, 28, 48>}, {pipeline_mode = #tpu.pipeline_mode<synchronous>, transform_indices = @transform_8, window_bounds = array<i64: 1, 48>}, {pipeline_mode = #tpu.pipeline_mode<synchronous>, transform_indices = @transform_9, window_bounds = array<i64: 1, 48, 24>}, {pipeline_mode = #tpu.pipeline_mode<synchronous>, transform_indices = @transform_10, window_bounds = array<i64: 1, 24>}, {pipeline_mode = #tpu.pipeline_mode<synchronous>, transform_indices = @transform_11, window_bounds = array<i64: 9, 24, 48>}, {pipeline_mode = #tpu.pipeline_mode<synchronous>, transform_indices = @transform_12, window_bounds = array<i64: 1, 48>}, {pipeline_mode = #tpu.pipeline_mode<synchronous>, transform_indices = @transform_13, window_bounds = array<i64: 4, 48, 64>}, {pipeline_mode = #tpu.pipeline_mode<synchronous>, transform_indices = @transform_14, window_bounds = array<i64: 1, 64>}, {pipeline_mode = #tpu.pipeline_mode<synchronous>, transform_indices = @transform_15, window_bounds = array<i64: 9, 64, 128>}, {pipeline_mode = #tpu.pipeline_mode<synchronous>, transform_indices = @transform_16, window_bounds = array<i64: 1, 128>}, {pipeline_mode = #tpu.pipeline_mode<synchronous>, transform_indices = @transform_17, window_bounds = array<i64: 128, 5>}, {pipeline_mode = #tpu.pipeline_mode<synchronous>, transform_indices = @transform_18, window_bounds = array<i64: 1, 5>}, {pipeline_mode = #tpu.pipeline_mode<synchronous>, transform_indices = @transform_19, window_bounds = array<i64: 1, 4>}, {transform_indices = @transform_20, window_bounds = array<i64: 1, 1, 1>}, {transform_indices = @transform_21, window_bounds = array<i64: 1, 1, 4>}]} {
    %c0 = arith.constant 0 : index
    %c0_0 = arith.constant 0 : index
    %0 = vector.load %arg20[%c0, %c0_0] : memref<1x4xf32, #tpu.memory_space<vmem>>, vector<1x1xf32>
    %c0_1 = arith.constant 0 : index
    %c1 = arith.constant 1 : index
    %1 = vector.load %arg20[%c0_1, %c1] : memref<1x4xf32, #tpu.memory_space<vmem>>, vector<1x1xf32>
    %c0_2 = arith.constant 0 : index
    %c2 = arith.constant 2 : index
    %2 = vector.load %arg20[%c0_2, %c2] : memref<1x4xf32, #tpu.memory_space<vmem>>, vector<1x1xf32>
    %c0_3 = arith.constant 0 : index
    %c3 = arith.constant 3 : index
    %3 = vector.load %arg20[%c0_3, %c3] : memref<1x4xf32, #tpu.memory_space<vmem>>, vector<1x1xf32>
    %c0_4 = arith.constant 0 : index
    %c0_5 = arith.constant 0 : index
    %4 = vector.load %arg3[%c0_4, %c0_5] : memref<1x28xf32, #tpu.memory_space<vmem>>, vector<1x28xf32>
    %c0_i32 = arith.constant 0 : i32
    %c24_i32 = arith.constant 24 : i32
    %5 = arith.addi %c0_i32, %c24_i32 : i32
    %c1_i32 = arith.constant 1 : i32
    scf.for %arg30 = %c0_i32 to %5 step %c1_i32  : i32 {
      %cst_127 = arith.constant 0.000000e+00 : f32
      %101 = vector.broadcast %cst_127 : f32 to vector<24x28xf32>
      %c0_i32_128 = arith.constant 0 : i32
      %102 = arith.addi %arg30, %c0_i32_128 : i32
      %c0_129 = arith.constant 0 : index
      %103 = arith.index_cast %102 : i32 to index
      %c0_130 = arith.constant 0 : index
      %c0_131 = arith.constant 0 : index
      %104 = vector.load %arg1[%c0_129, %103, %c0_130, %c0_131] : memref<1x26x26x3xf32, #tpu.memory_space<vmem>>, vector<1x1x24x3xf32>
      %105 = vector.shape_cast %104 : vector<1x1x24x3xf32> to vector<24x3xf32>
      %c0_132 = arith.constant 0 : index
      %c0_133 = arith.constant 0 : index
      %c0_134 = arith.constant 0 : index
      %106 = vector.load %arg2[%c0_132, %c0_133, %c0_134] : memref<9x3x28xf32, #tpu.memory_space<vmem>>, vector<1x3x28xf32>
      %107 = vector.shape_cast %106 : vector<1x3x28xf32> to vector<3x28xf32>
      %cst_135 = arith.constant dense<0.000000e+00> : vector<24x28xf32>
      %108 = tpu.matmul %105, %107, %cst_135 {dimension_numbers = #tpu.dot_dimension_numbers<[1], [0], [0], [1], [0, 0, 1, 1], [], []>} : vector<24x3xf32>, vector<3x28xf32>, vector<24x28xf32> -> vector<24x28xf32>
      %109 = arith.addf %101, %108 : vector<24x28xf32>
      %c0_i32_136 = arith.constant 0 : i32
      %110 = arith.addi %arg30, %c0_i32_136 : i32
      %c0_137 = arith.constant 0 : index
      %111 = arith.index_cast %110 : i32 to index
      %c1_138 = arith.constant 1 : index
      %c0_139 = arith.constant 0 : index
      %112 = vector.load %arg1[%c0_137, %111, %c1_138, %c0_139] : memref<1x26x26x3xf32, #tpu.memory_space<vmem>>, vector<1x1x24x3xf32>
      %113 = vector.shape_cast %112 : vector<1x1x24x3xf32> to vector<24x3xf32>
      %c1_140 = arith.constant 1 : index
      %c0_141 = arith.constant 0 : index
      %c0_142 = arith.constant 0 : index
      %114 = vector.load %arg2[%c1_140, %c0_141, %c0_142] : memref<9x3x28xf32, #tpu.memory_space<vmem>>, vector<1x3x28xf32>
      %115 = vector.shape_cast %114 : vector<1x3x28xf32> to vector<3x28xf32>
      %cst_143 = arith.constant dense<0.000000e+00> : vector<24x28xf32>
      %116 = tpu.matmul %113, %115, %cst_143 {dimension_numbers = #tpu.dot_dimension_numbers<[1], [0], [0], [1], [0, 0, 1, 1], [], []>} : vector<24x3xf32>, vector<3x28xf32>, vector<24x28xf32> -> vector<24x28xf32>
      %117 = arith.addf %109, %116 : vector<24x28xf32>
      %c0_i32_144 = arith.constant 0 : i32
      %118 = arith.addi %arg30, %c0_i32_144 : i32
      %c0_145 = arith.constant 0 : index
      %119 = arith.index_cast %118 : i32 to index
      %c2_146 = arith.constant 2 : index
      %c0_147 = arith.constant 0 : index
      %120 = vector.load %arg1[%c0_145, %119, %c2_146, %c0_147] : memref<1x26x26x3xf32, #tpu.memory_space<vmem>>, vector<1x1x24x3xf32>
      %121 = vector.shape_cast %120 : vector<1x1x24x3xf32> to vector<24x3xf32>
      %c2_148 = arith.constant 2 : index
      %c0_149 = arith.constant 0 : index
      %c0_150 = arith.constant 0 : index
      %122 = vector.load %arg2[%c2_148, %c0_149, %c0_150] : memref<9x3x28xf32, #tpu.memory_space<vmem>>, vector<1x3x28xf32>
      %123 = vector.shape_cast %122 : vector<1x3x28xf32> to vector<3x28xf32>
      %cst_151 = arith.constant dense<0.000000e+00> : vector<24x28xf32>
      %124 = tpu.matmul %121, %123, %cst_151 {dimension_numbers = #tpu.dot_dimension_numbers<[1], [0], [0], [1], [0, 0, 1, 1], [], []>} : vector<24x3xf32>, vector<3x28xf32>, vector<24x28xf32> -> vector<24x28xf32>
      %125 = arith.addf %117, %124 : vector<24x28xf32>
      %c1_i32_152 = arith.constant 1 : i32
      %126 = arith.addi %arg30, %c1_i32_152 : i32
      %c0_153 = arith.constant 0 : index
      %127 = arith.index_cast %126 : i32 to index
      %c0_154 = arith.constant 0 : index
      %c0_155 = arith.constant 0 : index
      %128 = vector.load %arg1[%c0_153, %127, %c0_154, %c0_155] : memref<1x26x26x3xf32, #tpu.memory_space<vmem>>, vector<1x1x24x3xf32>
      %129 = vector.shape_cast %128 : vector<1x1x24x3xf32> to vector<24x3xf32>
      %c3_156 = arith.constant 3 : index
      %c0_157 = arith.constant 0 : index
      %c0_158 = arith.constant 0 : index
      %130 = vector.load %arg2[%c3_156, %c0_157, %c0_158] : memref<9x3x28xf32, #tpu.memory_space<vmem>>, vector<1x3x28xf32>
      %131 = vector.shape_cast %130 : vector<1x3x28xf32> to vector<3x28xf32>
      %cst_159 = arith.constant dense<0.000000e+00> : vector<24x28xf32>
      %132 = tpu.matmul %129, %131, %cst_159 {dimension_numbers = #tpu.dot_dimension_numbers<[1], [0], [0], [1], [0, 0, 1, 1], [], []>} : vector<24x3xf32>, vector<3x28xf32>, vector<24x28xf32> -> vector<24x28xf32>
      %133 = arith.addf %125, %132 : vector<24x28xf32>
      %c1_i32_160 = arith.constant 1 : i32
      %134 = arith.addi %arg30, %c1_i32_160 : i32
      %c0_161 = arith.constant 0 : index
      %135 = arith.index_cast %134 : i32 to index
      %c1_162 = arith.constant 1 : index
      %c0_163 = arith.constant 0 : index
      %136 = vector.load %arg1[%c0_161, %135, %c1_162, %c0_163] : memref<1x26x26x3xf32, #tpu.memory_space<vmem>>, vector<1x1x24x3xf32>
      %137 = vector.shape_cast %136 : vector<1x1x24x3xf32> to vector<24x3xf32>
      %c4_164 = arith.constant 4 : index
      %c0_165 = arith.constant 0 : index
      %c0_166 = arith.constant 0 : index
      %138 = vector.load %arg2[%c4_164, %c0_165, %c0_166] : memref<9x3x28xf32, #tpu.memory_space<vmem>>, vector<1x3x28xf32>
      %139 = vector.shape_cast %138 : vector<1x3x28xf32> to vector<3x28xf32>
      %cst_167 = arith.constant dense<0.000000e+00> : vector<24x28xf32>
      %140 = tpu.matmul %137, %139, %cst_167 {dimension_numbers = #tpu.dot_dimension_numbers<[1], [0], [0], [1], [0, 0, 1, 1], [], []>} : vector<24x3xf32>, vector<3x28xf32>, vector<24x28xf32> -> vector<24x28xf32>
      %141 = arith.addf %133, %140 : vector<24x28xf32>
      %c1_i32_168 = arith.constant 1 : i32
      %142 = arith.addi %arg30, %c1_i32_168 : i32
      %c0_169 = arith.constant 0 : index
      %143 = arith.index_cast %142 : i32 to index
      %c2_170 = arith.constant 2 : index
      %c0_171 = arith.constant 0 : index
      %144 = vector.load %arg1[%c0_169, %143, %c2_170, %c0_171] : memref<1x26x26x3xf32, #tpu.memory_space<vmem>>, vector<1x1x24x3xf32>
      %145 = vector.shape_cast %144 : vector<1x1x24x3xf32> to vector<24x3xf32>
      %c5_172 = arith.constant 5 : index
      %c0_173 = arith.constant 0 : index
      %c0_174 = arith.constant 0 : index
      %146 = vector.load %arg2[%c5_172, %c0_173, %c0_174] : memref<9x3x28xf32, #tpu.memory_space<vmem>>, vector<1x3x28xf32>
      %147 = vector.shape_cast %146 : vector<1x3x28xf32> to vector<3x28xf32>
      %cst_175 = arith.constant dense<0.000000e+00> : vector<24x28xf32>
      %148 = tpu.matmul %145, %147, %cst_175 {dimension_numbers = #tpu.dot_dimension_numbers<[1], [0], [0], [1], [0, 0, 1, 1], [], []>} : vector<24x3xf32>, vector<3x28xf32>, vector<24x28xf32> -> vector<24x28xf32>
      %149 = arith.addf %141, %148 : vector<24x28xf32>
      %c2_i32 = arith.constant 2 : i32
      %150 = arith.addi %arg30, %c2_i32 : i32
      %c0_176 = arith.constant 0 : index
      %151 = arith.index_cast %150 : i32 to index
      %c0_177 = arith.constant 0 : index
      %c0_178 = arith.constant 0 : index
      %152 = vector.load %arg1[%c0_176, %151, %c0_177, %c0_178] : memref<1x26x26x3xf32, #tpu.memory_space<vmem>>, vector<1x1x24x3xf32>
      %153 = vector.shape_cast %152 : vector<1x1x24x3xf32> to vector<24x3xf32>
      %c6_179 = arith.constant 6 : index
      %c0_180 = arith.constant 0 : index
      %c0_181 = arith.constant 0 : index
      %154 = vector.load %arg2[%c6_179, %c0_180, %c0_181] : memref<9x3x28xf32, #tpu.memory_space<vmem>>, vector<1x3x28xf32>
      %155 = vector.shape_cast %154 : vector<1x3x28xf32> to vector<3x28xf32>
      %cst_182 = arith.constant dense<0.000000e+00> : vector<24x28xf32>
      %156 = tpu.matmul %153, %155, %cst_182 {dimension_numbers = #tpu.dot_dimension_numbers<[1], [0], [0], [1], [0, 0, 1, 1], [], []>} : vector<24x3xf32>, vector<3x28xf32>, vector<24x28xf32> -> vector<24x28xf32>
      %157 = arith.addf %149, %156 : vector<24x28xf32>
      %c2_i32_183 = arith.constant 2 : i32
      %158 = arith.addi %arg30, %c2_i32_183 : i32
      %c0_184 = arith.constant 0 : index
      %159 = arith.index_cast %158 : i32 to index
      %c1_185 = arith.constant 1 : index
      %c0_186 = arith.constant 0 : index
      %160 = vector.load %arg1[%c0_184, %159, %c1_185, %c0_186] : memref<1x26x26x3xf32, #tpu.memory_space<vmem>>, vector<1x1x24x3xf32>
      %161 = vector.shape_cast %160 : vector<1x1x24x3xf32> to vector<24x3xf32>
      %c7_187 = arith.constant 7 : index
      %c0_188 = arith.constant 0 : index
      %c0_189 = arith.constant 0 : index
      %162 = vector.load %arg2[%c7_187, %c0_188, %c0_189] : memref<9x3x28xf32, #tpu.memory_space<vmem>>, vector<1x3x28xf32>
      %163 = vector.shape_cast %162 : vector<1x3x28xf32> to vector<3x28xf32>
      %cst_190 = arith.constant dense<0.000000e+00> : vector<24x28xf32>
      %164 = tpu.matmul %161, %163, %cst_190 {dimension_numbers = #tpu.dot_dimension_numbers<[1], [0], [0], [1], [0, 0, 1, 1], [], []>} : vector<24x3xf32>, vector<3x28xf32>, vector<24x28xf32> -> vector<24x28xf32>
      %165 = arith.addf %157, %164 : vector<24x28xf32>
      %c2_i32_191 = arith.constant 2 : i32
      %166 = arith.addi %arg30, %c2_i32_191 : i32
      %c0_192 = arith.constant 0 : index
      %167 = arith.index_cast %166 : i32 to index
      %c2_193 = arith.constant 2 : index
      %c0_194 = arith.constant 0 : index
      %168 = vector.load %arg1[%c0_192, %167, %c2_193, %c0_194] : memref<1x26x26x3xf32, #tpu.memory_space<vmem>>, vector<1x1x24x3xf32>
      %169 = vector.shape_cast %168 : vector<1x1x24x3xf32> to vector<24x3xf32>
      %c8_195 = arith.constant 8 : index
      %c0_196 = arith.constant 0 : index
      %c0_197 = arith.constant 0 : index
      %170 = vector.load %arg2[%c8_195, %c0_196, %c0_197] : memref<9x3x28xf32, #tpu.memory_space<vmem>>, vector<1x3x28xf32>
      %171 = vector.shape_cast %170 : vector<1x3x28xf32> to vector<3x28xf32>
      %cst_198 = arith.constant dense<0.000000e+00> : vector<24x28xf32>
      %172 = tpu.matmul %169, %171, %cst_198 {dimension_numbers = #tpu.dot_dimension_numbers<[1], [0], [0], [1], [0, 0, 1, 1], [], []>} : vector<24x3xf32>, vector<3x28xf32>, vector<24x28xf32> -> vector<24x28xf32>
      %173 = arith.addf %165, %172 : vector<24x28xf32>
      %174 = vector.broadcast %4 : vector<1x28xf32> to vector<24x28xf32>
      %175 = arith.addf %173, %174 : vector<24x28xf32>
      %cst_199 = arith.constant 0.000000e+00 : f32
      %176 = vector.broadcast %cst_199 : f32 to vector<24x28xf32>
      %177 = arith.cmpf ogt, %175, %176 : vector<24x28xf32>
      %178 = vector.broadcast %0 : vector<1x1xf32> to vector<24x28xf32>
      %179 = arith.mulf %178, %175 : vector<24x28xf32>
      %180 = arith.select %177, %175, %179 : vector<24x28xi1>, vector<24x28xf32>
      %c0_i32_200 = arith.constant 0 : i32
      %181 = arith.addi %arg30, %c0_i32_200 : i32
      %182 = arith.index_cast %181 : i32 to index
      %c0_201 = arith.constant 0 : index
      %c0_202 = arith.constant 0 : index
      %183 = vector.load %arg23[%182, %c0_201, %c0_202] : memref<24x24x28xf32, #tpu.memory_space<vmem>>, vector<1x24x28xf32>
      %184 = vector.shape_cast %183 : vector<1x24x28xf32> to vector<24x28xf32>
      %185 = vector.shape_cast %180 : vector<24x28xf32> to vector<1x24x28xf32>
      tpu.vector_store %arg23[%182, %c0_201, %c0_202], %185 {strides = array<i32>} : memref<24x24x28xf32, #tpu.memory_space<vmem>>, vector<1x24x28xf32>,
    }
    %c24_i32_6 = arith.constant 24 : i32
    %c0_i32_7 = arith.constant 0 : i32
    %c11_i32 = arith.constant 11 : i32
    %6 = arith.addi %c0_i32_7, %c11_i32 : i32
    %c1_i32_8 = arith.constant 1 : i32
    scf.for %arg30 = %c0_i32_7 to %6 step %c1_i32_8  : i32 {
      %c2_i32 = arith.constant 2 : i32
      %101 = arith.muli %c2_i32, %arg30 : i32
      %102 = arith.index_cast %101 : i32 to index
      %c0_127 = arith.constant 0 : index
      %c0_128 = arith.constant 0 : index
      %103 = vector.load %arg23[%102, %c0_127, %c0_128] : memref<24x24x28xf32, #tpu.memory_space<vmem>>, vector<1x24x28xf32>
      %104 = vector.shape_cast %103 : vector<1x24x28xf32> to vector<24x28xf32>
      %c2_i32_129 = arith.constant 2 : i32
      %105 = arith.muli %c2_i32_129, %arg30 : i32
      %c1_i32_130 = arith.constant 1 : i32
      %106 = arith.addi %105, %c1_i32_130 : i32
      %107 = arith.index_cast %106 : i32 to index
      %c0_131 = arith.constant 0 : index
      %c0_132 = arith.constant 0 : index
      %108 = vector.load %arg23[%107, %c0_131, %c0_132] : memref<24x24x28xf32, #tpu.memory_space<vmem>>, vector<1x24x28xf32>
      %109 = vector.shape_cast %108 : vector<1x24x28xf32> to vector<24x28xf32>
      %110 = arith.maximumf %104, %109 : vector<24x28xf32>
      %c2_i32_133 = arith.constant 2 : i32
      %111 = arith.muli %c2_i32_133, %arg30 : i32
      %c2_i32_134 = arith.constant 2 : i32
      %112 = arith.addi %111, %c2_i32_134 : i32
      %113 = arith.index_cast %112 : i32 to index
      %c0_135 = arith.constant 0 : index
      %c0_136 = arith.constant 0 : index
      %114 = vector.load %arg23[%113, %c0_135, %c0_136] : memref<24x24x28xf32, #tpu.memory_space<vmem>>, vector<1x24x28xf32>
      %115 = vector.shape_cast %114 : vector<1x24x28xf32> to vector<24x28xf32>
      %116 = arith.maximumf %110, %115 : vector<24x28xf32>
      %117 = vector.extract_strided_slice %116 {offsets = [0, 0], sizes = [22, 28], strides = [1, 1]} : vector<24x28xf32> to vector<22x28xf32>
      %118 = vector.extract_strided_slice %116 {offsets = [1, 0], sizes = [22, 28], strides = [1, 1]} : vector<24x28xf32> to vector<22x28xf32>
      %119 = arith.maximumf %117, %118 : vector<22x28xf32>
      %120 = vector.extract_strided_slice %116 {offsets = [2, 0], sizes = [22, 28], strides = [1, 1]} : vector<24x28xf32> to vector<22x28xf32>
      %121 = arith.maximumf %119, %120 : vector<22x28xf32>
      %122 = vector.extract_strided_slice %121 {offsets = [0, 0], sizes = [1, 28], strides = [1, 1]} : vector<22x28xf32> to vector<1x28xf32>
      %123 = arith.index_cast %arg30 : i32 to index
      %c0_137 = arith.constant 0 : index
      %c0_138 = arith.constant 0 : index
      %124 = vector.load %arg24[%123, %c0_137, %c0_138] : memref<11x11x28xf32, #tpu.memory_space<vmem>>, vector<1x1x28xf32>
      %125 = vector.shape_cast %124 : vector<1x1x28xf32> to vector<1x28xf32>
      %126 = vector.shape_cast %122 : vector<1x28xf32> to vector<1x1x28xf32>
      tpu.vector_store %arg24[%123, %c0_137, %c0_138], %126 {strides = array<i32>} : memref<11x11x28xf32, #tpu.memory_space<vmem>>, vector<1x1x28xf32>,
      %127 = vector.extract_strided_slice %121 {offsets = [2, 0], sizes = [1, 28], strides = [1, 1]} : vector<22x28xf32> to vector<1x28xf32>
      %128 = arith.index_cast %arg30 : i32 to index
      %c1_139 = arith.constant 1 : index
      %c0_140 = arith.constant 0 : index
      %129 = vector.load %arg24[%128, %c1_139, %c0_140] : memref<11x11x28xf32, #tpu.memory_space<vmem>>, vector<1x1x28xf32>
      %130 = vector.shape_cast %129 : vector<1x1x28xf32> to vector<1x28xf32>
      %131 = vector.shape_cast %127 : vector<1x28xf32> to vector<1x1x28xf32>
      tpu.vector_store %arg24[%128, %c1_139, %c0_140], %131 {strides = array<i32>} : memref<11x11x28xf32, #tpu.memory_space<vmem>>, vector<1x1x28xf32>,
      %132 = vector.extract_strided_slice %121 {offsets = [4, 0], sizes = [1, 28], strides = [1, 1]} : vector<22x28xf32> to vector<1x28xf32>
      %133 = arith.index_cast %arg30 : i32 to index
      %c2_141 = arith.constant 2 : index
      %c0_142 = arith.constant 0 : index
      %134 = vector.load %arg24[%133, %c2_141, %c0_142] : memref<11x11x28xf32, #tpu.memory_space<vmem>>, vector<1x1x28xf32>
      %135 = vector.shape_cast %134 : vector<1x1x28xf32> to vector<1x28xf32>
      %136 = vector.shape_cast %132 : vector<1x28xf32> to vector<1x1x28xf32>
      tpu.vector_store %arg24[%133, %c2_141, %c0_142], %136 {strides = array<i32>} : memref<11x11x28xf32, #tpu.memory_space<vmem>>, vector<1x1x28xf32>,
      %137 = vector.extract_strided_slice %121 {offsets = [6, 0], sizes = [1, 28], strides = [1, 1]} : vector<22x28xf32> to vector<1x28xf32>
      %138 = arith.index_cast %arg30 : i32 to index
      %c3_143 = arith.constant 3 : index
      %c0_144 = arith.constant 0 : index
      %139 = vector.load %arg24[%138, %c3_143, %c0_144] : memref<11x11x28xf32, #tpu.memory_space<vmem>>, vector<1x1x28xf32>
      %140 = vector.shape_cast %139 : vector<1x1x28xf32> to vector<1x28xf32>
      %141 = vector.shape_cast %137 : vector<1x28xf32> to vector<1x1x28xf32>
      tpu.vector_store %arg24[%138, %c3_143, %c0_144], %141 {strides = array<i32>} : memref<11x11x28xf32, #tpu.memory_space<vmem>>, vector<1x1x28xf32>,
      %142 = vector.extract_strided_slice %121 {offsets = [8, 0], sizes = [1, 28], strides = [1, 1]} : vector<22x28xf32> to vector<1x28xf32>
      %143 = arith.index_cast %arg30 : i32 to index
      %c4_145 = arith.constant 4 : index
      %c0_146 = arith.constant 0 : index
      %144 = vector.load %arg24[%143, %c4_145, %c0_146] : memref<11x11x28xf32, #tpu.memory_space<vmem>>, vector<1x1x28xf32>
      %145 = vector.shape_cast %144 : vector<1x1x28xf32> to vector<1x28xf32>
      %146 = vector.shape_cast %142 : vector<1x28xf32> to vector<1x1x28xf32>
      tpu.vector_store %arg24[%143, %c4_145, %c0_146], %146 {strides = array<i32>} : memref<11x11x28xf32, #tpu.memory_space<vmem>>, vector<1x1x28xf32>,
      %147 = vector.extract_strided_slice %121 {offsets = [10, 0], sizes = [1, 28], strides = [1, 1]} : vector<22x28xf32> to vector<1x28xf32>
      %148 = arith.index_cast %arg30 : i32 to index
      %c5_147 = arith.constant 5 : index
      %c0_148 = arith.constant 0 : index
      %149 = vector.load %arg24[%148, %c5_147, %c0_148] : memref<11x11x28xf32, #tpu.memory_space<vmem>>, vector<1x1x28xf32>
      %150 = vector.shape_cast %149 : vector<1x1x28xf32> to vector<1x28xf32>
      %151 = vector.shape_cast %147 : vector<1x28xf32> to vector<1x1x28xf32>
      tpu.vector_store %arg24[%148, %c5_147, %c0_148], %151 {strides = array<i32>} : memref<11x11x28xf32, #tpu.memory_space<vmem>>, vector<1x1x28xf32>,
      %152 = vector.extract_strided_slice %121 {offsets = [12, 0], sizes = [1, 28], strides = [1, 1]} : vector<22x28xf32> to vector<1x28xf32>
      %153 = arith.index_cast %arg30 : i32 to index
      %c6_149 = arith.constant 6 : index
      %c0_150 = arith.constant 0 : index
      %154 = vector.load %arg24[%153, %c6_149, %c0_150] : memref<11x11x28xf32, #tpu.memory_space<vmem>>, vector<1x1x28xf32>
      %155 = vector.shape_cast %154 : vector<1x1x28xf32> to vector<1x28xf32>
      %156 = vector.shape_cast %152 : vector<1x28xf32> to vector<1x1x28xf32>
      tpu.vector_store %arg24[%153, %c6_149, %c0_150], %156 {strides = array<i32>} : memref<11x11x28xf32, #tpu.memory_space<vmem>>, vector<1x1x28xf32>,
      %157 = vector.extract_strided_slice %121 {offsets = [14, 0], sizes = [1, 28], strides = [1, 1]} : vector<22x28xf32> to vector<1x28xf32>
      %158 = arith.index_cast %arg30 : i32 to index
      %c7_151 = arith.constant 7 : index
      %c0_152 = arith.constant 0 : index
      %159 = vector.load %arg24[%158, %c7_151, %c0_152] : memref<11x11x28xf32, #tpu.memory_space<vmem>>, vector<1x1x28xf32>
      %160 = vector.shape_cast %159 : vector<1x1x28xf32> to vector<1x28xf32>
      %161 = vector.shape_cast %157 : vector<1x28xf32> to vector<1x1x28xf32>
      tpu.vector_store %arg24[%158, %c7_151, %c0_152], %161 {strides = array<i32>} : memref<11x11x28xf32, #tpu.memory_space<vmem>>, vector<1x1x28xf32>,
      %162 = vector.extract_strided_slice %121 {offsets = [16, 0], sizes = [1, 28], strides = [1, 1]} : vector<22x28xf32> to vector<1x28xf32>
      %163 = arith.index_cast %arg30 : i32 to index
      %c8_153 = arith.constant 8 : index
      %c0_154 = arith.constant 0 : index
      %164 = vector.load %arg24[%163, %c8_153, %c0_154] : memref<11x11x28xf32, #tpu.memory_space<vmem>>, vector<1x1x28xf32>
      %165 = vector.shape_cast %164 : vector<1x1x28xf32> to vector<1x28xf32>
      %166 = vector.shape_cast %162 : vector<1x28xf32> to vector<1x1x28xf32>
      tpu.vector_store %arg24[%163, %c8_153, %c0_154], %166 {strides = array<i32>} : memref<11x11x28xf32, #tpu.memory_space<vmem>>, vector<1x1x28xf32>,
      %167 = vector.extract_strided_slice %121 {offsets = [18, 0], sizes = [1, 28], strides = [1, 1]} : vector<22x28xf32> to vector<1x28xf32>
      %168 = arith.index_cast %arg30 : i32 to index
      %c9 = arith.constant 9 : index
      %c0_155 = arith.constant 0 : index
      %169 = vector.load %arg24[%168, %c9, %c0_155] : memref<11x11x28xf32, #tpu.memory_space<vmem>>, vector<1x1x28xf32>
      %170 = vector.shape_cast %169 : vector<1x1x28xf32> to vector<1x28xf32>
      %171 = vector.shape_cast %167 : vector<1x28xf32> to vector<1x1x28xf32>
      tpu.vector_store %arg24[%168, %c9, %c0_155], %171 {strides = array<i32>} : memref<11x11x28xf32, #tpu.memory_space<vmem>>, vector<1x1x28xf32>,
      %172 = vector.extract_strided_slice %121 {offsets = [20, 0], sizes = [1, 28], strides = [1, 1]} : vector<22x28xf32> to vector<1x28xf32>
      %173 = arith.index_cast %arg30 : i32 to index
      %c10 = arith.constant 10 : index
      %c0_156 = arith.constant 0 : index
      %174 = vector.load %arg24[%173, %c10, %c0_156] : memref<11x11x28xf32, #tpu.memory_space<vmem>>, vector<1x1x28xf32>
      %175 = vector.shape_cast %174 : vector<1x1x28xf32> to vector<1x28xf32>
      %176 = vector.shape_cast %172 : vector<1x28xf32> to vector<1x1x28xf32>
      tpu.vector_store %arg24[%173, %c10, %c0_156], %176 {strides = array<i32>} : memref<11x11x28xf32, #tpu.memory_space<vmem>>, vector<1x1x28xf32>,
    }
    %c11_i32_9 = arith.constant 11 : i32
    %cst = arith.constant 0.000000e+00 : f32
    %7 = vector.broadcast %cst : f32 to vector<13x13x14xf32>
    %c0_10 = arith.constant 0 : index
    %c0_11 = arith.constant 0 : index
    %c0_12 = arith.constant 0 : index
    %8 = vector.load %arg25[%c0_10, %c0_11, %c0_12] : memref<13x13x14xf32, #tpu.memory_space<vmem>>, vector<13x13x14xf32>
    tpu.vector_store %arg25[%c0_10, %c0_11, %c0_12], %7 {strides = array<i32>} : memref<13x13x14xf32, #tpu.memory_space<vmem>>, vector<13x13x14xf32>,
    %c0_13 = arith.constant 0 : index
    %c0_14 = arith.constant 0 : index
    %9 = vector.load %arg5[%c0_13, %c0_14] : memref<1x14xf32, #tpu.memory_space<vmem>>, vector<1x14xf32>
    %c0_i32_15 = arith.constant 0 : i32
    %c11_i32_16 = arith.constant 11 : i32
    %10 = arith.addi %c0_i32_15, %c11_i32_16 : i32
    %c1_i32_17 = arith.constant 1 : i32
    scf.for %arg30 = %c0_i32_15 to %10 step %c1_i32_17  : i32 {
      %cst_127 = arith.constant 0.000000e+00 : f32
      %101 = vector.broadcast %cst_127 : f32 to vector<11x14xf32>
      %c0_i32_128 = arith.constant 0 : i32
      %102 = arith.addi %arg30, %c0_i32_128 : i32
      %103 = arith.index_cast %102 : i32 to index
      %c0_129 = arith.constant 0 : index
      %c0_130 = arith.constant 0 : index
      %104 = vector.load %arg24[%103, %c0_129, %c0_130] : memref<11x11x28xf32, #tpu.memory_space<vmem>>, vector<1x11x28xf32>
      %105 = vector.shape_cast %104 : vector<1x11x28xf32> to vector<11x28xf32>
      %c0_131 = arith.constant 0 : index
      %c0_132 = arith.constant 0 : index
      %c0_133 = arith.constant 0 : index
      %106 = vector.load %arg4[%c0_131, %c0_132, %c0_133] : memref<1x28x14xf32, #tpu.memory_space<vmem>>, vector<1x28x14xf32>
      %107 = vector.shape_cast %106 : vector<1x28x14xf32> to vector<28x14xf32>
      %cst_134 = arith.constant dense<0.000000e+00> : vector<11x14xf32>
      %108 = tpu.matmul %105, %107, %cst_134 {dimension_numbers = #tpu.dot_dimension_numbers<[1], [0], [0], [1], [0, 0, 1, 1], [], []>} : vector<11x28xf32>, vector<28x14xf32>, vector<11x14xf32> -> vector<11x14xf32>
      %109 = arith.addf %101, %108 : vector<11x14xf32>
      %110 = vector.broadcast %9 : vector<1x14xf32> to vector<11x14xf32>
      %111 = arith.addf %109, %110 : vector<11x14xf32>
      %c1_i32_135 = arith.constant 1 : i32
      %112 = arith.addi %arg30, %c1_i32_135 : i32
      %113 = arith.index_cast %112 : i32 to index
      %c1_136 = arith.constant 1 : index
      %c0_137 = arith.constant 0 : index
      %114 = vector.load %arg25[%113, %c1_136, %c0_137] : memref<13x13x14xf32, #tpu.memory_space<vmem>>, vector<1x11x14xf32>
      %115 = vector.shape_cast %114 : vector<1x11x14xf32> to vector<11x14xf32>
      %116 = vector.shape_cast %111 : vector<11x14xf32> to vector<1x11x14xf32>
      tpu.vector_store %arg25[%113, %c1_136, %c0_137], %116 {strides = array<i32>} : memref<13x13x14xf32, #tpu.memory_space<vmem>>, vector<1x11x14xf32>,
    }
    %c11_i32_18 = arith.constant 11 : i32
    %c0_19 = arith.constant 0 : index
    %c0_20 = arith.constant 0 : index
    %11 = vector.load %arg7[%c0_19, %c0_20] : memref<1x28xf32, #tpu.memory_space<vmem>>, vector<1x28xf32>
    %c0_i32_21 = arith.constant 0 : i32
    %c11_i32_22 = arith.constant 11 : i32
    %12 = arith.addi %c0_i32_21, %c11_i32_22 : i32
    %c1_i32_23 = arith.constant 1 : i32
    scf.for %arg30 = %c0_i32_21 to %12 step %c1_i32_23  : i32 {
      %cst_127 = arith.constant 0.000000e+00 : f32
      %101 = vector.broadcast %cst_127 : f32 to vector<11x28xf32>
      %c0_i32_128 = arith.constant 0 : i32
      %102 = arith.addi %arg30, %c0_i32_128 : i32
      %103 = arith.index_cast %102 : i32 to index
      %c0_129 = arith.constant 0 : index
      %c0_130 = arith.constant 0 : index
      %104 = vector.load %arg25[%103, %c0_129, %c0_130] : memref<13x13x14xf32, #tpu.memory_space<vmem>>, vector<1x11x14xf32>
      %105 = vector.shape_cast %104 : vector<1x11x14xf32> to vector<11x14xf32>
      %c0_131 = arith.constant 0 : index
      %c0_132 = arith.constant 0 : index
      %c0_133 = arith.constant 0 : index
      %106 = vector.load %arg6[%c0_131, %c0_132, %c0_133] : memref<9x14x28xf32, #tpu.memory_space<vmem>>, vector<1x14x28xf32>
      %107 = vector.shape_cast %106 : vector<1x14x28xf32> to vector<14x28xf32>
      %cst_134 = arith.constant dense<0.000000e+00> : vector<11x28xf32>
      %108 = tpu.matmul %105, %107, %cst_134 {dimension_numbers = #tpu.dot_dimension_numbers<[1], [0], [0], [1], [0, 0, 1, 1], [], []>} : vector<11x14xf32>, vector<14x28xf32>, vector<11x28xf32> -> vector<11x28xf32>
      %109 = arith.addf %101, %108 : vector<11x28xf32>
      %c0_i32_135 = arith.constant 0 : i32
      %110 = arith.addi %arg30, %c0_i32_135 : i32
      %111 = arith.index_cast %110 : i32 to index
      %c1_136 = arith.constant 1 : index
      %c0_137 = arith.constant 0 : index
      %112 = vector.load %arg25[%111, %c1_136, %c0_137] : memref<13x13x14xf32, #tpu.memory_space<vmem>>, vector<1x11x14xf32>
      %113 = vector.shape_cast %112 : vector<1x11x14xf32> to vector<11x14xf32>
      %c1_138 = arith.constant 1 : index
      %c0_139 = arith.constant 0 : index
      %c0_140 = arith.constant 0 : index
      %114 = vector.load %arg6[%c1_138, %c0_139, %c0_140] : memref<9x14x28xf32, #tpu.memory_space<vmem>>, vector<1x14x28xf32>
      %115 = vector.shape_cast %114 : vector<1x14x28xf32> to vector<14x28xf32>
      %cst_141 = arith.constant dense<0.000000e+00> : vector<11x28xf32>
      %116 = tpu.matmul %113, %115, %cst_141 {dimension_numbers = #tpu.dot_dimension_numbers<[1], [0], [0], [1], [0, 0, 1, 1], [], []>} : vector<11x14xf32>, vector<14x28xf32>, vector<11x28xf32> -> vector<11x28xf32>
      %117 = arith.addf %109, %116 : vector<11x28xf32>
      %c0_i32_142 = arith.constant 0 : i32
      %118 = arith.addi %arg30, %c0_i32_142 : i32
      %119 = arith.index_cast %118 : i32 to index
      %c2_143 = arith.constant 2 : index
      %c0_144 = arith.constant 0 : index
      %120 = vector.load %arg25[%119, %c2_143, %c0_144] : memref<13x13x14xf32, #tpu.memory_space<vmem>>, vector<1x11x14xf32>
      %121 = vector.shape_cast %120 : vector<1x11x14xf32> to vector<11x14xf32>
      %c2_145 = arith.constant 2 : index
      %c0_146 = arith.constant 0 : index
      %c0_147 = arith.constant 0 : index
      %122 = vector.load %arg6[%c2_145, %c0_146, %c0_147] : memref<9x14x28xf32, #tpu.memory_space<vmem>>, vector<1x14x28xf32>
      %123 = vector.shape_cast %122 : vector<1x14x28xf32> to vector<14x28xf32>
      %cst_148 = arith.constant dense<0.000000e+00> : vector<11x28xf32>
      %124 = tpu.matmul %121, %123, %cst_148 {dimension_numbers = #tpu.dot_dimension_numbers<[1], [0], [0], [1], [0, 0, 1, 1], [], []>} : vector<11x14xf32>, vector<14x28xf32>, vector<11x28xf32> -> vector<11x28xf32>
      %125 = arith.addf %117, %124 : vector<11x28xf32>
      %c1_i32_149 = arith.constant 1 : i32
      %126 = arith.addi %arg30, %c1_i32_149 : i32
      %127 = arith.index_cast %126 : i32 to index
      %c0_150 = arith.constant 0 : index
      %c0_151 = arith.constant 0 : index
      %128 = vector.load %arg25[%127, %c0_150, %c0_151] : memref<13x13x14xf32, #tpu.memory_space<vmem>>, vector<1x11x14xf32>
      %129 = vector.shape_cast %128 : vector<1x11x14xf32> to vector<11x14xf32>
      %c3_152 = arith.constant 3 : index
      %c0_153 = arith.constant 0 : index
      %c0_154 = arith.constant 0 : index
      %130 = vector.load %arg6[%c3_152, %c0_153, %c0_154] : memref<9x14x28xf32, #tpu.memory_space<vmem>>, vector<1x14x28xf32>
      %131 = vector.shape_cast %130 : vector<1x14x28xf32> to vector<14x28xf32>
      %cst_155 = arith.constant dense<0.000000e+00> : vector<11x28xf32>
      %132 = tpu.matmul %129, %131, %cst_155 {dimension_numbers = #tpu.dot_dimension_numbers<[1], [0], [0], [1], [0, 0, 1, 1], [], []>} : vector<11x14xf32>, vector<14x28xf32>, vector<11x28xf32> -> vector<11x28xf32>
      %133 = arith.addf %125, %132 : vector<11x28xf32>
      %c1_i32_156 = arith.constant 1 : i32
      %134 = arith.addi %arg30, %c1_i32_156 : i32
      %135 = arith.index_cast %134 : i32 to index
      %c1_157 = arith.constant 1 : index
      %c0_158 = arith.constant 0 : index
      %136 = vector.load %arg25[%135, %c1_157, %c0_158] : memref<13x13x14xf32, #tpu.memory_space<vmem>>, vector<1x11x14xf32>
      %137 = vector.shape_cast %136 : vector<1x11x14xf32> to vector<11x14xf32>
      %c4_159 = arith.constant 4 : index
      %c0_160 = arith.constant 0 : index
      %c0_161 = arith.constant 0 : index
      %138 = vector.load %arg6[%c4_159, %c0_160, %c0_161] : memref<9x14x28xf32, #tpu.memory_space<vmem>>, vector<1x14x28xf32>
      %139 = vector.shape_cast %138 : vector<1x14x28xf32> to vector<14x28xf32>
      %cst_162 = arith.constant dense<0.000000e+00> : vector<11x28xf32>
      %140 = tpu.matmul %137, %139, %cst_162 {dimension_numbers = #tpu.dot_dimension_numbers<[1], [0], [0], [1], [0, 0, 1, 1], [], []>} : vector<11x14xf32>, vector<14x28xf32>, vector<11x28xf32> -> vector<11x28xf32>
      %141 = arith.addf %133, %140 : vector<11x28xf32>
      %c1_i32_163 = arith.constant 1 : i32
      %142 = arith.addi %arg30, %c1_i32_163 : i32
      %143 = arith.index_cast %142 : i32 to index
      %c2_164 = arith.constant 2 : index
      %c0_165 = arith.constant 0 : index
      %144 = vector.load %arg25[%143, %c2_164, %c0_165] : memref<13x13x14xf32, #tpu.memory_space<vmem>>, vector<1x11x14xf32>
      %145 = vector.shape_cast %144 : vector<1x11x14xf32> to vector<11x14xf32>
      %c5_166 = arith.constant 5 : index
      %c0_167 = arith.constant 0 : index
      %c0_168 = arith.constant 0 : index
      %146 = vector.load %arg6[%c5_166, %c0_167, %c0_168] : memref<9x14x28xf32, #tpu.memory_space<vmem>>, vector<1x14x28xf32>
      %147 = vector.shape_cast %146 : vector<1x14x28xf32> to vector<14x28xf32>
      %cst_169 = arith.constant dense<0.000000e+00> : vector<11x28xf32>
      %148 = tpu.matmul %145, %147, %cst_169 {dimension_numbers = #tpu.dot_dimension_numbers<[1], [0], [0], [1], [0, 0, 1, 1], [], []>} : vector<11x14xf32>, vector<14x28xf32>, vector<11x28xf32> -> vector<11x28xf32>
      %149 = arith.addf %141, %148 : vector<11x28xf32>
      %c2_i32 = arith.constant 2 : i32
      %150 = arith.addi %arg30, %c2_i32 : i32
      %151 = arith.index_cast %150 : i32 to index
      %c0_170 = arith.constant 0 : index
      %c0_171 = arith.constant 0 : index
      %152 = vector.load %arg25[%151, %c0_170, %c0_171] : memref<13x13x14xf32, #tpu.memory_space<vmem>>, vector<1x11x14xf32>
      %153 = vector.shape_cast %152 : vector<1x11x14xf32> to vector<11x14xf32>
      %c6_172 = arith.constant 6 : index
      %c0_173 = arith.constant 0 : index
      %c0_174 = arith.constant 0 : index
      %154 = vector.load %arg6[%c6_172, %c0_173, %c0_174] : memref<9x14x28xf32, #tpu.memory_space<vmem>>, vector<1x14x28xf32>
      %155 = vector.shape_cast %154 : vector<1x14x28xf32> to vector<14x28xf32>
      %cst_175 = arith.constant dense<0.000000e+00> : vector<11x28xf32>
      %156 = tpu.matmul %153, %155, %cst_175 {dimension_numbers = #tpu.dot_dimension_numbers<[1], [0], [0], [1], [0, 0, 1, 1], [], []>} : vector<11x14xf32>, vector<14x28xf32>, vector<11x28xf32> -> vector<11x28xf32>
      %157 = arith.addf %149, %156 : vector<11x28xf32>
      %c2_i32_176 = arith.constant 2 : i32
      %158 = arith.addi %arg30, %c2_i32_176 : i32
      %159 = arith.index_cast %158 : i32 to index
      %c1_177 = arith.constant 1 : index
      %c0_178 = arith.constant 0 : index
      %160 = vector.load %arg25[%159, %c1_177, %c0_178] : memref<13x13x14xf32, #tpu.memory_space<vmem>>, vector<1x11x14xf32>
      %161 = vector.shape_cast %160 : vector<1x11x14xf32> to vector<11x14xf32>
      %c7_179 = arith.constant 7 : index
      %c0_180 = arith.constant 0 : index
      %c0_181 = arith.constant 0 : index
      %162 = vector.load %arg6[%c7_179, %c0_180, %c0_181] : memref<9x14x28xf32, #tpu.memory_space<vmem>>, vector<1x14x28xf32>
      %163 = vector.shape_cast %162 : vector<1x14x28xf32> to vector<14x28xf32>
      %cst_182 = arith.constant dense<0.000000e+00> : vector<11x28xf32>
      %164 = tpu.matmul %161, %163, %cst_182 {dimension_numbers = #tpu.dot_dimension_numbers<[1], [0], [0], [1], [0, 0, 1, 1], [], []>} : vector<11x14xf32>, vector<14x28xf32>, vector<11x28xf32> -> vector<11x28xf32>
      %165 = arith.addf %157, %164 : vector<11x28xf32>
      %c2_i32_183 = arith.constant 2 : i32
      %166 = arith.addi %arg30, %c2_i32_183 : i32
      %167 = arith.index_cast %166 : i32 to index
      %c2_184 = arith.constant 2 : index
      %c0_185 = arith.constant 0 : index
      %168 = vector.load %arg25[%167, %c2_184, %c0_185] : memref<13x13x14xf32, #tpu.memory_space<vmem>>, vector<1x11x14xf32>
      %169 = vector.shape_cast %168 : vector<1x11x14xf32> to vector<11x14xf32>
      %c8_186 = arith.constant 8 : index
      %c0_187 = arith.constant 0 : index
      %c0_188 = arith.constant 0 : index
      %170 = vector.load %arg6[%c8_186, %c0_187, %c0_188] : memref<9x14x28xf32, #tpu.memory_space<vmem>>, vector<1x14x28xf32>
      %171 = vector.shape_cast %170 : vector<1x14x28xf32> to vector<14x28xf32>
      %cst_189 = arith.constant dense<0.000000e+00> : vector<11x28xf32>
      %172 = tpu.matmul %169, %171, %cst_189 {dimension_numbers = #tpu.dot_dimension_numbers<[1], [0], [0], [1], [0, 0, 1, 1], [], []>} : vector<11x14xf32>, vector<14x28xf32>, vector<11x28xf32> -> vector<11x28xf32>
      %173 = arith.addf %165, %172 : vector<11x28xf32>
      %174 = vector.broadcast %11 : vector<1x28xf32> to vector<11x28xf32>
      %175 = arith.addf %173, %174 : vector<11x28xf32>
      %176 = arith.index_cast %arg30 : i32 to index
      %c0_190 = arith.constant 0 : index
      %c0_191 = arith.constant 0 : index
      %177 = vector.load %arg24[%176, %c0_190, %c0_191] : memref<11x11x28xf32, #tpu.memory_space<vmem>>, vector<1x11x28xf32>
      %178 = vector.shape_cast %177 : vector<1x11x28xf32> to vector<11x28xf32>
      %179 = arith.addf %175, %178 : vector<11x28xf32>
      %c0_i32_192 = arith.constant 0 : i32
      %180 = arith.addi %arg30, %c0_i32_192 : i32
      %181 = arith.index_cast %180 : i32 to index
      %c0_193 = arith.constant 0 : index
      %c0_194 = arith.constant 0 : index
      %182 = vector.load %arg24[%181, %c0_193, %c0_194] : memref<11x11x28xf32, #tpu.memory_space<vmem>>, vector<1x11x28xf32>
      %183 = vector.shape_cast %182 : vector<1x11x28xf32> to vector<11x28xf32>
      %184 = vector.shape_cast %179 : vector<11x28xf32> to vector<1x11x28xf32>
      tpu.vector_store %arg24[%181, %c0_193, %c0_194], %184 {strides = array<i32>} : memref<11x11x28xf32, #tpu.memory_space<vmem>>, vector<1x11x28xf32>,
    }
    %c11_i32_24 = arith.constant 11 : i32
    %c0_25 = arith.constant 0 : index
    %c0_26 = arith.constant 0 : index
    %13 = vector.load %arg9[%c0_25, %c0_26] : memref<1x48xf32, #tpu.memory_space<vmem>>, vector<1x48xf32>
    %c0_i32_27 = arith.constant 0 : i32
    %c9_i32 = arith.constant 9 : i32
    %14 = arith.addi %c0_i32_27, %c9_i32 : i32
    %c1_i32_28 = arith.constant 1 : i32
    scf.for %arg30 = %c0_i32_27 to %14 step %c1_i32_28  : i32 {
      %cst_127 = arith.constant 0.000000e+00 : f32
      %101 = vector.broadcast %cst_127 : f32 to vector<9x48xf32>
      %c0_i32_128 = arith.constant 0 : i32
      %102 = arith.addi %arg30, %c0_i32_128 : i32
      %103 = arith.index_cast %102 : i32 to index
      %c0_129 = arith.constant 0 : index
      %c0_130 = arith.constant 0 : index
      %104 = vector.load %arg24[%103, %c0_129, %c0_130] : memref<11x11x28xf32, #tpu.memory_space<vmem>>, vector<1x9x28xf32>
      %105 = vector.shape_cast %104 : vector<1x9x28xf32> to vector<9x28xf32>
      %c0_131 = arith.constant 0 : index
      %c0_132 = arith.constant 0 : index
      %c0_133 = arith.constant 0 : index
      %106 = vector.load %arg8[%c0_131, %c0_132, %c0_133] : memref<9x28x48xf32, #tpu.memory_space<vmem>>, vector<1x28x48xf32>
      %107 = vector.shape_cast %106 : vector<1x28x48xf32> to vector<28x48xf32>
      %cst_134 = arith.constant dense<0.000000e+00> : vector<9x48xf32>
      %108 = tpu.matmul %105, %107, %cst_134 {dimension_numbers = #tpu.dot_dimension_numbers<[1], [0], [0], [1], [0, 0, 1, 1], [], []>} : vector<9x28xf32>, vector<28x48xf32>, vector<9x48xf32> -> vector<9x48xf32>
      %109 = arith.addf %101, %108 : vector<9x48xf32>
      %c0_i32_135 = arith.constant 0 : i32
      %110 = arith.addi %arg30, %c0_i32_135 : i32
      %111 = arith.index_cast %110 : i32 to index
      %c1_136 = arith.constant 1 : index
      %c0_137 = arith.constant 0 : index
      %112 = vector.load %arg24[%111, %c1_136, %c0_137] : memref<11x11x28xf32, #tpu.memory_space<vmem>>, vector<1x9x28xf32>
      %113 = vector.shape_cast %112 : vector<1x9x28xf32> to vector<9x28xf32>
      %c1_138 = arith.constant 1 : index
      %c0_139 = arith.constant 0 : index
      %c0_140 = arith.constant 0 : index
      %114 = vector.load %arg8[%c1_138, %c0_139, %c0_140] : memref<9x28x48xf32, #tpu.memory_space<vmem>>, vector<1x28x48xf32>
      %115 = vector.shape_cast %114 : vector<1x28x48xf32> to vector<28x48xf32>
      %cst_141 = arith.constant dense<0.000000e+00> : vector<9x48xf32>
      %116 = tpu.matmul %113, %115, %cst_141 {dimension_numbers = #tpu.dot_dimension_numbers<[1], [0], [0], [1], [0, 0, 1, 1], [], []>} : vector<9x28xf32>, vector<28x48xf32>, vector<9x48xf32> -> vector<9x48xf32>
      %117 = arith.addf %109, %116 : vector<9x48xf32>
      %c0_i32_142 = arith.constant 0 : i32
      %118 = arith.addi %arg30, %c0_i32_142 : i32
      %119 = arith.index_cast %118 : i32 to index
      %c2_143 = arith.constant 2 : index
      %c0_144 = arith.constant 0 : index
      %120 = vector.load %arg24[%119, %c2_143, %c0_144] : memref<11x11x28xf32, #tpu.memory_space<vmem>>, vector<1x9x28xf32>
      %121 = vector.shape_cast %120 : vector<1x9x28xf32> to vector<9x28xf32>
      %c2_145 = arith.constant 2 : index
      %c0_146 = arith.constant 0 : index
      %c0_147 = arith.constant 0 : index
      %122 = vector.load %arg8[%c2_145, %c0_146, %c0_147] : memref<9x28x48xf32, #tpu.memory_space<vmem>>, vector<1x28x48xf32>
      %123 = vector.shape_cast %122 : vector<1x28x48xf32> to vector<28x48xf32>
      %cst_148 = arith.constant dense<0.000000e+00> : vector<9x48xf32>
      %124 = tpu.matmul %121, %123, %cst_148 {dimension_numbers = #tpu.dot_dimension_numbers<[1], [0], [0], [1], [0, 0, 1, 1], [], []>} : vector<9x28xf32>, vector<28x48xf32>, vector<9x48xf32> -> vector<9x48xf32>
      %125 = arith.addf %117, %124 : vector<9x48xf32>
      %c1_i32_149 = arith.constant 1 : i32
      %126 = arith.addi %arg30, %c1_i32_149 : i32
      %127 = arith.index_cast %126 : i32 to index
      %c0_150 = arith.constant 0 : index
      %c0_151 = arith.constant 0 : index
      %128 = vector.load %arg24[%127, %c0_150, %c0_151] : memref<11x11x28xf32, #tpu.memory_space<vmem>>, vector<1x9x28xf32>
      %129 = vector.shape_cast %128 : vector<1x9x28xf32> to vector<9x28xf32>
      %c3_152 = arith.constant 3 : index
      %c0_153 = arith.constant 0 : index
      %c0_154 = arith.constant 0 : index
      %130 = vector.load %arg8[%c3_152, %c0_153, %c0_154] : memref<9x28x48xf32, #tpu.memory_space<vmem>>, vector<1x28x48xf32>
      %131 = vector.shape_cast %130 : vector<1x28x48xf32> to vector<28x48xf32>
      %cst_155 = arith.constant dense<0.000000e+00> : vector<9x48xf32>
      %132 = tpu.matmul %129, %131, %cst_155 {dimension_numbers = #tpu.dot_dimension_numbers<[1], [0], [0], [1], [0, 0, 1, 1], [], []>} : vector<9x28xf32>, vector<28x48xf32>, vector<9x48xf32> -> vector<9x48xf32>
      %133 = arith.addf %125, %132 : vector<9x48xf32>
      %c1_i32_156 = arith.constant 1 : i32
      %134 = arith.addi %arg30, %c1_i32_156 : i32
      %135 = arith.index_cast %134 : i32 to index
      %c1_157 = arith.constant 1 : index
      %c0_158 = arith.constant 0 : index
      %136 = vector.load %arg24[%135, %c1_157, %c0_158] : memref<11x11x28xf32, #tpu.memory_space<vmem>>, vector<1x9x28xf32>
      %137 = vector.shape_cast %136 : vector<1x9x28xf32> to vector<9x28xf32>
      %c4_159 = arith.constant 4 : index
      %c0_160 = arith.constant 0 : index
      %c0_161 = arith.constant 0 : index
      %138 = vector.load %arg8[%c4_159, %c0_160, %c0_161] : memref<9x28x48xf32, #tpu.memory_space<vmem>>, vector<1x28x48xf32>
      %139 = vector.shape_cast %138 : vector<1x28x48xf32> to vector<28x48xf32>
      %cst_162 = arith.constant dense<0.000000e+00> : vector<9x48xf32>
      %140 = tpu.matmul %137, %139, %cst_162 {dimension_numbers = #tpu.dot_dimension_numbers<[1], [0], [0], [1], [0, 0, 1, 1], [], []>} : vector<9x28xf32>, vector<28x48xf32>, vector<9x48xf32> -> vector<9x48xf32>
      %141 = arith.addf %133, %140 : vector<9x48xf32>
      %c1_i32_163 = arith.constant 1 : i32
      %142 = arith.addi %arg30, %c1_i32_163 : i32
      %143 = arith.index_cast %142 : i32 to index
      %c2_164 = arith.constant 2 : index
      %c0_165 = arith.constant 0 : index
      %144 = vector.load %arg24[%143, %c2_164, %c0_165] : memref<11x11x28xf32, #tpu.memory_space<vmem>>, vector<1x9x28xf32>
      %145 = vector.shape_cast %144 : vector<1x9x28xf32> to vector<9x28xf32>
      %c5_166 = arith.constant 5 : index
      %c0_167 = arith.constant 0 : index
      %c0_168 = arith.constant 0 : index
      %146 = vector.load %arg8[%c5_166, %c0_167, %c0_168] : memref<9x28x48xf32, #tpu.memory_space<vmem>>, vector<1x28x48xf32>
      %147 = vector.shape_cast %146 : vector<1x28x48xf32> to vector<28x48xf32>
      %cst_169 = arith.constant dense<0.000000e+00> : vector<9x48xf32>
      %148 = tpu.matmul %145, %147, %cst_169 {dimension_numbers = #tpu.dot_dimension_numbers<[1], [0], [0], [1], [0, 0, 1, 1], [], []>} : vector<9x28xf32>, vector<28x48xf32>, vector<9x48xf32> -> vector<9x48xf32>
      %149 = arith.addf %141, %148 : vector<9x48xf32>
      %c2_i32 = arith.constant 2 : i32
      %150 = arith.addi %arg30, %c2_i32 : i32
      %151 = arith.index_cast %150 : i32 to index
      %c0_170 = arith.constant 0 : index
      %c0_171 = arith.constant 0 : index
      %152 = vector.load %arg24[%151, %c0_170, %c0_171] : memref<11x11x28xf32, #tpu.memory_space<vmem>>, vector<1x9x28xf32>
      %153 = vector.shape_cast %152 : vector<1x9x28xf32> to vector<9x28xf32>
      %c6_172 = arith.constant 6 : index
      %c0_173 = arith.constant 0 : index
      %c0_174 = arith.constant 0 : index
      %154 = vector.load %arg8[%c6_172, %c0_173, %c0_174] : memref<9x28x48xf32, #tpu.memory_space<vmem>>, vector<1x28x48xf32>
      %155 = vector.shape_cast %154 : vector<1x28x48xf32> to vector<28x48xf32>
      %cst_175 = arith.constant dense<0.000000e+00> : vector<9x48xf32>
      %156 = tpu.matmul %153, %155, %cst_175 {dimension_numbers = #tpu.dot_dimension_numbers<[1], [0], [0], [1], [0, 0, 1, 1], [], []>} : vector<9x28xf32>, vector<28x48xf32>, vector<9x48xf32> -> vector<9x48xf32>
      %157 = arith.addf %149, %156 : vector<9x48xf32>
      %c2_i32_176 = arith.constant 2 : i32
      %158 = arith.addi %arg30, %c2_i32_176 : i32
      %159 = arith.index_cast %158 : i32 to index
      %c1_177 = arith.constant 1 : index
      %c0_178 = arith.constant 0 : index
      %160 = vector.load %arg24[%159, %c1_177, %c0_178] : memref<11x11x28xf32, #tpu.memory_space<vmem>>, vector<1x9x28xf32>
      %161 = vector.shape_cast %160 : vector<1x9x28xf32> to vector<9x28xf32>
      %c7_179 = arith.constant 7 : index
      %c0_180 = arith.constant 0 : index
      %c0_181 = arith.constant 0 : index
      %162 = vector.load %arg8[%c7_179, %c0_180, %c0_181] : memref<9x28x48xf32, #tpu.memory_space<vmem>>, vector<1x28x48xf32>
      %163 = vector.shape_cast %162 : vector<1x28x48xf32> to vector<28x48xf32>
      %cst_182 = arith.constant dense<0.000000e+00> : vector<9x48xf32>
      %164 = tpu.matmul %161, %163, %cst_182 {dimension_numbers = #tpu.dot_dimension_numbers<[1], [0], [0], [1], [0, 0, 1, 1], [], []>} : vector<9x28xf32>, vector<28x48xf32>, vector<9x48xf32> -> vector<9x48xf32>
      %165 = arith.addf %157, %164 : vector<9x48xf32>
      %c2_i32_183 = arith.constant 2 : i32
      %166 = arith.addi %arg30, %c2_i32_183 : i32
      %167 = arith.index_cast %166 : i32 to index
      %c2_184 = arith.constant 2 : index
      %c0_185 = arith.constant 0 : index
      %168 = vector.load %arg24[%167, %c2_184, %c0_185] : memref<11x11x28xf32, #tpu.memory_space<vmem>>, vector<1x9x28xf32>
      %169 = vector.shape_cast %168 : vector<1x9x28xf32> to vector<9x28xf32>
      %c8_186 = arith.constant 8 : index
      %c0_187 = arith.constant 0 : index
      %c0_188 = arith.constant 0 : index
      %170 = vector.load %arg8[%c8_186, %c0_187, %c0_188] : memref<9x28x48xf32, #tpu.memory_space<vmem>>, vector<1x28x48xf32>
      %171 = vector.shape_cast %170 : vector<1x28x48xf32> to vector<28x48xf32>
      %cst_189 = arith.constant dense<0.000000e+00> : vector<9x48xf32>
      %172 = tpu.matmul %169, %171, %cst_189 {dimension_numbers = #tpu.dot_dimension_numbers<[1], [0], [0], [1], [0, 0, 1, 1], [], []>} : vector<9x28xf32>, vector<28x48xf32>, vector<9x48xf32> -> vector<9x48xf32>
      %173 = arith.addf %165, %172 : vector<9x48xf32>
      %174 = vector.broadcast %13 : vector<1x48xf32> to vector<9x48xf32>
      %175 = arith.addf %173, %174 : vector<9x48xf32>
      %cst_190 = arith.constant 0.000000e+00 : f32
      %176 = vector.broadcast %cst_190 : f32 to vector<9x48xf32>
      %177 = arith.cmpf ogt, %175, %176 : vector<9x48xf32>
      %178 = vector.broadcast %1 : vector<1x1xf32> to vector<9x48xf32>
      %179 = arith.mulf %178, %175 : vector<9x48xf32>
      %180 = arith.select %177, %175, %179 : vector<9x48xi1>, vector<9x48xf32>
      %c0_i32_191 = arith.constant 0 : i32
      %181 = arith.addi %arg30, %c0_i32_191 : i32
      %182 = arith.index_cast %181 : i32 to index
      %c0_192 = arith.constant 0 : index
      %c0_193 = arith.constant 0 : index
      %183 = vector.load %arg26[%182, %c0_192, %c0_193] : memref<9x9x48xf32, #tpu.memory_space<vmem>>, vector<1x9x48xf32>
      %184 = vector.shape_cast %183 : vector<1x9x48xf32> to vector<9x48xf32>
      %185 = vector.shape_cast %180 : vector<9x48xf32> to vector<1x9x48xf32>
      tpu.vector_store %arg26[%182, %c0_192, %c0_193], %185 {strides = array<i32>} : memref<9x9x48xf32, #tpu.memory_space<vmem>>, vector<1x9x48xf32>,
    }
    %c9_i32_29 = arith.constant 9 : i32
    %c0_i32_30 = arith.constant 0 : i32
    %c4_i32 = arith.constant 4 : i32
    %15 = arith.addi %c0_i32_30, %c4_i32 : i32
    %c1_i32_31 = arith.constant 1 : i32
    scf.for %arg30 = %c0_i32_30 to %15 step %c1_i32_31  : i32 {
      %c2_i32 = arith.constant 2 : i32
      %101 = arith.muli %c2_i32, %arg30 : i32
      %102 = arith.index_cast %101 : i32 to index
      %c0_127 = arith.constant 0 : index
      %c0_128 = arith.constant 0 : index
      %103 = vector.load %arg26[%102, %c0_127, %c0_128] : memref<9x9x48xf32, #tpu.memory_space<vmem>>, vector<1x9x48xf32>
      %104 = vector.shape_cast %103 : vector<1x9x48xf32> to vector<9x48xf32>
      %c2_i32_129 = arith.constant 2 : i32
      %105 = arith.muli %c2_i32_129, %arg30 : i32
      %c1_i32_130 = arith.constant 1 : i32
      %106 = arith.addi %105, %c1_i32_130 : i32
      %107 = arith.index_cast %106 : i32 to index
      %c0_131 = arith.constant 0 : index
      %c0_132 = arith.constant 0 : index
      %108 = vector.load %arg26[%107, %c0_131, %c0_132] : memref<9x9x48xf32, #tpu.memory_space<vmem>>, vector<1x9x48xf32>
      %109 = vector.shape_cast %108 : vector<1x9x48xf32> to vector<9x48xf32>
      %110 = arith.maximumf %104, %109 : vector<9x48xf32>
      %c2_i32_133 = arith.constant 2 : i32
      %111 = arith.muli %c2_i32_133, %arg30 : i32
      %c2_i32_134 = arith.constant 2 : i32
      %112 = arith.addi %111, %c2_i32_134 : i32
      %113 = arith.index_cast %112 : i32 to index
      %c0_135 = arith.constant 0 : index
      %c0_136 = arith.constant 0 : index
      %114 = vector.load %arg26[%113, %c0_135, %c0_136] : memref<9x9x48xf32, #tpu.memory_space<vmem>>, vector<1x9x48xf32>
      %115 = vector.shape_cast %114 : vector<1x9x48xf32> to vector<9x48xf32>
      %116 = arith.maximumf %110, %115 : vector<9x48xf32>
      %117 = vector.extract_strided_slice %116 {offsets = [0, 0], sizes = [7, 48], strides = [1, 1]} : vector<9x48xf32> to vector<7x48xf32>
      %118 = vector.extract_strided_slice %116 {offsets = [1, 0], sizes = [7, 48], strides = [1, 1]} : vector<9x48xf32> to vector<7x48xf32>
      %119 = arith.maximumf %117, %118 : vector<7x48xf32>
      %120 = vector.extract_strided_slice %116 {offsets = [2, 0], sizes = [7, 48], strides = [1, 1]} : vector<9x48xf32> to vector<7x48xf32>
      %121 = arith.maximumf %119, %120 : vector<7x48xf32>
      %122 = vector.extract_strided_slice %121 {offsets = [0, 0], sizes = [1, 48], strides = [1, 1]} : vector<7x48xf32> to vector<1x48xf32>
      %123 = arith.index_cast %arg30 : i32 to index
      %c0_137 = arith.constant 0 : index
      %c0_138 = arith.constant 0 : index
      %124 = vector.load %arg27[%123, %c0_137, %c0_138] : memref<4x4x48xf32, #tpu.memory_space<vmem>>, vector<1x1x48xf32>
      %125 = vector.shape_cast %124 : vector<1x1x48xf32> to vector<1x48xf32>
      %126 = vector.shape_cast %122 : vector<1x48xf32> to vector<1x1x48xf32>
      tpu.vector_store %arg27[%123, %c0_137, %c0_138], %126 {strides = array<i32>} : memref<4x4x48xf32, #tpu.memory_space<vmem>>, vector<1x1x48xf32>,
      %127 = vector.extract_strided_slice %121 {offsets = [2, 0], sizes = [1, 48], strides = [1, 1]} : vector<7x48xf32> to vector<1x48xf32>
      %128 = arith.index_cast %arg30 : i32 to index
      %c1_139 = arith.constant 1 : index
      %c0_140 = arith.constant 0 : index
      %129 = vector.load %arg27[%128, %c1_139, %c0_140] : memref<4x4x48xf32, #tpu.memory_space<vmem>>, vector<1x1x48xf32>
      %130 = vector.shape_cast %129 : vector<1x1x48xf32> to vector<1x48xf32>
      %131 = vector.shape_cast %127 : vector<1x48xf32> to vector<1x1x48xf32>
      tpu.vector_store %arg27[%128, %c1_139, %c0_140], %131 {strides = array<i32>} : memref<4x4x48xf32, #tpu.memory_space<vmem>>, vector<1x1x48xf32>,
      %132 = vector.extract_strided_slice %121 {offsets = [4, 0], sizes = [1, 48], strides = [1, 1]} : vector<7x48xf32> to vector<1x48xf32>
      %133 = arith.index_cast %arg30 : i32 to index
      %c2_141 = arith.constant 2 : index
      %c0_142 = arith.constant 0 : index
      %134 = vector.load %arg27[%133, %c2_141, %c0_142] : memref<4x4x48xf32, #tpu.memory_space<vmem>>, vector<1x1x48xf32>
      %135 = vector.shape_cast %134 : vector<1x1x48xf32> to vector<1x48xf32>
      %136 = vector.shape_cast %132 : vector<1x48xf32> to vector<1x1x48xf32>
      tpu.vector_store %arg27[%133, %c2_141, %c0_142], %136 {strides = array<i32>} : memref<4x4x48xf32, #tpu.memory_space<vmem>>, vector<1x1x48xf32>,
      %137 = vector.extract_strided_slice %121 {offsets = [6, 0], sizes = [1, 48], strides = [1, 1]} : vector<7x48xf32> to vector<1x48xf32>
      %138 = arith.index_cast %arg30 : i32 to index
      %c3_143 = arith.constant 3 : index
      %c0_144 = arith.constant 0 : index
      %139 = vector.load %arg27[%138, %c3_143, %c0_144] : memref<4x4x48xf32, #tpu.memory_space<vmem>>, vector<1x1x48xf32>
      %140 = vector.shape_cast %139 : vector<1x1x48xf32> to vector<1x48xf32>
      %141 = vector.shape_cast %137 : vector<1x48xf32> to vector<1x1x48xf32>
      tpu.vector_store %arg27[%138, %c3_143, %c0_144], %141 {strides = array<i32>} : memref<4x4x48xf32, #tpu.memory_space<vmem>>, vector<1x1x48xf32>,
    }
    %c4_i32_32 = arith.constant 4 : i32
    %cst_33 = arith.constant 0.000000e+00 : f32
    %16 = vector.broadcast %cst_33 : f32 to vector<6x6x24xf32>
    %c0_34 = arith.constant 0 : index
    %c0_35 = arith.constant 0 : index
    %c0_36 = arith.constant 0 : index
    %17 = vector.load %arg28[%c0_34, %c0_35, %c0_36] : memref<6x6x24xf32, #tpu.memory_space<vmem>>, vector<6x6x24xf32>
    tpu.vector_store %arg28[%c0_34, %c0_35, %c0_36], %16 {strides = array<i32>} : memref<6x6x24xf32, #tpu.memory_space<vmem>>, vector<6x6x24xf32>,
    %c0_37 = arith.constant 0 : index
    %c0_38 = arith.constant 0 : index
    %18 = vector.load %arg11[%c0_37, %c0_38] : memref<1x24xf32, #tpu.memory_space<vmem>>, vector<1x24xf32>
    %c0_i32_39 = arith.constant 0 : i32
    %c4_i32_40 = arith.constant 4 : i32
    %19 = arith.addi %c0_i32_39, %c4_i32_40 : i32
    %c1_i32_41 = arith.constant 1 : i32
    scf.for %arg30 = %c0_i32_39 to %19 step %c1_i32_41  : i32 {
      %cst_127 = arith.constant 0.000000e+00 : f32
      %101 = vector.broadcast %cst_127 : f32 to vector<4x24xf32>
      %c0_i32_128 = arith.constant 0 : i32
      %102 = arith.addi %arg30, %c0_i32_128 : i32
      %103 = arith.index_cast %102 : i32 to index
      %c0_129 = arith.constant 0 : index
      %c0_130 = arith.constant 0 : index
      %104 = vector.load %arg27[%103, %c0_129, %c0_130] : memref<4x4x48xf32, #tpu.memory_space<vmem>>, vector<1x4x48xf32>
      %105 = vector.shape_cast %104 : vector<1x4x48xf32> to vector<4x48xf32>
      %c0_131 = arith.constant 0 : index
      %c0_132 = arith.constant 0 : index
      %c0_133 = arith.constant 0 : index
      %106 = vector.load %arg10[%c0_131, %c0_132, %c0_133] : memref<1x48x24xf32, #tpu.memory_space<vmem>>, vector<1x48x24xf32>
      %107 = vector.shape_cast %106 : vector<1x48x24xf32> to vector<48x24xf32>
      %cst_134 = arith.constant dense<0.000000e+00> : vector<4x24xf32>
      %108 = tpu.matmul %105, %107, %cst_134 {dimension_numbers = #tpu.dot_dimension_numbers<[1], [0], [0], [1], [0, 0, 1, 1], [], []>} : vector<4x48xf32>, vector<48x24xf32>, vector<4x24xf32> -> vector<4x24xf32>
      %109 = arith.addf %101, %108 : vector<4x24xf32>
      %110 = vector.broadcast %18 : vector<1x24xf32> to vector<4x24xf32>
      %111 = arith.addf %109, %110 : vector<4x24xf32>
      %c1_i32_135 = arith.constant 1 : i32
      %112 = arith.addi %arg30, %c1_i32_135 : i32
      %113 = arith.index_cast %112 : i32 to index
      %c1_136 = arith.constant 1 : index
      %c0_137 = arith.constant 0 : index
      %114 = vector.load %arg28[%113, %c1_136, %c0_137] : memref<6x6x24xf32, #tpu.memory_space<vmem>>, vector<1x4x24xf32>
      %115 = vector.shape_cast %114 : vector<1x4x24xf32> to vector<4x24xf32>
      %116 = vector.shape_cast %111 : vector<4x24xf32> to vector<1x4x24xf32>
      tpu.vector_store %arg28[%113, %c1_136, %c0_137], %116 {strides = array<i32>} : memref<6x6x24xf32, #tpu.memory_space<vmem>>, vector<1x4x24xf32>,
    }
    %c4_i32_42 = arith.constant 4 : i32
    %c0_43 = arith.constant 0 : index
    %c0_44 = arith.constant 0 : index
    %20 = vector.load %arg13[%c0_43, %c0_44] : memref<1x48xf32, #tpu.memory_space<vmem>>, vector<1x48xf32>
    %c0_i32_45 = arith.constant 0 : i32
    %c4_i32_46 = arith.constant 4 : i32
    %21 = arith.addi %c0_i32_45, %c4_i32_46 : i32
    %c1_i32_47 = arith.constant 1 : i32
    scf.for %arg30 = %c0_i32_45 to %21 step %c1_i32_47  : i32 {
      %cst_127 = arith.constant 0.000000e+00 : f32
      %101 = vector.broadcast %cst_127 : f32 to vector<4x48xf32>
      %c0_i32_128 = arith.constant 0 : i32
      %102 = arith.addi %arg30, %c0_i32_128 : i32
      %103 = arith.index_cast %102 : i32 to index
      %c0_129 = arith.constant 0 : index
      %c0_130 = arith.constant 0 : index
      %104 = vector.load %arg28[%103, %c0_129, %c0_130] : memref<6x6x24xf32, #tpu.memory_space<vmem>>, vector<1x4x24xf32>
      %105 = vector.shape_cast %104 : vector<1x4x24xf32> to vector<4x24xf32>
      %c0_131 = arith.constant 0 : index
      %c0_132 = arith.constant 0 : index
      %c0_133 = arith.constant 0 : index
      %106 = vector.load %arg12[%c0_131, %c0_132, %c0_133] : memref<9x24x48xf32, #tpu.memory_space<vmem>>, vector<1x24x48xf32>
      %107 = vector.shape_cast %106 : vector<1x24x48xf32> to vector<24x48xf32>
      %cst_134 = arith.constant dense<0.000000e+00> : vector<4x48xf32>
      %108 = tpu.matmul %105, %107, %cst_134 {dimension_numbers = #tpu.dot_dimension_numbers<[1], [0], [0], [1], [0, 0, 1, 1], [], []>} : vector<4x24xf32>, vector<24x48xf32>, vector<4x48xf32> -> vector<4x48xf32>
      %109 = arith.addf %101, %108 : vector<4x48xf32>
      %c0_i32_135 = arith.constant 0 : i32
      %110 = arith.addi %arg30, %c0_i32_135 : i32
      %111 = arith.index_cast %110 : i32 to index
      %c1_136 = arith.constant 1 : index
      %c0_137 = arith.constant 0 : index
      %112 = vector.load %arg28[%111, %c1_136, %c0_137] : memref<6x6x24xf32, #tpu.memory_space<vmem>>, vector<1x4x24xf32>
      %113 = vector.shape_cast %112 : vector<1x4x24xf32> to vector<4x24xf32>
      %c1_138 = arith.constant 1 : index
      %c0_139 = arith.constant 0 : index
      %c0_140 = arith.constant 0 : index
      %114 = vector.load %arg12[%c1_138, %c0_139, %c0_140] : memref<9x24x48xf32, #tpu.memory_space<vmem>>, vector<1x24x48xf32>
      %115 = vector.shape_cast %114 : vector<1x24x48xf32> to vector<24x48xf32>
      %cst_141 = arith.constant dense<0.000000e+00> : vector<4x48xf32>
      %116 = tpu.matmul %113, %115, %cst_141 {dimension_numbers = #tpu.dot_dimension_numbers<[1], [0], [0], [1], [0, 0, 1, 1], [], []>} : vector<4x24xf32>, vector<24x48xf32>, vector<4x48xf32> -> vector<4x48xf32>
      %117 = arith.addf %109, %116 : vector<4x48xf32>
      %c0_i32_142 = arith.constant 0 : i32
      %118 = arith.addi %arg30, %c0_i32_142 : i32
      %119 = arith.index_cast %118 : i32 to index
      %c2_143 = arith.constant 2 : index
      %c0_144 = arith.constant 0 : index
      %120 = vector.load %arg28[%119, %c2_143, %c0_144] : memref<6x6x24xf32, #tpu.memory_space<vmem>>, vector<1x4x24xf32>
      %121 = vector.shape_cast %120 : vector<1x4x24xf32> to vector<4x24xf32>
      %c2_145 = arith.constant 2 : index
      %c0_146 = arith.constant 0 : index
      %c0_147 = arith.constant 0 : index
      %122 = vector.load %arg12[%c2_145, %c0_146, %c0_147] : memref<9x24x48xf32, #tpu.memory_space<vmem>>, vector<1x24x48xf32>
      %123 = vector.shape_cast %122 : vector<1x24x48xf32> to vector<24x48xf32>
      %cst_148 = arith.constant dense<0.000000e+00> : vector<4x48xf32>
      %124 = tpu.matmul %121, %123, %cst_148 {dimension_numbers = #tpu.dot_dimension_numbers<[1], [0], [0], [1], [0, 0, 1, 1], [], []>} : vector<4x24xf32>, vector<24x48xf32>, vector<4x48xf32> -> vector<4x48xf32>
      %125 = arith.addf %117, %124 : vector<4x48xf32>
      %c1_i32_149 = arith.constant 1 : i32
      %126 = arith.addi %arg30, %c1_i32_149 : i32
      %127 = arith.index_cast %126 : i32 to index
      %c0_150 = arith.constant 0 : index
      %c0_151 = arith.constant 0 : index
      %128 = vector.load %arg28[%127, %c0_150, %c0_151] : memref<6x6x24xf32, #tpu.memory_space<vmem>>, vector<1x4x24xf32>
      %129 = vector.shape_cast %128 : vector<1x4x24xf32> to vector<4x24xf32>
      %c3_152 = arith.constant 3 : index
      %c0_153 = arith.constant 0 : index
      %c0_154 = arith.constant 0 : index
      %130 = vector.load %arg12[%c3_152, %c0_153, %c0_154] : memref<9x24x48xf32, #tpu.memory_space<vmem>>, vector<1x24x48xf32>
      %131 = vector.shape_cast %130 : vector<1x24x48xf32> to vector<24x48xf32>
      %cst_155 = arith.constant dense<0.000000e+00> : vector<4x48xf32>
      %132 = tpu.matmul %129, %131, %cst_155 {dimension_numbers = #tpu.dot_dimension_numbers<[1], [0], [0], [1], [0, 0, 1, 1], [], []>} : vector<4x24xf32>, vector<24x48xf32>, vector<4x48xf32> -> vector<4x48xf32>
      %133 = arith.addf %125, %132 : vector<4x48xf32>
      %c1_i32_156 = arith.constant 1 : i32
      %134 = arith.addi %arg30, %c1_i32_156 : i32
      %135 = arith.index_cast %134 : i32 to index
      %c1_157 = arith.constant 1 : index
      %c0_158 = arith.constant 0 : index
      %136 = vector.load %arg28[%135, %c1_157, %c0_158] : memref<6x6x24xf32, #tpu.memory_space<vmem>>, vector<1x4x24xf32>
      %137 = vector.shape_cast %136 : vector<1x4x24xf32> to vector<4x24xf32>
      %c4_159 = arith.constant 4 : index
      %c0_160 = arith.constant 0 : index
      %c0_161 = arith.constant 0 : index
      %138 = vector.load %arg12[%c4_159, %c0_160, %c0_161] : memref<9x24x48xf32, #tpu.memory_space<vmem>>, vector<1x24x48xf32>
      %139 = vector.shape_cast %138 : vector<1x24x48xf32> to vector<24x48xf32>
      %cst_162 = arith.constant dense<0.000000e+00> : vector<4x48xf32>
      %140 = tpu.matmul %137, %139, %cst_162 {dimension_numbers = #tpu.dot_dimension_numbers<[1], [0], [0], [1], [0, 0, 1, 1], [], []>} : vector<4x24xf32>, vector<24x48xf32>, vector<4x48xf32> -> vector<4x48xf32>
      %141 = arith.addf %133, %140 : vector<4x48xf32>
      %c1_i32_163 = arith.constant 1 : i32
      %142 = arith.addi %arg30, %c1_i32_163 : i32
      %143 = arith.index_cast %142 : i32 to index
      %c2_164 = arith.constant 2 : index
      %c0_165 = arith.constant 0 : index
      %144 = vector.load %arg28[%143, %c2_164, %c0_165] : memref<6x6x24xf32, #tpu.memory_space<vmem>>, vector<1x4x24xf32>
      %145 = vector.shape_cast %144 : vector<1x4x24xf32> to vector<4x24xf32>
      %c5_166 = arith.constant 5 : index
      %c0_167 = arith.constant 0 : index
      %c0_168 = arith.constant 0 : index
      %146 = vector.load %arg12[%c5_166, %c0_167, %c0_168] : memref<9x24x48xf32, #tpu.memory_space<vmem>>, vector<1x24x48xf32>
      %147 = vector.shape_cast %146 : vector<1x24x48xf32> to vector<24x48xf32>
      %cst_169 = arith.constant dense<0.000000e+00> : vector<4x48xf32>
      %148 = tpu.matmul %145, %147, %cst_169 {dimension_numbers = #tpu.dot_dimension_numbers<[1], [0], [0], [1], [0, 0, 1, 1], [], []>} : vector<4x24xf32>, vector<24x48xf32>, vector<4x48xf32> -> vector<4x48xf32>
      %149 = arith.addf %141, %148 : vector<4x48xf32>
      %c2_i32 = arith.constant 2 : i32
      %150 = arith.addi %arg30, %c2_i32 : i32
      %151 = arith.index_cast %150 : i32 to index
      %c0_170 = arith.constant 0 : index
      %c0_171 = arith.constant 0 : index
      %152 = vector.load %arg28[%151, %c0_170, %c0_171] : memref<6x6x24xf32, #tpu.memory_space<vmem>>, vector<1x4x24xf32>
      %153 = vector.shape_cast %152 : vector<1x4x24xf32> to vector<4x24xf32>
      %c6_172 = arith.constant 6 : index
      %c0_173 = arith.constant 0 : index
      %c0_174 = arith.constant 0 : index
      %154 = vector.load %arg12[%c6_172, %c0_173, %c0_174] : memref<9x24x48xf32, #tpu.memory_space<vmem>>, vector<1x24x48xf32>
      %155 = vector.shape_cast %154 : vector<1x24x48xf32> to vector<24x48xf32>
      %cst_175 = arith.constant dense<0.000000e+00> : vector<4x48xf32>
      %156 = tpu.matmul %153, %155, %cst_175 {dimension_numbers = #tpu.dot_dimension_numbers<[1], [0], [0], [1], [0, 0, 1, 1], [], []>} : vector<4x24xf32>, vector<24x48xf32>, vector<4x48xf32> -> vector<4x48xf32>
      %157 = arith.addf %149, %156 : vector<4x48xf32>
      %c2_i32_176 = arith.constant 2 : i32
      %158 = arith.addi %arg30, %c2_i32_176 : i32
      %159 = arith.index_cast %158 : i32 to index
      %c1_177 = arith.constant 1 : index
      %c0_178 = arith.constant 0 : index
      %160 = vector.load %arg28[%159, %c1_177, %c0_178] : memref<6x6x24xf32, #tpu.memory_space<vmem>>, vector<1x4x24xf32>
      %161 = vector.shape_cast %160 : vector<1x4x24xf32> to vector<4x24xf32>
      %c7_179 = arith.constant 7 : index
      %c0_180 = arith.constant 0 : index
      %c0_181 = arith.constant 0 : index
      %162 = vector.load %arg12[%c7_179, %c0_180, %c0_181] : memref<9x24x48xf32, #tpu.memory_space<vmem>>, vector<1x24x48xf32>
      %163 = vector.shape_cast %162 : vector<1x24x48xf32> to vector<24x48xf32>
      %cst_182 = arith.constant dense<0.000000e+00> : vector<4x48xf32>
      %164 = tpu.matmul %161, %163, %cst_182 {dimension_numbers = #tpu.dot_dimension_numbers<[1], [0], [0], [1], [0, 0, 1, 1], [], []>} : vector<4x24xf32>, vector<24x48xf32>, vector<4x48xf32> -> vector<4x48xf32>
      %165 = arith.addf %157, %164 : vector<4x48xf32>
      %c2_i32_183 = arith.constant 2 : i32
      %166 = arith.addi %arg30, %c2_i32_183 : i32
      %167 = arith.index_cast %166 : i32 to index
      %c2_184 = arith.constant 2 : index
      %c0_185 = arith.constant 0 : index
      %168 = vector.load %arg28[%167, %c2_184, %c0_185] : memref<6x6x24xf32, #tpu.memory_space<vmem>>, vector<1x4x24xf32>
      %169 = vector.shape_cast %168 : vector<1x4x24xf32> to vector<4x24xf32>
      %c8_186 = arith.constant 8 : index
      %c0_187 = arith.constant 0 : index
      %c0_188 = arith.constant 0 : index
      %170 = vector.load %arg12[%c8_186, %c0_187, %c0_188] : memref<9x24x48xf32, #tpu.memory_space<vmem>>, vector<1x24x48xf32>
      %171 = vector.shape_cast %170 : vector<1x24x48xf32> to vector<24x48xf32>
      %cst_189 = arith.constant dense<0.000000e+00> : vector<4x48xf32>
      %172 = tpu.matmul %169, %171, %cst_189 {dimension_numbers = #tpu.dot_dimension_numbers<[1], [0], [0], [1], [0, 0, 1, 1], [], []>} : vector<4x24xf32>, vector<24x48xf32>, vector<4x48xf32> -> vector<4x48xf32>
      %173 = arith.addf %165, %172 : vector<4x48xf32>
      %174 = vector.broadcast %20 : vector<1x48xf32> to vector<4x48xf32>
      %175 = arith.addf %173, %174 : vector<4x48xf32>
      %176 = arith.index_cast %arg30 : i32 to index
      %c0_190 = arith.constant 0 : index
      %c0_191 = arith.constant 0 : index
      %177 = vector.load %arg27[%176, %c0_190, %c0_191] : memref<4x4x48xf32, #tpu.memory_space<vmem>>, vector<1x4x48xf32>
      %178 = vector.shape_cast %177 : vector<1x4x48xf32> to vector<4x48xf32>
      %179 = arith.addf %175, %178 : vector<4x48xf32>
      %c0_i32_192 = arith.constant 0 : i32
      %180 = arith.addi %arg30, %c0_i32_192 : i32
      %181 = arith.index_cast %180 : i32 to index
      %c0_193 = arith.constant 0 : index
      %c0_194 = arith.constant 0 : index
      %182 = vector.load %arg27[%181, %c0_193, %c0_194] : memref<4x4x48xf32, #tpu.memory_space<vmem>>, vector<1x4x48xf32>
      %183 = vector.shape_cast %182 : vector<1x4x48xf32> to vector<4x48xf32>
      %184 = vector.shape_cast %179 : vector<4x48xf32> to vector<1x4x48xf32>
      tpu.vector_store %arg27[%181, %c0_193, %c0_194], %184 {strides = array<i32>} : memref<4x4x48xf32, #tpu.memory_space<vmem>>, vector<1x4x48xf32>,
    }
    %c4_i32_48 = arith.constant 4 : i32
    %c0_49 = arith.constant 0 : index
    %c0_50 = arith.constant 0 : index
    %22 = vector.load %arg15[%c0_49, %c0_50] : memref<1x64xf32, #tpu.memory_space<vmem>>, vector<1x64xf32>
    %c0_i32_51 = arith.constant 0 : i32
    %c3_i32 = arith.constant 3 : i32
    %23 = arith.addi %c0_i32_51, %c3_i32 : i32
    %c1_i32_52 = arith.constant 1 : i32
    scf.for %arg30 = %c0_i32_51 to %23 step %c1_i32_52  : i32 {
      %cst_127 = arith.constant 0.000000e+00 : f32
      %101 = vector.broadcast %cst_127 : f32 to vector<3x64xf32>
      %c0_i32_128 = arith.constant 0 : i32
      %102 = arith.addi %arg30, %c0_i32_128 : i32
      %103 = arith.index_cast %102 : i32 to index
      %c0_129 = arith.constant 0 : index
      %c0_130 = arith.constant 0 : index
      %104 = vector.load %arg27[%103, %c0_129, %c0_130] : memref<4x4x48xf32, #tpu.memory_space<vmem>>, vector<1x3x48xf32>
      %105 = vector.shape_cast %104 : vector<1x3x48xf32> to vector<3x48xf32>
      %c0_131 = arith.constant 0 : index
      %c0_132 = arith.constant 0 : index
      %c0_133 = arith.constant 0 : index
      %106 = vector.load %arg14[%c0_131, %c0_132, %c0_133] : memref<4x48x64xf32, #tpu.memory_space<vmem>>, vector<1x48x64xf32>
      %107 = vector.shape_cast %106 : vector<1x48x64xf32> to vector<48x64xf32>
      %cst_134 = arith.constant dense<0.000000e+00> : vector<3x64xf32>
      %108 = tpu.matmul %105, %107, %cst_134 {dimension_numbers = #tpu.dot_dimension_numbers<[1], [0], [0], [1], [0, 0, 1, 1], [], []>} : vector<3x48xf32>, vector<48x64xf32>, vector<3x64xf32> -> vector<3x64xf32>
      %109 = arith.addf %101, %108 : vector<3x64xf32>
      %c0_i32_135 = arith.constant 0 : i32
      %110 = arith.addi %arg30, %c0_i32_135 : i32
      %111 = arith.index_cast %110 : i32 to index
      %c1_136 = arith.constant 1 : index
      %c0_137 = arith.constant 0 : index
      %112 = vector.load %arg27[%111, %c1_136, %c0_137] : memref<4x4x48xf32, #tpu.memory_space<vmem>>, vector<1x3x48xf32>
      %113 = vector.shape_cast %112 : vector<1x3x48xf32> to vector<3x48xf32>
      %c1_138 = arith.constant 1 : index
      %c0_139 = arith.constant 0 : index
      %c0_140 = arith.constant 0 : index
      %114 = vector.load %arg14[%c1_138, %c0_139, %c0_140] : memref<4x48x64xf32, #tpu.memory_space<vmem>>, vector<1x48x64xf32>
      %115 = vector.shape_cast %114 : vector<1x48x64xf32> to vector<48x64xf32>
      %cst_141 = arith.constant dense<0.000000e+00> : vector<3x64xf32>
      %116 = tpu.matmul %113, %115, %cst_141 {dimension_numbers = #tpu.dot_dimension_numbers<[1], [0], [0], [1], [0, 0, 1, 1], [], []>} : vector<3x48xf32>, vector<48x64xf32>, vector<3x64xf32> -> vector<3x64xf32>
      %117 = arith.addf %109, %116 : vector<3x64xf32>
      %c1_i32_142 = arith.constant 1 : i32
      %118 = arith.addi %arg30, %c1_i32_142 : i32
      %119 = arith.index_cast %118 : i32 to index
      %c0_143 = arith.constant 0 : index
      %c0_144 = arith.constant 0 : index
      %120 = vector.load %arg27[%119, %c0_143, %c0_144] : memref<4x4x48xf32, #tpu.memory_space<vmem>>, vector<1x3x48xf32>
      %121 = vector.shape_cast %120 : vector<1x3x48xf32> to vector<3x48xf32>
      %c2_145 = arith.constant 2 : index
      %c0_146 = arith.constant 0 : index
      %c0_147 = arith.constant 0 : index
      %122 = vector.load %arg14[%c2_145, %c0_146, %c0_147] : memref<4x48x64xf32, #tpu.memory_space<vmem>>, vector<1x48x64xf32>
      %123 = vector.shape_cast %122 : vector<1x48x64xf32> to vector<48x64xf32>
      %cst_148 = arith.constant dense<0.000000e+00> : vector<3x64xf32>
      %124 = tpu.matmul %121, %123, %cst_148 {dimension_numbers = #tpu.dot_dimension_numbers<[1], [0], [0], [1], [0, 0, 1, 1], [], []>} : vector<3x48xf32>, vector<48x64xf32>, vector<3x64xf32> -> vector<3x64xf32>
      %125 = arith.addf %117, %124 : vector<3x64xf32>
      %c1_i32_149 = arith.constant 1 : i32
      %126 = arith.addi %arg30, %c1_i32_149 : i32
      %127 = arith.index_cast %126 : i32 to index
      %c1_150 = arith.constant 1 : index
      %c0_151 = arith.constant 0 : index
      %128 = vector.load %arg27[%127, %c1_150, %c0_151] : memref<4x4x48xf32, #tpu.memory_space<vmem>>, vector<1x3x48xf32>
      %129 = vector.shape_cast %128 : vector<1x3x48xf32> to vector<3x48xf32>
      %c3_152 = arith.constant 3 : index
      %c0_153 = arith.constant 0 : index
      %c0_154 = arith.constant 0 : index
      %130 = vector.load %arg14[%c3_152, %c0_153, %c0_154] : memref<4x48x64xf32, #tpu.memory_space<vmem>>, vector<1x48x64xf32>
      %131 = vector.shape_cast %130 : vector<1x48x64xf32> to vector<48x64xf32>
      %cst_155 = arith.constant dense<0.000000e+00> : vector<3x64xf32>
      %132 = tpu.matmul %129, %131, %cst_155 {dimension_numbers = #tpu.dot_dimension_numbers<[1], [0], [0], [1], [0, 0, 1, 1], [], []>} : vector<3x48xf32>, vector<48x64xf32>, vector<3x64xf32> -> vector<3x64xf32>
      %133 = arith.addf %125, %132 : vector<3x64xf32>
      %134 = vector.broadcast %22 : vector<1x64xf32> to vector<3x64xf32>
      %135 = arith.addf %133, %134 : vector<3x64xf32>
      %cst_156 = arith.constant 0.000000e+00 : f32
      %136 = vector.broadcast %cst_156 : f32 to vector<3x64xf32>
      %137 = arith.cmpf ogt, %135, %136 : vector<3x64xf32>
      %138 = vector.broadcast %2 : vector<1x1xf32> to vector<3x64xf32>
      %139 = arith.mulf %138, %135 : vector<3x64xf32>
      %140 = arith.select %137, %135, %139 : vector<3x64xi1>, vector<3x64xf32>
      %c0_i32_157 = arith.constant 0 : i32
      %141 = arith.addi %arg30, %c0_i32_157 : i32
      %142 = arith.index_cast %141 : i32 to index
      %c0_158 = arith.constant 0 : index
      %c0_159 = arith.constant 0 : index
      %143 = vector.load %arg29[%142, %c0_158, %c0_159] : memref<3x3x64xf32, #tpu.memory_space<vmem>>, vector<1x3x64xf32>
      %144 = vector.shape_cast %143 : vector<1x3x64xf32> to vector<3x64xf32>
      %145 = vector.shape_cast %140 : vector<3x64xf32> to vector<1x3x64xf32>
      tpu.vector_store %arg29[%142, %c0_158, %c0_159], %145 {strides = array<i32>} : memref<3x3x64xf32, #tpu.memory_space<vmem>>, vector<1x3x64xf32>,
    }
    %c3_i32_53 = arith.constant 3 : i32
    %c0_54 = arith.constant 0 : index
    %c0_55 = arith.constant 0 : index
    %24 = vector.load %arg17[%c0_54, %c0_55] : memref<1x128xf32, #tpu.memory_space<vmem>>, vector<1x128xf32>
    %c0_56 = arith.constant 0 : index
    %c0_57 = arith.constant 0 : index
    %c0_58 = arith.constant 0 : index
    %25 = vector.load %arg29[%c0_56, %c0_57, %c0_58] : memref<3x3x64xf32, #tpu.memory_space<vmem>>, vector<1x1x64xf32>
    %26 = vector.shape_cast %25 : vector<1x1x64xf32> to vector<1x64xf32>
    %c0_59 = arith.constant 0 : index
    %c0_60 = arith.constant 0 : index
    %c0_61 = arith.constant 0 : index
    %27 = vector.load %arg16[%c0_59, %c0_60, %c0_61] : memref<9x64x128xf32, #tpu.memory_space<vmem>>, vector<1x64x128xf32>
    %28 = vector.shape_cast %27 : vector<1x64x128xf32> to vector<64x128xf32>
    %cst_62 = arith.constant dense<0.000000e+00> : vector<1x128xf32>
    %29 = tpu.matmul %26, %28, %cst_62 {dimension_numbers = #tpu.dot_dimension_numbers<[1], [0], [0], [1], [0, 0, 1, 1], [], []>} : vector<1x64xf32>, vector<64x128xf32>, vector<1x128xf32> -> vector<1x128xf32>
    %30 = arith.addf %24, %29 : vector<1x128xf32>
    %c0_63 = arith.constant 0 : index
    %c1_64 = arith.constant 1 : index
    %c0_65 = arith.constant 0 : index
    %31 = vector.load %arg29[%c0_63, %c1_64, %c0_65] : memref<3x3x64xf32, #tpu.memory_space<vmem>>, vector<1x1x64xf32>
    %32 = vector.shape_cast %31 : vector<1x1x64xf32> to vector<1x64xf32>
    %c1_66 = arith.constant 1 : index
    %c0_67 = arith.constant 0 : index
    %c0_68 = arith.constant 0 : index
    %33 = vector.load %arg16[%c1_66, %c0_67, %c0_68] : memref<9x64x128xf32, #tpu.memory_space<vmem>>, vector<1x64x128xf32>
    %34 = vector.shape_cast %33 : vector<1x64x128xf32> to vector<64x128xf32>
    %cst_69 = arith.constant dense<0.000000e+00> : vector<1x128xf32>
    %35 = tpu.matmul %32, %34, %cst_69 {dimension_numbers = #tpu.dot_dimension_numbers<[1], [0], [0], [1], [0, 0, 1, 1], [], []>} : vector<1x64xf32>, vector<64x128xf32>, vector<1x128xf32> -> vector<1x128xf32>
    %36 = arith.addf %30, %35 : vector<1x128xf32>
    %c0_70 = arith.constant 0 : index
    %c2_71 = arith.constant 2 : index
    %c0_72 = arith.constant 0 : index
    %37 = vector.load %arg29[%c0_70, %c2_71, %c0_72] : memref<3x3x64xf32, #tpu.memory_space<vmem>>, vector<1x1x64xf32>
    %38 = vector.shape_cast %37 : vector<1x1x64xf32> to vector<1x64xf32>
    %c2_73 = arith.constant 2 : index
    %c0_74 = arith.constant 0 : index
    %c0_75 = arith.constant 0 : index
    %39 = vector.load %arg16[%c2_73, %c0_74, %c0_75] : memref<9x64x128xf32, #tpu.memory_space<vmem>>, vector<1x64x128xf32>
    %40 = vector.shape_cast %39 : vector<1x64x128xf32> to vector<64x128xf32>
    %cst_76 = arith.constant dense<0.000000e+00> : vector<1x128xf32>
    %41 = tpu.matmul %38, %40, %cst_76 {dimension_numbers = #tpu.dot_dimension_numbers<[1], [0], [0], [1], [0, 0, 1, 1], [], []>} : vector<1x64xf32>, vector<64x128xf32>, vector<1x128xf32> -> vector<1x128xf32>
    %42 = arith.addf %36, %41 : vector<1x128xf32>
    %c1_77 = arith.constant 1 : index
    %c0_78 = arith.constant 0 : index
    %c0_79 = arith.constant 0 : index
    %43 = vector.load %arg29[%c1_77, %c0_78, %c0_79] : memref<3x3x64xf32, #tpu.memory_space<vmem>>, vector<1x1x64xf32>
    %44 = vector.shape_cast %43 : vector<1x1x64xf32> to vector<1x64xf32>
    %c3_80 = arith.constant 3 : index
    %c0_81 = arith.constant 0 : index
    %c0_82 = arith.constant 0 : index
    %45 = vector.load %arg16[%c3_80, %c0_81, %c0_82] : memref<9x64x128xf32, #tpu.memory_space<vmem>>, vector<1x64x128xf32>
    %46 = vector.shape_cast %45 : vector<1x64x128xf32> to vector<64x128xf32>
    %cst_83 = arith.constant dense<0.000000e+00> : vector<1x128xf32>
    %47 = tpu.matmul %44, %46, %cst_83 {dimension_numbers = #tpu.dot_dimension_numbers<[1], [0], [0], [1], [0, 0, 1, 1], [], []>} : vector<1x64xf32>, vector<64x128xf32>, vector<1x128xf32> -> vector<1x128xf32>
    %48 = arith.addf %42, %47 : vector<1x128xf32>
    %c1_84 = arith.constant 1 : index
    %c1_85 = arith.constant 1 : index
    %c0_86 = arith.constant 0 : index
    %49 = vector.load %arg29[%c1_84, %c1_85, %c0_86] : memref<3x3x64xf32, #tpu.memory_space<vmem>>, vector<1x1x64xf32>
    %50 = vector.shape_cast %49 : vector<1x1x64xf32> to vector<1x64xf32>
    %c4 = arith.constant 4 : index
    %c0_87 = arith.constant 0 : index
    %c0_88 = arith.constant 0 : index
    %51 = vector.load %arg16[%c4, %c0_87, %c0_88] : memref<9x64x128xf32, #tpu.memory_space<vmem>>, vector<1x64x128xf32>
    %52 = vector.shape_cast %51 : vector<1x64x128xf32> to vector<64x128xf32>
    %cst_89 = arith.constant dense<0.000000e+00> : vector<1x128xf32>
    %53 = tpu.matmul %50, %52, %cst_89 {dimension_numbers = #tpu.dot_dimension_numbers<[1], [0], [0], [1], [0, 0, 1, 1], [], []>} : vector<1x64xf32>, vector<64x128xf32>, vector<1x128xf32> -> vector<1x128xf32>
    %54 = arith.addf %48, %53 : vector<1x128xf32>
    %c1_90 = arith.constant 1 : index
    %c2_91 = arith.constant 2 : index
    %c0_92 = arith.constant 0 : index
    %55 = vector.load %arg29[%c1_90, %c2_91, %c0_92] : memref<3x3x64xf32, #tpu.memory_space<vmem>>, vector<1x1x64xf32>
    %56 = vector.shape_cast %55 : vector<1x1x64xf32> to vector<1x64xf32>
    %c5 = arith.constant 5 : index
    %c0_93 = arith.constant 0 : index
    %c0_94 = arith.constant 0 : index
    %57 = vector.load %arg16[%c5, %c0_93, %c0_94] : memref<9x64x128xf32, #tpu.memory_space<vmem>>, vector<1x64x128xf32>
    %58 = vector.shape_cast %57 : vector<1x64x128xf32> to vector<64x128xf32>
    %cst_95 = arith.constant dense<0.000000e+00> : vector<1x128xf32>
    %59 = tpu.matmul %56, %58, %cst_95 {dimension_numbers = #tpu.dot_dimension_numbers<[1], [0], [0], [1], [0, 0, 1, 1], [], []>} : vector<1x64xf32>, vector<64x128xf32>, vector<1x128xf32> -> vector<1x128xf32>
    %60 = arith.addf %54, %59 : vector<1x128xf32>
    %c2_96 = arith.constant 2 : index
    %c0_97 = arith.constant 0 : index
    %c0_98 = arith.constant 0 : index
    %61 = vector.load %arg29[%c2_96, %c0_97, %c0_98] : memref<3x3x64xf32, #tpu.memory_space<vmem>>, vector<1x1x64xf32>
    %62 = vector.shape_cast %61 : vector<1x1x64xf32> to vector<1x64xf32>
    %c6 = arith.constant 6 : index
    %c0_99 = arith.constant 0 : index
    %c0_100 = arith.constant 0 : index
    %63 = vector.load %arg16[%c6, %c0_99, %c0_100] : memref<9x64x128xf32, #tpu.memory_space<vmem>>, vector<1x64x128xf32>
    %64 = vector.shape_cast %63 : vector<1x64x128xf32> to vector<64x128xf32>
    %cst_101 = arith.constant dense<0.000000e+00> : vector<1x128xf32>
    %65 = tpu.matmul %62, %64, %cst_101 {dimension_numbers = #tpu.dot_dimension_numbers<[1], [0], [0], [1], [0, 0, 1, 1], [], []>} : vector<1x64xf32>, vector<64x128xf32>, vector<1x128xf32> -> vector<1x128xf32>
    %66 = arith.addf %60, %65 : vector<1x128xf32>
    %c2_102 = arith.constant 2 : index
    %c1_103 = arith.constant 1 : index
    %c0_104 = arith.constant 0 : index
    %67 = vector.load %arg29[%c2_102, %c1_103, %c0_104] : memref<3x3x64xf32, #tpu.memory_space<vmem>>, vector<1x1x64xf32>
    %68 = vector.shape_cast %67 : vector<1x1x64xf32> to vector<1x64xf32>
    %c7 = arith.constant 7 : index
    %c0_105 = arith.constant 0 : index
    %c0_106 = arith.constant 0 : index
    %69 = vector.load %arg16[%c7, %c0_105, %c0_106] : memref<9x64x128xf32, #tpu.memory_space<vmem>>, vector<1x64x128xf32>
    %70 = vector.shape_cast %69 : vector<1x64x128xf32> to vector<64x128xf32>
    %cst_107 = arith.constant dense<0.000000e+00> : vector<1x128xf32>
    %71 = tpu.matmul %68, %70, %cst_107 {dimension_numbers = #tpu.dot_dimension_numbers<[1], [0], [0], [1], [0, 0, 1, 1], [], []>} : vector<1x64xf32>, vector<64x128xf32>, vector<1x128xf32> -> vector<1x128xf32>
    %72 = arith.addf %66, %71 : vector<1x128xf32>
    %c2_108 = arith.constant 2 : index
    %c2_109 = arith.constant 2 : index
    %c0_110 = arith.constant 0 : index
    %73 = vector.load %arg29[%c2_108, %c2_109, %c0_110] : memref<3x3x64xf32, #tpu.memory_space<vmem>>, vector<1x1x64xf32>
    %74 = vector.shape_cast %73 : vector<1x1x64xf32> to vector<1x64xf32>
    %c8 = arith.constant 8 : index
    %c0_111 = arith.constant 0 : index
    %c0_112 = arith.constant 0 : index
    %75 = vector.load %arg16[%c8, %c0_111, %c0_112] : memref<9x64x128xf32, #tpu.memory_space<vmem>>, vector<1x64x128xf32>
    %76 = vector.shape_cast %75 : vector<1x64x128xf32> to vector<64x128xf32>
    %cst_113 = arith.constant dense<0.000000e+00> : vector<1x128xf32>
    %77 = tpu.matmul %74, %76, %cst_113 {dimension_numbers = #tpu.dot_dimension_numbers<[1], [0], [0], [1], [0, 0, 1, 1], [], []>} : vector<1x64xf32>, vector<64x128xf32>, vector<1x128xf32> -> vector<1x128xf32>
    %78 = arith.addf %72, %77 : vector<1x128xf32>
    %cst_114 = arith.constant 0.000000e+00 : f32
    %79 = vector.broadcast %cst_114 : f32 to vector<1x128xf32>
    %80 = arith.cmpf ogt, %78, %79 : vector<1x128xf32>
    %81 = vector.broadcast %3 : vector<1x1xf32> to vector<1x128xf32>
    %82 = arith.mulf %81, %78 : vector<1x128xf32>
    %83 = arith.select %80, %78, %82 : vector<1x128xi1>, vector<1x128xf32>
    %c0_115 = arith.constant 0 : index
    %c0_116 = arith.constant 0 : index
    %84 = vector.load %arg18[%c0_115, %c0_116] : memref<128x5xf32, #tpu.memory_space<vmem>>, vector<128x5xf32>
    %cst_117 = arith.constant dense<0.000000e+00> : vector<1x5xf32>
    %85 = tpu.matmul %83, %84, %cst_117 {dimension_numbers = #tpu.dot_dimension_numbers<[1], [0], [0], [1], [0, 0, 1, 1], [], []>} : vector<1x128xf32>, vector<128x5xf32>, vector<1x5xf32> -> vector<1x5xf32>
    %c0_118 = arith.constant 0 : index
    %c0_119 = arith.constant 0 : index
    %86 = vector.load %arg19[%c0_118, %c0_119] : memref<1x5xf32, #tpu.memory_space<vmem>>, vector<1x5xf32>
    %87 = arith.addf %85, %86 : vector<1x5xf32>
    %88 = vector.extract_strided_slice %87 {offsets = [0, 0], sizes = [1, 1], strides = [1, 1]} : vector<1x5xf32> to vector<1x1xf32>
    %89 = arith.negf %88 : vector<1x1xf32>
    %90 = math.exp %89 : vector<1x1xf32>
    %cst_120 = arith.constant 1.000000e+00 : f32
    %91 = vector.broadcast %cst_120 : f32 to vector<1x1xf32>
    %92 = arith.addf %91, %90 : vector<1x1xf32>
    %93 = arith.divf %91, %92 : vector<1x1xf32>
    %c0_121 = arith.constant 0 : index
    %c0_122 = arith.constant 0 : index
    %c0_123 = arith.constant 0 : index
    %94 = vector.load %arg21[%c0_121, %c0_122, %c0_123] : memref<1x1x1xf32, #tpu.memory_space<vmem>>, vector<1x1x1xf32>
    %95 = vector.shape_cast %94 : vector<1x1x1xf32> to vector<1x1xf32>
    %96 = vector.shape_cast %93 : vector<1x1xf32> to vector<1x1x1xf32>
    tpu.vector_store %arg21[%c0_121, %c0_122, %c0_123], %96 {strides = array<i32>} : memref<1x1x1xf32, #tpu.memory_space<vmem>>, vector<1x1x1xf32>,
    %97 = vector.extract_strided_slice %87 {offsets = [0, 1], sizes = [1, 4], strides = [1, 1]} : vector<1x5xf32> to vector<1x4xf32>
    %c0_124 = arith.constant 0 : index
    %c0_125 = arith.constant 0 : index
    %c0_126 = arith.constant 0 : index
    %98 = vector.load %arg22[%c0_124, %c0_125, %c0_126] : memref<1x1x4xf32, #tpu.memory_space<vmem>>, vector<1x1x4xf32>
    %99 = vector.shape_cast %98 : vector<1x1x4xf32> to vector<1x4xf32>
    %100 = vector.shape_cast %97 : vector<1x4xf32> to vector<1x1x4xf32>
    tpu.vector_store %arg22[%c0_124, %c0_125, %c0_126], %100 {strides = array<i32>} : memref<1x1x4xf32, #tpu.memory_space<vmem>>, vector<1x1x4xf32>,
    return
  }
  func.func @transform_0(%arg0: i32) -> (i32, i32, i32, i32) {
    %c0_i32 = arith.constant 0 : i32
    %c0_i32_0 = arith.constant 0 : i32
    %c0_i32_1 = arith.constant 0 : i32
    %c0_i32_2 = arith.constant 0 : i32
    return %arg0, %c0_i32, %c0_i32_0, %c0_i32_1 : i32, i32, i32, i32
  }
  func.func @transform_1(%arg0: i32) -> (i32, i32, i32) {
    %c0_i32 = arith.constant 0 : i32
    %c0_i32_0 = arith.constant 0 : i32
    %c0_i32_1 = arith.constant 0 : i32
    %c0_i32_2 = arith.constant 0 : i32
    return %c0_i32, %c0_i32_0, %c0_i32_1 : i32, i32, i32
  }
  func.func @transform_2(%arg0: i32) -> (i32, i32) {
    %c0_i32 = arith.constant 0 : i32
    %c0_i32_0 = arith.constant 0 : i32
    %c0_i32_1 = arith.constant 0 : i32
    return %c0_i32, %c0_i32_0 : i32, i32
  }
  func.func @transform_3(%arg0: i32) -> (i32, i32, i32) {
    %c0_i32 = arith.constant 0 : i32
    %c0_i32_0 = arith.constant 0 : i32
    %c0_i32_1 = arith.constant 0 : i32
    %c0_i32_2 = arith.constant 0 : i32
    return %c0_i32, %c0_i32_0, %c0_i32_1 : i32, i32, i32
  }
  func.func @transform_4(%arg0: i32) -> (i32, i32) {
    %c0_i32 = arith.constant 0 : i32
    %c0_i32_0 = arith.constant 0 : i32
    %c0_i32_1 = arith.constant 0 : i32
    return %c0_i32, %c0_i32_0 : i32, i32
  }
  func.func @transform_5(%arg0: i32) -> (i32, i32, i32) {
    %c0_i32 = arith.constant 0 : i32
    %c0_i32_0 = arith.constant 0 : i32
    %c0_i32_1 = arith.constant 0 : i32
    %c0_i32_2 = arith.constant 0 : i32
    return %c0_i32, %c0_i32_0, %c0_i32_1 : i32, i32, i32
  }
  func.func @transform_6(%arg0: i32) -> (i32, i32) {
    %c0_i32 = arith.constant 0 : i32
    %c0_i32_0 = arith.constant 0 : i32
    %c0_i32_1 = arith.constant 0 : i32
    return %c0_i32, %c0_i32_0 : i32, i32
  }
  func.func @transform_7(%arg0: i32) -> (i32, i32, i32) {
    %c0_i32 = arith.constant 0 : i32
    %c0_i32_0 = arith.constant 0 : i32
    %c0_i32_1 = arith.constant 0 : i32
    %c0_i32_2 = arith.constant 0 : i32
    return %c0_i32, %c0_i32_0, %c0_i32_1 : i32, i32, i32
  }
  func.func @transform_8(%arg0: i32) -> (i32, i32) {
    %c0_i32 = arith.constant 0 : i32
    %c0_i32_0 = arith.constant 0 : i32
    %c0_i32_1 = arith.constant 0 : i32
    return %c0_i32, %c0_i32_0 : i32, i32
  }
  func.func @transform_9(%arg0: i32) -> (i32, i32, i32) {
    %c0_i32 = arith.constant 0 : i32
    %c0_i32_0 = arith.constant 0 : i32
    %c0_i32_1 = arith.constant 0 : i32
    %c0_i32_2 = arith.constant 0 : i32
    return %c0_i32, %c0_i32_0, %c0_i32_1 : i32, i32, i32
  }
  func.func @transform_10(%arg0: i32) -> (i32, i32) {
    %c0_i32 = arith.constant 0 : i32
    %c0_i32_0 = arith.constant 0 : i32
    %c0_i32_1 = arith.constant 0 : i32
    return %c0_i32, %c0_i32_0 : i32, i32
  }
  func.func @transform_11(%arg0: i32) -> (i32, i32, i32) {
    %c0_i32 = arith.constant 0 : i32
    %c0_i32_0 = arith.constant 0 : i32
    %c0_i32_1 = arith.constant 0 : i32
    %c0_i32_2 = arith.constant 0 : i32
    return %c0_i32, %c0_i32_0, %c0_i32_1 : i32, i32, i32
  }
  func.func @transform_12(%arg0: i32) -> (i32, i32) {
    %c0_i32 = arith.constant 0 : i32
    %c0_i32_0 = arith.constant 0 : i32
    %c0_i32_1 = arith.constant 0 : i32
    return %c0_i32, %c0_i32_0 : i32, i32
  }
  func.func @transform_13(%arg0: i32) -> (i32, i32, i32) {
    %c0_i32 = arith.constant 0 : i32
    %c0_i32_0 = arith.constant 0 : i32
    %c0_i32_1 = arith.constant 0 : i32
    %c0_i32_2 = arith.constant 0 : i32
    return %c0_i32, %c0_i32_0, %c0_i32_1 : i32, i32, i32
  }
  func.func @transform_14(%arg0: i32) -> (i32, i32) {
    %c0_i32 = arith.constant 0 : i32
    %c0_i32_0 = arith.constant 0 : i32
    %c0_i32_1 = arith.constant 0 : i32
    return %c0_i32, %c0_i32_0 : i32, i32
  }
  func.func @transform_15(%arg0: i32) -> (i32, i32, i32) {
    %c0_i32 = arith.constant 0 : i32
    %c0_i32_0 = arith.constant 0 : i32
    %c0_i32_1 = arith.constant 0 : i32
    %c0_i32_2 = arith.constant 0 : i32
    return %c0_i32, %c0_i32_0, %c0_i32_1 : i32, i32, i32
  }
  func.func @transform_16(%arg0: i32) -> (i32, i32) {
    %c0_i32 = arith.constant 0 : i32
    %c0_i32_0 = arith.constant 0 : i32
    %c0_i32_1 = arith.constant 0 : i32
    return %c0_i32, %c0_i32_0 : i32, i32
  }
  func.func @transform_17(%arg0: i32) -> (i32, i32) {
    %c0_i32 = arith.constant 0 : i32
    %c0_i32_0 = arith.constant 0 : i32
    %c0_i32_1 = arith.constant 0 : i32
    return %c0_i32, %c0_i32_0 : i32, i32
  }
  func.func @transform_18(%arg0: i32) -> (i32, i32) {
    %c0_i32 = arith.constant 0 : i32
    %c0_i32_0 = arith.constant 0 : i32
    %c0_i32_1 = arith.constant 0 : i32
    return %c0_i32, %c0_i32_0 : i32, i32
  }
  func.func @transform_19(%arg0: i32) -> (i32, i32) {
    %c0_i32 = arith.constant 0 : i32
    %c0_i32_0 = arith.constant 0 : i32
    %c0_i32_1 = arith.constant 0 : i32
    return %c0_i32, %c0_i32_0 : i32, i32
  }
  func.func @transform_20(%arg0: i32) -> (i32, i32, i32) {
    %c0_i32 = arith.constant 0 : i32
    %c0_i32_0 = arith.constant 0 : i32
    %c0_i32_1 = arith.constant 0 : i32
    return %arg0, %c0_i32, %c0_i32_0 : i32, i32, i32
  }
  func.func @transform_21(%arg0: i32) -> (i32, i32, i32) {
    %c0_i32 = arith.constant 0 : i32
    %c0_i32_0 = arith.constant 0 : i32
    %c0_i32_1 = arith.constant 0 : i32
    return %arg0, %c0_i32, %c0_i32_0 : i32, i32, i32
  }
}

</mosaic_0001>

<llo_original>
// kernel: r_net_forward.1
$region0: #{r_net_forward.1}
  #allocation0 [shape = 'u32[]', space=smem, size = 0x4, offset = 0x4, fixed_abs, tag = 'smem constant byte address 0x4 - core index']
  #allocation1 [shape = 'u32[72,128]{1,0:T(1,128)}', space=vmem, size = 0x9000, scoped, tag = 'internal scratch']
  #allocation2 [shape = 'f32[24,24,28]{2,1,0:T(8,128)}', space=vmem, size = 0x48000, scoped, tag = 'scratch operand']
  #allocation3 [shape = 'f32[11,11,28]{2,1,0:T(8,128)}', space=vmem, size = 0x16000, scoped, tag = 'scratch operand']
  #allocation4 [shape = 'f32[13,13,14]{2,1,0:T(8,128)}', space=vmem, size = 0x1a000, scoped, tag = 'scratch operand']
  #allocation5 [shape = 'f32[9,9,48]{2,1,0:T(8,128)}', space=vmem, size = 0x12000, scoped, tag = 'scratch operand']
  #allocation6 [shape = 'f32[4,4,48]{2,1,0:T(4,128)}', space=vmem, size = 0x2000, scoped, tag = 'scratch operand']
  #allocation7 [shape = 'f32[6,6,24]{2,1,0:T(8,128)}', space=vmem, size = 0x6000, scoped, tag = 'scratch operand']
  #allocation8 [shape = 'f32[3,3,64]{2,1,0:T(4,128)}', space=vmem, size = 0x1800, scoped, tag = 'scratch operand']
  %s0 = inlined_call_operand.vmem [shape: f32[2,26,26,3], index: 0, kind: input, shape index: {}]
  %s1 = inlined_call_operand.vmem [shape: f32[9,3,28], index: 1, kind: input, shape index: {}]
  %s2 = inlined_call_operand.vmem [shape: f32[1,28], index: 2, kind: input, shape index: {}]
  %s3 = inlined_call_operand.vmem [shape: f32[1,28,14], index: 3, kind: input, shape index: {}]
  %s4 = inlined_call_operand.vmem [shape: f32[1,14], index: 4, kind: input, shape index: {}]
  %s5 = inlined_call_operand.vmem [shape: f32[9,14,28], index: 5, kind: input, shape index: {}]
  %s6 = inlined_call_operand.vmem [shape: f32[1,28], index: 6, kind: input, shape index: {}]
  %s7 = inlined_call_operand.vmem [shape: f32[9,28,48], index: 7, kind: input, shape index: {}]
  %s8 = inlined_call_operand.vmem [shape: f32[1,48], index: 8, kind: input, shape index: {}]
  %s9 = inlined_call_operand.vmem [shape: f32[1,48,24], index: 9, kind: input, shape index: {}]
  %s10 = inlined_call_operand.vmem [shape: f32[1,24], index: 10, kind: input, shape index: {}]
  %s11 = inlined_call_operand.vmem [shape: f32[9,24,48], index: 11, kind: input, shape index: {}]
  %s12 = inlined_call_operand.vmem [shape: f32[1,48], index: 12, kind: input, shape index: {}]
  %s13 = inlined_call_operand.vmem [shape: f32[4,48,64], index: 13, kind: input, shape index: {}]
  %s14 = inlined_call_operand.vmem [shape: f32[1,64], index: 14, kind: input, shape index: {}]
  %s15 = inlined_call_operand.vmem [shape: f32[9,64,128], index: 15, kind: input, shape index: {}]
  %s16 = inlined_call_operand.vmem [shape: f32[1,128], index: 16, kind: input, shape index: {}]
  %s17 = inlined_call_operand.vmem [shape: f32[128,5], index: 17, kind: input, shape index: {}]
  %s18 = inlined_call_operand.vmem [shape: f32[1,5], index: 18, kind: input, shape index: {}]
  %s19 = inlined_call_operand.vmem [shape: f32[1,4], index: 19, kind: input, shape index: {}]
  %s20 = inlined_call_operand.vmem [shape: f32[2,1,1], index: 20, kind: output, shape index: {0}]
  %s21 = inlined_call_operand.hbm [shape: f32[2,1,4], index: 21, kind: output, shape index: {1}]
  %22 = xla_tuple %s20, %s21
  %s23 = sld [smem:[#allocation0]]
  $region184: #{r_net_forward.1} parent=0
    _
  %s25 = ssub.s32 1, %s23
  %s26 = scalar_select 0, %s25, %s23
  $region1: #{r_net_forward.1} parent=0
    #allocation9 [shape = 'u8[1024]{0}', space=vmem, size = 0x400, scoped, tag = 'output window, operand 1']
    #allocation10 [shape = 's32[2]{0}', space=sflag, size = 0x8, scoped, tag = 'scoped memory for r_net_forward.1']
    %27 = vsyncpa [#allocation10], 0
    %s28 = scalar_lea.sflag [#allocation10], 1
    %29 = vsyncpa %s28, 0
    loop: start=0, step=1, limit=4
    $region2: #{r_net_forward.1} parent=1 // loop_pre_header
      _
    $region3: #{r_net_forward.1} parent=1 // loop_header
      %s31 = sphi 0, %s35
      %p32 = scmp.ge.s32.totalorder %s31, 4
      %s41 = sphi 0, %s43
      %s44 = sphi 0, %s41
      %s45 = sphi 0, %s44
      %s61 = sphi 0, %s45
      %s65 = sphi 0, %s65
      %s67 = sphi 0, %s65
      %s68 = sphi 0, %s67
      %s82 = sphi 0, %s68
      %s86 = sphi 0, %s86
      %s88 = sphi 0, %s86
      %s89 = sphi 0, %s88
      %s103 = sphi 0, %s89
      %s107 = sphi 0, %s107
      %s109 = sphi 0, %s107
      %s110 = sphi 0, %s109
      %s124 = sphi 0, %s110
      %s128 = sphi 0, %s128
      %s130 = sphi 0, %s128
      %s131 = sphi 0, %s130
      %s145 = sphi 0, %s131
      %s149 = sphi 0, %s149
      %s151 = sphi 0, %s149
      %s152 = sphi 0, %s151
      %s166 = sphi 0, %s152
      %s170 = sphi 0, %s170
      %s172 = sphi 0, %s170
      %s173 = sphi 0, %s172
      %s187 = sphi 0, %s173
      %s191 = sphi 0, %s191
      %s193 = sphi 0, %s191
      %s194 = sphi 0, %s193
      %s208 = sphi 0, %s194
      %s212 = sphi 0, %s212
      %s214 = sphi 0, %s212
      %s215 = sphi 0, %s214
      %s229 = sphi 0, %s215
      %s233 = sphi 0, %s233
      %s235 = sphi 0, %s233
      %s236 = sphi 0, %s235
      %s250 = sphi 0, %s236
      %s254 = sphi 0, %s254
      %s256 = sphi 0, %s254
      %s257 = sphi 0, %s256
      %s271 = sphi 0, %s257
      %s275 = sphi 0, %s275
      %s277 = sphi 0, %s275
      %s278 = sphi 0, %s277
      %s292 = sphi 0, %s278
      %s296 = sphi 0, %s296
      %s298 = sphi 0, %s296
      %s299 = sphi 0, %s298
      %s313 = sphi 0, %s299
      %s317 = sphi 0, %s317
      %s319 = sphi 0, %s317
      %s320 = sphi 0, %s319
      %s334 = sphi 0, %s320
      %s338 = sphi 0, %s338
      %s340 = sphi 0, %s338
      %s341 = sphi 0, %s340
      %s355 = sphi 0, %s341
      %s359 = sphi 0, %s359
      %s361 = sphi 0, %s359
      %s362 = sphi 0, %s361
      %s376 = sphi 0, %s362
      %s380 = sphi 0, %s380
      %s382 = sphi 0, %s380
      %s383 = sphi 0, %s382
      %s397 = sphi 0, %s383
      %s401 = sphi 0, %s401
      %s403 = sphi 0, %s401
      %s404 = sphi 0, %s403
      %s418 = sphi 0, %s404
      %s422 = sphi 0, %s422
      %s424 = sphi 0, %s422
      %s425 = sphi 0, %s424
      %s439 = sphi 0, %s425
      %s443 = sphi 0, %s443
      %s445 = sphi 0, %s443
      %s446 = sphi 0, %s445
      %s460 = sphi 0, %s446
      %s466 = sphi 0, %s468
      %s469 = sphi 0, %s466
      %s470 = sphi 0, %s469
      %s486 = sphi 0, %s470
      %s492 = sphi 0, %s494
      %s495 = sphi 0, %s492
      %s496 = sphi 0, %s495
      %s512 = sphi 0, %s496
    $region4: #{r_net_forward.1} parent=1 // loop_header_branch
      %34 = sbr.rel (%p32) target = $region8
    $region5: #{r_net_forward.1} parent=1 // loop_body
      %s36 = ssub.s32 %s31, 1
      %s37 = ssub.s32 %s31, 2
      %s38 = sadd.s32 %s31, 1
      %s39 = ssub.s32 %s31, %s38
      %p40 = scmp.eq.s32.totalorder %s39, 0
      %s42 = sadd.s32 %s41, 1
      %s43 = scalar_select %p40, %s41, %s42
      %p46 = pneg %p40
      %p47 = scmp.eq.s32.totalorder %s31, 1
      %p48 = por %p46, %p47
      %p49 = scmp.ne.s32.totalorder %s41, %s44
      %p50 = scmp.eq.s32.totalorder %s31, 0
      %p51 = por %p49, %p50
      %p52 = scmp.ne.s32.totalorder %s41, %s44
      %p53 = scmp.eq.s32.totalorder %s36, 1
      %p54 = por %p52, %p53
      %p55 = scmp.ne.s32.totalorder %s44, %s45
      %p56 = scmp.eq.s32.totalorder %s36, 0
      %p57 = por %p55, %p56
      %p58 = scmp.ne.s32.totalorder %s44, %s45
      %p59 = scmp.eq.s32.totalorder %s37, 1
      %p60 = por %p58, %p59
      %p62 = scmp.ne.s32.totalorder %s45, %s61
      %p63 = scmp.eq.s32.totalorder %s37, 0
      %p64 = por %p62, %p63
      %s66 = sadd.s32 %s65, 1
      %p69 = scmp.eq.s32.totalorder %s31, 1
      %p70 = scmp.ne.s32.totalorder %s65, %s67
      %p71 = scmp.eq.s32.totalorder %s31, 0
      %p72 = por %p70, %p71
      %p73 = scmp.ne.s32.totalorder %s65, %s67
      %p74 = scmp.eq.s32.totalorder %s36, 1
      %p75 = por %p73, %p74
      %p76 = scmp.ne.s32.totalorder %s67, %s68
      %p77 = scmp.eq.s32.totalorder %s36, 0
      %p78 = por %p76, %p77
      %p79 = scmp.ne.s32.totalorder %s67, %s68
      %p80 = scmp.eq.s32.totalorder %s37, 1
      %p81 = por %p79, %p80
      %p83 = scmp.ne.s32.totalorder %s68, %s82
      %p84 = scmp.eq.s32.totalorder %s37, 0
      %p85 = por %p83, %p84
      %s87 = sadd.s32 %s86, 1
      %p90 = scmp.eq.s32.totalorder %s31, 1
      %p91 = scmp.ne.s32.totalorder %s86, %s88
      %p92 = scmp.eq.s32.totalorder %s31, 0
      %p93 = por %p91, %p92
      %p94 = scmp.ne.s32.totalorder %s86, %s88
      %p95 = scmp.eq.s32.totalorder %s36, 1
      %p96 = por %p94, %p95
      %p97 = scmp.ne.s32.totalorder %s88, %s89
      %p98 = scmp.eq.s32.totalorder %s36, 0
      %p99 = por %p97, %p98
      %p100 = scmp.ne.s32.totalorder %s88, %s89
      %p101 = scmp.eq.s32.totalorder %s37, 1
      %p102 = por %p100, %p101
      %p104 = scmp.ne.s32.totalorder %s89, %s103
      %p105 = scmp.eq.s32.totalorder %s37, 0
      %p106 = por %p104, %p105
      %s108 = sadd.s32 %s107, 1
      %p111 = scmp.eq.s32.totalorder %s31, 1
      %p112 = scmp.ne.s32.totalorder %s107, %s109
      %p113 = scmp.eq.s32.totalorder %s31, 0
      %p114 = por %p112, %p113
      %p115 = scmp.ne.s32.totalorder %s107, %s109
      %p116 = scmp.eq.s32.totalorder %s36, 1
      %p117 = por %p115, %p116
      %p118 = scmp.ne.s32.totalorder %s109, %s110
      %p119 = scmp.eq.s32.totalorder %s36, 0
      %p120 = por %p118, %p119
      %p121 = scmp.ne.s32.totalorder %s109, %s110
      %p122 = scmp.eq.s32.totalorder %s37, 1
      %p123 = por %p121, %p122
      %p125 = scmp.ne.s32.totalorder %s110, %s124
      %p126 = scmp.eq.s32.totalorder %s37, 0
      %p127 = por %p125, %p126
      %s129 = sadd.s32 %s128, 1
      %p132 = scmp.eq.s32.totalorder %s31, 1
      %p133 = scmp.ne.s32.totalorder %s128, %s130
      %p134 = scmp.eq.s32.totalorder %s31, 0
      %p135 = por %p133, %p134
      %p136 = scmp.ne.s32.totalorder %s128, %s130
      %p137 = scmp.eq.s32.totalorder %s36, 1
      %p138 = por %p136, %p137
      %p139 = scmp.ne.s32.totalorder %s130, %s131
      %p140 = scmp.eq.s32.totalorder %s36, 0
      %p141 = por %p139, %p140
      %p142 = scmp.ne.s32.totalorder %s130, %s131
      %p143 = scmp.eq.s32.totalorder %s37, 1
      %p144 = por %p142, %p143
      %p146 = scmp.ne.s32.totalorder %s131, %s145
      %p147 = scmp.eq.s32.totalorder %s37, 0
      %p148 = por %p146, %p147
      %s150 = sadd.s32 %s149, 1
      %p153 = scmp.eq.s32.totalorder %s31, 1
      %p154 = scmp.ne.s32.totalorder %s149, %s151
      %p155 = scmp.eq.s32.totalorder %s31, 0
      %p156 = por %p154, %p155
      %p157 = scmp.ne.s32.totalorder %s149, %s151
      %p158 = scmp.eq.s32.totalorder %s36, 1
      %p159 = por %p157, %p158
      %p160 = scmp.ne.s32.totalorder %s151, %s152
      %p161 = scmp.eq.s32.totalorder %s36, 0
      %p162 = por %p160, %p161
      %p163 = scmp.ne.s32.totalorder %s151, %s152
      %p164 = scmp.eq.s32.totalorder %s37, 1
      %p165 = por %p163, %p164
      %p167 = scmp.ne.s32.totalorder %s152, %s166
      %p168 = scmp.eq.s32.totalorder %s37, 0
      %p169 = por %p167, %p168
      %s171 = sadd.s32 %s170, 1
      %p174 = scmp.eq.s32.totalorder %s31, 1
      %p175 = scmp.ne.s32.totalorder %s170, %s172
      %p176 = scmp.eq.s32.totalorder %s31, 0
      %p177 = por %p175, %p176
      %p178 = scmp.ne.s32.totalorder %s170, %s172
      %p179 = scmp.eq.s32.totalorder %s36, 1
      %p180 = por %p178, %p179
      %p181 = scmp.ne.s32.totalorder %s172, %s173
      %p182 = scmp.eq.s32.totalorder %s36, 0
      %p183 = por %p181, %p182
      %p184 = scmp.ne.s32.totalorder %s172, %s173
      %p185 = scmp.eq.s32.totalorder %s37, 1
      %p186 = por %p184, %p185
      %p188 = scmp.ne.s32.totalorder %s173, %s187
      %p189 = scmp.eq.s32.totalorder %s37, 0
      %p190 = por %p188, %p189
      %s192 = sadd.s32 %s191, 1
      %p195 = scmp.eq.s32.totalorder %s31, 1
      %p196 = scmp.ne.s32.totalorder %s191, %s193
      %p197 = scmp.eq.s32.totalorder %s31, 0
      %p198 = por %p196, %p197
      %p199 = scmp.ne.s32.totalorder %s191, %s193
      %p200 = scmp.eq.s32.totalorder %s36, 1
      %p201 = por %p199, %p200
      %p202 = scmp.ne.s32.totalorder %s193, %s194
      %p203 = scmp.eq.s32.totalorder %s36, 0
      %p204 = por %p202, %p203
      %p205 = scmp.ne.s32.totalorder %s193, %s194
      %p206 = scmp.eq.s32.totalorder %s37, 1
      %p207 = por %p205, %p206
      %p209 = scmp.ne.s32.totalorder %s194, %s208
      %p210 = scmp.eq.s32.totalorder %s37, 0
      %p211 = por %p209, %p210
      %s213 = sadd.s32 %s212, 1
      %p216 = scmp.eq.s32.totalorder %s31, 1
      %p217 = scmp.ne.s32.totalorder %s212, %s214
      %p218 = scmp.eq.s32.totalorder %s31, 0
      %p219 = por %p217, %p218
      %p220 = scmp.ne.s32.totalorder %s212, %s214
      %p221 = scmp.eq.s32.totalorder %s36, 1
      %p222 = por %p220, %p221
      %p223 = scmp.ne.s32.totalorder %s214, %s215
      %p224 = scmp.eq.s32.totalorder %s36, 0
      %p225 = por %p223, %p224
      %p226 = scmp.ne.s32.totalorder %s214, %s215
      %p227 = scmp.eq.s32.totalorder %s37, 1
      %p228 = por %p226, %p227
      %p230 = scmp.ne.s32.totalorder %s215, %s229
      %p231 = scmp.eq.s32.totalorder %s37, 0
      %p232 = por %p230, %p231
      %s234 = sadd.s32 %s233, 1
      %p237 = scmp.eq.s32.totalorder %s31, 1
      %p238 = scmp.ne.s32.totalorder %s233, %s235
      %p239 = scmp.eq.s32.totalorder %s31, 0
      %p240 = por %p238, %p239
      %p241 = scmp.ne.s32.totalorder %s233, %s235
      %p242 = scmp.eq.s32.totalorder %s36, 1
      %p243 = por %p241, %p242
      %p244 = scmp.ne.s32.totalorder %s235, %s236
      %p245 = scmp.eq.s32.totalorder %s36, 0
      %p246 = por %p244, %p245
      %p247 = scmp.ne.s32.totalorder %s235, %s236
      %p248 = scmp.eq.s32.totalorder %s37, 1
      %p249 = por %p247, %p248
      %p251 = scmp.ne.s32.totalorder %s236, %s250
      %p252 = scmp.eq.s32.totalorder %s37, 0
      %p253 = por %p251, %p252
      %s255 = sadd.s32 %s254, 1
      %p258 = scmp.eq.s32.totalorder %s31, 1
      %p259 = scmp.ne.s32.totalorder %s254, %s256
      %p260 = scmp.eq.s32.totalorder %s31, 0
      %p261 = por %p259, %p260
      %p262 = scmp.ne.s32.totalorder %s254, %s256
      %p263 = scmp.eq.s32.totalorder %s36, 1
      %p264 = por %p262, %p263
      %p265 = scmp.ne.s32.totalorder %s256, %s257
      %p266 = scmp.eq.s32.totalorder %s36, 0
      %p267 = por %p265, %p266
      %p268 = scmp.ne.s32.totalorder %s256, %s257
      %p269 = scmp.eq.s32.totalorder %s37, 1
      %p270 = por %p268, %p269
      %p272 = scmp.ne.s32.totalorder %s257, %s271
      %p273 = scmp.eq.s32.totalorder %s37, 0
      %p274 = por %p272, %p273
      %s276 = sadd.s32 %s275, 1
      %p279 = scmp.eq.s32.totalorder %s31, 1
      %p280 = scmp.ne.s32.totalorder %s275, %s277
      %p281 = scmp.eq.s32.totalorder %s31, 0
      %p282 = por %p280, %p281
      %p283 = scmp.ne.s32.totalorder %s275, %s277
      %p284 = scmp.eq.s32.totalorder %s36, 1
      %p285 = por %p283, %p284
      %p286 = scmp.ne.s32.totalorder %s277, %s278
      %p287 = scmp.eq.s32.totalorder %s36, 0
      %p288 = por %p286, %p287
      %p289 = scmp.ne.s32.totalorder %s277, %s278
      %p290 = scmp.eq.s32.totalorder %s37, 1
      %p291 = por %p289, %p290
      %p293 = scmp.ne.s32.totalorder %s278, %s292
      %p294 = scmp.eq.s32.totalorder %s37, 0
      %p295 = por %p293, %p294
      %s297 = sadd.s32 %s296, 1
      %p300 = scmp.eq.s32.totalorder %s31, 1
      %p301 = scmp.ne.s32.totalorder %s296, %s298
      %p302 = scmp.eq.s32.totalorder %s31, 0
      %p303 = por %p301, %p302
      %p304 = scmp.ne.s32.totalorder %s296, %s298
      %p305 = scmp.eq.s32.totalorder %s36, 1
      %p306 = por %p304, %p305
      %p307 = scmp.ne.s32.totalorder %s298, %s299
      %p308 = scmp.eq.s32.totalorder %s36, 0
      %p309 = por %p307, %p308
      %p310 = scmp.ne.s32.totalorder %s298, %s299
      %p311 = scmp.eq.s32.totalorder %s37, 1
      %p312 = por %p310, %p311
      %p314 = scmp.ne.s32.totalorder %s299, %s313
      %p315 = scmp.eq.s32.totalorder %s37, 0
      %p316 = por %p314, %p315
      %s318 = sadd.s32 %s317, 1
      %p321 = scmp.eq.s32.totalorder %s31, 1
      %p322 = scmp.ne.s32.totalorder %s317, %s319
      %p323 = scmp.eq.s32.totalorder %s31, 0
      %p324 = por %p322, %p323
      %p325 = scmp.ne.s32.totalorder %s317, %s319
      %p326 = scmp.eq.s32.totalorder %s36, 1
      %p327 = por %p325, %p326
      %p328 = scmp.ne.s32.totalorder %s319, %s320
      %p329 = scmp.eq.s32.totalorder %s36, 0
      %p330 = por %p328, %p329
      %p331 = scmp.ne.s32.totalorder %s319, %s320
      %p332 = scmp.eq.s32.totalorder %s37, 1
      %p333 = por %p331, %p332
      %p335 = scmp.ne.s32.totalorder %s320, %s334
      %p336 = scmp.eq.s32.totalorder %s37, 0
      %p337 = por %p335, %p336
      %s339 = sadd.s32 %s338, 1
      %p342 = scmp.eq.s32.totalorder %s31, 1
      %p343 = scmp.ne.s32.totalorder %s338, %s340
      %p344 = scmp.eq.s32.totalorder %s31, 0
      %p345 = por %p343, %p344
      %p346 = scmp.ne.s32.totalorder %s338, %s340
      %p347 = scmp.eq.s32.totalorder %s36, 1
      %p348 = por %p346, %p347
      %p349 = scmp.ne.s32.totalorder %s340, %s341
      %p350 = scmp.eq.s32.totalorder %s36, 0
      %p351 = por %p349, %p350
      %p352 = scmp.ne.s32.totalorder %s340, %s341
      %p353 = scmp.eq.s32.totalorder %s37, 1
      %p354 = por %p352, %p353
      %p356 = scmp.ne.s32.totalorder %s341, %s355
      %p357 = scmp.eq.s32.totalorder %s37, 0
      %p358 = por %p356, %p357
      %s360 = sadd.s32 %s359, 1
      %p363 = scmp.eq.s32.totalorder %s31, 1
      %p364 = scmp.ne.s32.totalorder %s359, %s361
      %p365 = scmp.eq.s32.totalorder %s31, 0
      %p366 = por %p364, %p365
      %p367 = scmp.ne.s32.totalorder %s359, %s361
      %p368 = scmp.eq.s32.totalorder %s36, 1
      %p369 = por %p367, %p368
      %p370 = scmp.ne.s32.totalorder %s361, %s362
      %p371 = scmp.eq.s32.totalorder %s36, 0
      %p372 = por %p370, %p371
      %p373 = scmp.ne.s32.totalorder %s361, %s362
      %p374 = scmp.eq.s32.totalorder %s37, 1
      %p375 = por %p373, %p374
      %p377 = scmp.ne.s32.totalorder %s362, %s376
      %p378 = scmp.eq.s32.totalorder %s37, 0
      %p379 = por %p377, %p378
      %s381 = sadd.s32 %s380, 1
      %p384 = scmp.eq.s32.totalorder %s31, 1
      %p385 = scmp.ne.s32.totalorder %s380, %s382
      %p386 = scmp.eq.s32.totalorder %s31, 0
      %p387 = por %p385, %p386
      %p388 = scmp.ne.s32.totalorder %s380, %s382
      %p389 = scmp.eq.s32.totalorder %s36, 1
      %p390 = por %p388, %p389
      %p391 = scmp.ne.s32.totalorder %s382, %s383
      %p392 = scmp.eq.s32.totalorder %s36, 0
      %p393 = por %p391, %p392
      %p394 = scmp.ne.s32.totalorder %s382, %s383
      %p395 = scmp.eq.s32.totalorder %s37, 1
      %p396 = por %p394, %p395
      %p398 = scmp.ne.s32.totalorder %s383, %s397
      %p399 = scmp.eq.s32.totalorder %s37, 0
      %p400 = por %p398, %p399
      %s402 = sadd.s32 %s401, 1
      %p405 = scmp.eq.s32.totalorder %s31, 1
      %p406 = scmp.ne.s32.totalorder %s401, %s403
      %p407 = scmp.eq.s32.totalorder %s31, 0
      %p408 = por %p406, %p407
      %p409 = scmp.ne.s32.totalorder %s401, %s403
      %p410 = scmp.eq.s32.totalorder %s36, 1
      %p411 = por %p409, %p410
      %p412 = scmp.ne.s32.totalorder %s403, %s404
      %p413 = scmp.eq.s32.totalorder %s36, 0
      %p414 = por %p412, %p413
      %p415 = scmp.ne.s32.totalorder %s403, %s404
      %p416 = scmp.eq.s32.totalorder %s37, 1
      %p417 = por %p415, %p416
      %p419 = scmp.ne.s32.totalorder %s404, %s418
      %p420 = scmp.eq.s32.totalorder %s37, 0
      %p421 = por %p419, %p420
      %s423 = sadd.s32 %s422, 1
      %p426 = scmp.eq.s32.totalorder %s31, 1
      %p427 = scmp.ne.s32.totalorder %s422, %s424
      %p428 = scmp.eq.s32.totalorder %s31, 0
      %p429 = por %p427, %p428
      %p430 = scmp.ne.s32.totalorder %s422, %s424
      %p431 = scmp.eq.s32.totalorder %s36, 1
      %p432 = por %p430, %p431
      %p433 = scmp.ne.s32.totalorder %s424, %s425
      %p434 = scmp.eq.s32.totalorder %s36, 0
      %p435 = por %p433, %p434
      %p436 = scmp.ne.s32.totalorder %s424, %s425
      %p437 = scmp.eq.s32.totalorder %s37, 1
      %p438 = por %p436, %p437
      %p440 = scmp.ne.s32.totalorder %s425, %s439
      %p441 = scmp.eq.s32.totalorder %s37, 0
      %p442 = por %p440, %p441
      %s444 = sadd.s32 %s443, 1
      %p447 = scmp.eq.s32.totalorder %s31, 1
      %p448 = scmp.ne.s32.totalorder %s443, %s445
      %p449 = scmp.eq.s32.totalorder %s31, 0
      %p450 = por %p448, %p449
      %p451 = scmp.ne.s32.totalorder %s443, %s445
      %p452 = scmp.eq.s32.totalorder %s36, 1
      %p453 = por %p451, %p452
      %p454 = scmp.ne.s32.totalorder %s445, %s446
      %p455 = scmp.eq.s32.totalorder %s36, 0
      %p456 = por %p454, %p455
      %p457 = scmp.ne.s32.totalorder %s445, %s446
      %p458 = scmp.eq.s32.totalorder %s37, 1
      %p459 = por %p457, %p458
      %p461 = scmp.ne.s32.totalorder %s446, %s460
      %p462 = scmp.eq.s32.totalorder %s37, 0
      %p463 = por %p461, %p462
      %s464 = ssub.s32 %s31, %s38
      %p465 = scmp.eq.s32.totalorder %s464, 0
      %s467 = sadd.s32 %s466, 1
      %s468 = scalar_select %p465, %s466, %s467
      %p471 = pneg %p465
      %p472 = scmp.eq.s32.totalorder %s31, 1
      %p473 = por %p471, %p472
      %p474 = scmp.ne.s32.totalorder %s466, %s469
      %p475 = scmp.eq.s32.totalorder %s31, 0
      %p476 = por %p474, %p475
      %p477 = scmp.ne.s32.totalorder %s466, %s469
      %p478 = scmp.eq.s32.totalorder %s36, 1
      %p479 = por %p477, %p478
      %p480 = scmp.ne.s32.totalorder %s469, %s470
      %p481 = scmp.eq.s32.totalorder %s36, 0
      %p482 = por %p480, %p481
      %p483 = scmp.ne.s32.totalorder %s469, %s470
      %p484 = scmp.eq.s32.totalorder %s37, 1
      %p485 = por %p483, %p484
      %p487 = scmp.ne.s32.totalorder %s470, %s486
      %p488 = scmp.eq.s32.totalorder %s37, 0
      %p489 = por %p487, %p488
      %s490 = ssub.s32 %s31, %s38
      %p491 = scmp.eq.s32.totalorder %s490, 0
      %s493 = sadd.s32 %s492, 1
      %s494 = scalar_select %p491, %s492, %s493
      %p497 = pneg %p491
      %p498 = scmp.eq.s32.totalorder %s31, 1
      %p499 = por %p497, %p498
      %p500 = scmp.ne.s32.totalorder %s492, %s495
      %p501 = scmp.eq.s32.totalorder %s31, 0
      %p502 = por %p500, %p501
      %p503 = scmp.ne.s32.totalorder %s492, %s495
      %p504 = scmp.eq.s32.totalorder %s36, 1
      %p505 = por %p503, %p504
      %p506 = scmp.ne.s32.totalorder %s495, %s496
      %p507 = scmp.eq.s32.totalorder %s36, 0
      %p508 = por %p506, %p507
      %p509 = scmp.ne.s32.totalorder %s495, %s496
      %p510 = scmp.eq.s32.totalorder %s37, 1
      %p511 = por %p509, %p510
      %p513 = scmp.ne.s32.totalorder %s496, %s512
      %p514 = scmp.eq.s32.totalorder %s37, 0
      %p515 = por %p513, %p514
      %p516 = scmp.le.s32.totalorder 1, %s31
      %p517 = scmp.lt.s32.totalorder %s31, 3
      %p518 = pnand %p516, %p517
      %p519 = pneg %p518
      // Predicated region
      $region9: #{r_net_forward.1} parent=5 // pred_check
        _
      $region10: #{r_net_forward.1} parent=5 // pred_check_branch
        %521 = sbr.rel (%p518) target = $region12
      $region11: #{r_net_forward.1} parent=5 // pred_region
        %s522 = ssub.s32 %s31, 1
        // Predicated region
        $region13: #{r_net_forward.1} parent=11 // pred_check
          %p523 = pneg %p78
        $region14: #{r_net_forward.1} parent=11 // pred_check_branch
          %525 = sbr.rel (%p523) target = $region16
        $region15: #{r_net_forward.1} parent=11 // pred_region
          _
        $region16: #{r_net_forward.1} parent=11 // pred_fallthru
          _
        // Predicated region
        $region17: #{r_net_forward.1} parent=11 // pred_check
          %p526 = pneg %p99
        $region18: #{r_net_forward.1} parent=11 // pred_check_branch
          %528 = sbr.rel (%p526) target = $region20
        $region19: #{r_net_forward.1} parent=11 // pred_region
          _
        $region20: #{r_net_forward.1} parent=11 // pred_fallthru
          _
        // Predicated region
        $region21: #{r_net_forward.1} parent=11 // pred_check
          %p529 = pneg %p120
        $region22: #{r_net_forward.1} parent=11 // pred_check_branch
          %531 = sbr.rel (%p529) target = $region24
        $region23: #{r_net_forward.1} parent=11 // pred_region
          _
        $region24: #{r_net_forward.1} parent=11 // pred_fallthru
          _
        // Predicated region
        $region25: #{r_net_forward.1} parent=11 // pred_check
          %p532 = pneg %p141
        $region26: #{r_net_forward.1} parent=11 // pred_check_branch
          %534 = sbr.rel (%p532) target = $region28
        $region27: #{r_net_forward.1} parent=11 // pred_region
          _
        $region28: #{r_net_forward.1} parent=11 // pred_fallthru
          _
        // Predicated region
        $region29: #{r_net_forward.1} parent=11 // pred_check
          %p535 = pneg %p162
        $region30: #{r_net_forward.1} parent=11 // pred_check_branch
          %537 = sbr.rel (%p535) target = $region32
        $region31: #{r_net_forward.1} parent=11 // pred_region
          _
        $region32: #{r_net_forward.1} parent=11 // pred_fallthru
          _
        // Predicated region
        $region33: #{r_net_forward.1} parent=11 // pred_check
          %p538 = pneg %p183
        $region34: #{r_net_forward.1} parent=11 // pred_check_branch
          %540 = sbr.rel (%p538) target = $region36
        $region35: #{r_net_forward.1} parent=11 // pred_region
          _
        $region36: #{r_net_forward.1} parent=11 // pred_fallthru
          _
        // Predicated region
        $region37: #{r_net_forward.1} parent=11 // pred_check
          %p541 = pneg %p204
        $region38: #{r_net_forward.1} parent=11 // pred_check_branch
          %543 = sbr.rel (%p541) target = $region40
        $region39: #{r_net_forward.1} parent=11 // pred_region
          _
        $region40: #{r_net_forward.1} parent=11 // pred_fallthru
          _
        // Predicated region
        $region41: #{r_net_forward.1} parent=11 // pred_check
          %p544 = pneg %p225
        $region42: #{r_net_forward.1} parent=11 // pred_check_branch
          %546 = sbr.rel (%p544) target = $region44
        $region43: #{r_net_forward.1} parent=11 // pred_region
          _
        $region44: #{r_net_forward.1} parent=11 // pred_fallthru
          _
        // Predicated region
        $region45: #{r_net_forward.1} parent=11 // pred_check
          %p547 = pneg %p246
        $region46: #{r_net_forward.1} parent=11 // pred_check_branch
          %549 = sbr.rel (%p547) target = $region48
        $region47: #{r_net_forward.1} parent=11 // pred_region
          _
        $region48: #{r_net_forward.1} parent=11 // pred_fallthru
          _
        // Predicated region
        $region49: #{r_net_forward.1} parent=11 // pred_check
          %p550 = pneg %p267
        $region50: #{r_net_forward.1} parent=11 // pred_check_branch
          %552 = sbr.rel (%p550) target = $region52
        $region51: #{r_net_forward.1} parent=11 // pred_region
          _
        $region52: #{r_net_forward.1} parent=11 // pred_fallthru
          _
        // Predicated region
        $region53: #{r_net_forward.1} parent=11 // pred_check
          %p553 = pneg %p288
        $region54: #{r_net_forward.1} parent=11 // pred_check_branch
          %555 = sbr.rel (%p553) target = $region56
        $region55: #{r_net_forward.1} parent=11 // pred_region
          _
        $region56: #{r_net_forward.1} parent=11 // pred_fallthru
          _
        // Predicated region
        $region57: #{r_net_forward.1} parent=11 // pred_check
          %p556 = pneg %p309
        $region58: #{r_net_forward.1} parent=11 // pred_check_branch
          %558 = sbr.rel (%p556) target = $region60
        $region59: #{r_net_forward.1} parent=11 // pred_region
          _
        $region60: #{r_net_forward.1} parent=11 // pred_fallthru
          _
        // Predicated region
        $region61: #{r_net_forward.1} parent=11 // pred_check
          %p559 = pneg %p330
        $region62: #{r_net_forward.1} parent=11 // pred_check_branch
          %561 = sbr.rel (%p559) target = $region64
        $region63: #{r_net_forward.1} parent=11 // pred_region
          _
        $region64: #{r_net_forward.1} parent=11 // pred_fallthru
          _
        // Predicated region
        $region65: #{r_net_forward.1} parent=11 // pred_check
          %p562 = pneg %p351
        $region66: #{r_net_forward.1} parent=11 // pred_check_branch
          %564 = sbr.rel (%p562) target = $region68
        $region67: #{r_net_forward.1} parent=11 // pred_region
          _
        $region68: #{r_net_forward.1} parent=11 // pred_fallthru
          _
        // Predicated region
        $region69: #{r_net_forward.1} parent=11 // pred_check
          %p565 = pneg %p372
        $region70: #{r_net_forward.1} parent=11 // pred_check_branch
          %567 = sbr.rel (%p565) target = $region72
        $region71: #{r_net_forward.1} parent=11 // pred_region
          _
        $region72: #{r_net_forward.1} parent=11 // pred_fallthru
          _
        // Predicated region
        $region73: #{r_net_forward.1} parent=11 // pred_check
          %p568 = pneg %p393
        $region74: #{r_net_forward.1} parent=11 // pred_check_branch
          %570 = sbr.rel (%p568) target = $region76
        $region75: #{r_net_forward.1} parent=11 // pred_region
          _
        $region76: #{r_net_forward.1} parent=11 // pred_fallthru
          _
        // Predicated region
        $region77: #{r_net_forward.1} parent=11 // pred_check
          %p571 = pneg %p414
        $region78: #{r_net_forward.1} parent=11 // pred_check_branch
          %573 = sbr.rel (%p571) target = $region80
        $region79: #{r_net_forward.1} parent=11 // pred_region
          _
        $region80: #{r_net_forward.1} parent=11 // pred_fallthru
          _
        // Predicated region
        $region81: #{r_net_forward.1} parent=11 // pred_check
          %p574 = pneg %p435
        $region82: #{r_net_forward.1} parent=11 // pred_check_branch
          %576 = sbr.rel (%p574) target = $region84
        $region83: #{r_net_forward.1} parent=11 // pred_region
          _
        $region84: #{r_net_forward.1} parent=11 // pred_fallthru
          _
        // Predicated region
        $region85: #{r_net_forward.1} parent=11 // pred_check
          %p577 = pneg %p456
        $region86: #{r_net_forward.1} parent=11 // pred_check_branch
          %579 = sbr.rel (%p577) target = $region88
        $region87: #{r_net_forward.1} parent=11 // pred_region
          _
        $region88: #{r_net_forward.1} parent=11 // pred_fallthru
          _
      $region12: #{r_net_forward.1} parent=5 // pred_fallthru
        _
      %p580 = scmp.lt.s32.totalorder %s31, 2
      // Predicated region
      $region89: #{r_net_forward.1} parent=5 // pred_check
        %p581 = pneg %p580
      $region90: #{r_net_forward.1} parent=5 // pred_check_branch
        %583 = sbr.rel (%p581) target = $region92
      $region91: #{r_net_forward.1} parent=5 // pred_region
        // Predicated region
        $region93: #{r_net_forward.1} parent=91 // pred_check
          %p584 = pneg %p51
        $region94: #{r_net_forward.1} parent=91 // pred_check_branch
          %586 = sbr.rel (%p584) target = $region96
        $region95: #{r_net_forward.1} parent=91 // pred_region
          %p587 = scmp.lt.s32.totalorder %s31, 1
          %s588 = scalar_select %p587, %s31, 1
          %s589 = smul.addr %s588, 104
          %s590 = smul.addr %s589, 8
          %s591 = scalar_lea.vmem %s0, %s590
        $region96: #{r_net_forward.1} parent=91 // pred_fallthru
          _
      $region92: #{r_net_forward.1} parent=5 // pred_fallthru
        _
      %p592 = scmp.le.s32.totalorder 1, %s31
      %p593 = scmp.lt.s32.totalorder %s31, 3
      %p594 = pnand %p592, %p593
      %p595 = pneg %p594
      // Predicated region
      $region97: #{r_net_forward.1} parent=5 // pred_check
        _
      $region98: #{r_net_forward.1} parent=5 // pred_check_branch
        %597 = sbr.rel (%p594) target = $region100
      $region99: #{r_net_forward.1} parent=5 // pred_region
        %s598 = ssub.s32 %s31, 1
        %p599 = scmp.lt.s32.totalorder %s36, 1
        %s600 = scalar_select %p599, %s36, 1
        %s601 = smul.addr %s600, 104
        %s602 = smul.addr %s601, 8
        %s603 = scalar_lea.vmem %s0, %s602
        %p604 = pneg %p57
        %p605 = pneg %p54
        %p606 = pneg %p78
        %p607 = pneg %p75
        %p608 = pneg %p99
        %p609 = pneg %p96
        %p610 = pneg %p120
        %p611 = pneg %p117
        %p612 = pneg %p141
        %p613 = pneg %p138
        %p614 = pneg %p162
        %p615 = pneg %p159
        %p616 = pneg %p183
        %p617 = pneg %p180
        %p618 = pneg %p204
        %p619 = pneg %p201
        %p620 = pneg %p225
        %p621 = pneg %p222
        %p622 = pneg %p246
        %p623 = pneg %p243
        %p624 = pneg %p267
        %p625 = pneg %p264
        %p626 = pneg %p288
        %p627 = pneg %p285
        %p628 = pneg %p309
        %p629 = pneg %p306
        %p630 = pneg %p330
        %p631 = pneg %p327
        %p632 = pneg %p351
        %p633 = pneg %p348
        %p634 = pneg %p372
        %p635 = pneg %p369
        %p636 = pneg %p393
        %p637 = pneg %p390
        %p638 = pneg %p414
        %p639 = pneg %p411
        %p640 = pneg %p435
        %p641 = pneg %p432
        %p642 = pneg %p456
        %p643 = pneg %p453
        %p644 = pneg %p482
        %p645 = pneg %p479
        %p646 = scmp.lt.s32.totalorder %s36, 1
        %s647 = scalar_select %p646, %s36, 1
        %s648 = scalar_lea.vmem %s20, %s647
        %p649 = pneg %p508
        %p650 = pneg %p505
        %s651 = sand.u32 %s495, 1
        %s652 = scalar_lea.sflag [#allocation10], %s651
        %s653 = sand.u32 %s495, 1
        %s654 = scalar_lea.vmem [#allocation9], %s653
        %p655 = scmp.lt.s32.totalorder %s36, 1
        %s656 = scalar_select %p655, %s36, 1
        %s657 = smul.addr %s656, 104
        %s658 = smul.addr %s657, 8
        %s659 = scalar_lea.vmem %s0, %s658
        %p660 = scmp.lt.s32.totalorder %s36, 1
        %s661 = scalar_select %p660, %s36, 1
        %s662 = scalar_lea.vmem %s20, %s661
        %v663 = vld [vmem:[%s19] sm:$0x1]
        %v664 = vld [vmem:[%s2] sm:$0x1]
        loop: start=0, step=1, limit=24
        $region101: #{r_net_forward.1} parent=99 // loop_pre_header
          _
        $region102: #{r_net_forward.1} parent=99 // loop_header
          %s666 = sphi 0, %s670
          %p667 = scmp.ge.s32.totalorder %s666, 24
        $region103: #{r_net_forward.1} parent=99 // loop_header_branch
          %669 = sbr.rel (%p667) target = $region107
        $region104: #{r_net_forward.1} parent=99 // loop_body
          %s671 = smul.u32 %s666, 32
          %s672 = scalar_lea.vmem %s659, %s671
          %v673 = vld [vmem:[%s672] sm:$0xff]
          %v674 = vld [vmem:[%s672 + $0x8] sm:$0xff]
          %v675 = vld [vmem:[%s672 + $0x10] sm:$0xff]
          %v676 = vld [vmem:[%s1] sm:$0x7]
          %v677 = vld [vmem:[%s672 + $0x1] sm:$0xff]
          %v678 = vld [vmem:[%s672 + $0x9] sm:$0xff]
          %v679 = vld [vmem:[%s672 + $0x11] sm:$0xff]
          %s680 = scalar_lea.vmem %s1, 4
          %v681 = vld [vmem:[%s680] sm:$0x7]
          %vm682 = vcmask 23552
          %v684 = vsel %vm682, %v677, 0
          %v687 = vsel %vm682, %v678, 0
          %v690 = vsel %vm682, %v679, 0
          %vm692 = vcmask 1042432
          %v694 = vsel %vm692, %v681, 0
          %696 = vmatpush.msra.mxu0 0.0
          %697 = vmatpush.msra.mxu0 0.0
          %698 = vmatpush.msra.mxu0 0.0
          %699 = vmatpush.msra.mxu0 0.0
          %700 = vmatpush.msra.mxu0 0.0
          %701 = vmatpush.msra.mxu0 0.0
          %702 = vmatpush.msra.mxu0 0.0
          %703 = vmatpush.msra.mxu0 0.0
          %704 = vmatpush.msra.mxu0 0.0
          %705 = vmatpush.msra.mxu0 0.0
          %706 = vmatpush.msra.mxu0 0.0
          %707 = vmatpush.msra.mxu0 0.0
          %708 = vmatpush.msra.mxu0 0.0
          %709 = vmatpush.msra.mxu0 0.0
          %710 = vmatpush.msra.mxu0 0.0
          %711 = vmatpush.msra.mxu0 %v694
          %712 = vmatmul.f32.gmra.mxu0 %v684
          %v713 = vpop.f32.mrf.mxu0
          %v714 = vadd.f32 0.0, %v713
          %715 = vmatmul.f32.gmra.mxu0 %v687
          %v716 = vpop.f32.mrf.mxu0
          %v717 = vadd.f32 0.0, %v716
          %718 = vmatmul.f32.gmra.mxu0 %v690
          %v719 = vpop.f32.mrf.mxu0
          %v720 = vadd.f32 0.0, %v719
          %721 = vdwg.mxu0
          %v723 = vsel %vm682, %v673, 0
          %v726 = vsel %vm682, %v674, 0
          %v729 = vsel %vm682, %v675, 0
          %v732 = vsel %vm692, %v676, 0
          %734 = vmatpush.msra.mxu0 0.0
          %735 = vmatpush.msra.mxu0 0.0
          %736 = vmatpush.msra.mxu0 0.0
          %737 = vmatpush.msra.mxu0 0.0
          %738 = vmatpush.msra.mxu0 0.0
          %739 = vmatpush.msra.mxu0 0.0
          %740 = vmatpush.msra.mxu0 0.0
          %741 = vmatpush.msra.mxu0 0.0
          %742 = vmatpush.msra.mxu0 0.0
          %743 = vmatpush.msra.mxu0 0.0
          %744 = vmatpush.msra.mxu0 0.0
          %745 = vmatpush.msra.mxu0 0.0
          %746 = vmatpush.msra.mxu0 0.0
          %747 = vmatpush.msra.mxu0 0.0
          %748 = vmatpush.msra.mxu0 0.0
          %749 = vmatpush.msra.mxu0 %v732
          %750 = vmatmul.f32.gmra.mxu0 %v723
          %v751 = vpop.f32.mrf.mxu0
          %v752 = vadd.f32 %v714, %v751
          %753 = vmatmul.f32.gmra.mxu0 %v726
          %v754 = vpop.f32.mrf.mxu0
          %v755 = vadd.f32 %v717, %v754
          %756 = vmatmul.f32.gmra.mxu0 %v729
          %v757 = vpop.f32.mrf.mxu0
          %v758 = vadd.f32 %v720, %v757
          %759 = vdwg.mxu0
          %v760 = vld [vmem:[%s672 + $0x2] sm:$0xff]
          %v761 = vld [vmem:[%s672 + $0xa] sm:$0xff]
          %v762 = vld [vmem:[%s672 + $0x12] sm:$0xff]
          %s763 = scalar_lea.vmem %s1, 8
          %v764 = vld [vmem:[%s763] sm:$0x7]
          %v766 = vsel %vm682, %v760, 0
          %v769 = vsel %vm682, %v761, 0
          %v772 = vsel %vm682, %v762, 0
          %v775 = vsel %vm692, %v764, 0
          %777 = vmatpush.msra.mxu0 0.0
          %778 = vmatpush.msra.mxu0 0.0
          %779 = vmatpush.msra.mxu0 0.0
          %780 = vmatpush.msra.mxu0 0.0
          %781 = vmatpush.msra.mxu0 0.0
          %782 = vmatpush.msra.mxu0 0.0
          %783 = vmatpush.msra.mxu0 0.0
          %784 = vmatpush.msra.mxu0 0.0
          %785 = vmatpush.msra.mxu0 0.0
          %786 = vmatpush.msra.mxu0 0.0
          %787 = vmatpush.msra.mxu0 0.0
          %788 = vmatpush.msra.mxu0 0.0
          %789 = vmatpush.msra.mxu0 0.0
          %790 = vmatpush.msra.mxu0 0.0
          %791 = vmatpush.msra.mxu0 0.0
          %792 = vmatpush.msra.mxu0 %v775
          %793 = vmatmul.f32.gmra.mxu0 %v766
          %v794 = vpop.f32.mrf.mxu0
          %v795 = vadd.f32 0.0, %v794
          %796 = vmatmul.f32.gmra.mxu0 %v769
          %v797 = vpop.f32.mrf.mxu0
          %v798 = vadd.f32 0.0, %v797
          %799 = vmatmul.f32.gmra.mxu0 %v772
          %v800 = vpop.f32.mrf.mxu0
          %v801 = vadd.f32 0.0, %v800
          %802 = vdwg.mxu0
          %v803 = vadd.f32 %v752, %v795
          %v804 = vadd.f32 %v755, %v798
          %v805 = vadd.f32 %v758, %v801
          %s806 = sadd.s32 %s666, 1
          %s807 = smul.u32 %s806, 32
          %s808 = scalar_lea.vmem %s659, %s807
          %v809 = vld [vmem:[%s808] sm:$0xff]
          %v810 = vld [vmem:[%s808 + $0x8] sm:$0xff]
          %v811 = vld [vmem:[%s808 + $0x10] sm:$0xff]
          %s812 = scalar_lea.vmem %s1, 12
          %v813 = vld [vmem:[%s812] sm:$0x7]
          %v815 = vsel %vm682, %v809, 0
          %v818 = vsel %vm682, %v810, 0
          %v821 = vsel %vm682, %v811, 0
          %v824 = vsel %vm692, %v813, 0
          %826 = vmatpush.msra.mxu0 0.0
          %827 = vmatpush.msra.mxu0 0.0
          %828 = vmatpush.msra.mxu0 0.0
          %829 = vmatpush.msra.mxu0 0.0
          %830 = vmatpush.msra.mxu0 0.0
          %831 = vmatpush.msra.mxu0 0.0
          %832 = vmatpush.msra.mxu0 0.0
          %833 = vmatpush.msra.mxu0 0.0
          %834 = vmatpush.msra.mxu0 0.0
          %835 = vmatpush.msra.mxu0 0.0
          %836 = vmatpush.msra.mxu0 0.0
          %837 = vmatpush.msra.mxu0 0.0
          %838 = vmatpush.msra.mxu0 0.0
          %839 = vmatpush.msra.mxu0 0.0
          %840 = vmatpush.msra.mxu0 0.0
          %841 = vmatpush.msra.mxu0 %v824
          %842 = vmatmul.f32.gmra.mxu0 %v815
          %v843 = vpop.f32.mrf.mxu0
          %v844 = vadd.f32 0.0, %v843
          %845 = vmatmul.f32.gmra.mxu0 %v818
          %v846 = vpop.f32.mrf.mxu0
          %v847 = vadd.f32 0.0, %v846
          %848 = vmatmul.f32.gmra.mxu0 %v821
          %v849 = vpop.f32.mrf.mxu0
          %v850 = vadd.f32 0.0, %v849
          %851 = vdwg.mxu0
          %v852 = vadd.f32 %v803, %v844
          %v853 = vadd.f32 %v804, %v847
          %v854 = vadd.f32 %v805, %v850
          %v855 = vld [vmem:[%s808 + $0x1] sm:$0xff]
          %v856 = vld [vmem:[%s808 + $0x9] sm:$0xff]
          %v857 = vld [vmem:[%s808 + $0x11] sm:$0xff]
          %s858 = scalar_lea.vmem %s1, 16
          %v859 = vld [vmem:[%s858] sm:$0x7]
          %v861 = vsel %vm682, %v855, 0
          %v864 = vsel %vm682, %v856, 0
          %v867 = vsel %vm682, %v857, 0
          %v870 = vsel %vm692, %v859, 0
          %872 = vmatpush.msra.mxu0 0.0
          %873 = vmatpush.msra.mxu0 0.0
          %874 = vmatpush.msra.mxu0 0.0
          %875 = vmatpush.msra.mxu0 0.0
          %876 = vmatpush.msra.mxu0 0.0
          %877 = vmatpush.msra.mxu0 0.0
          %878 = vmatpush.msra.mxu0 0.0
          %879 = vmatpush.msra.mxu0 0.0
          %880 = vmatpush.msra.mxu0 0.0
          %881 = vmatpush.msra.mxu0 0.0
          %882 = vmatpush.msra.mxu0 0.0
          %883 = vmatpush.msra.mxu0 0.0
          %884 = vmatpush.msra.mxu0 0.0
          %885 = vmatpush.msra.mxu0 0.0
          %886 = vmatpush.msra.mxu0 0.0
          %887 = vmatpush.msra.mxu0 %v870
          %888 = vmatmul.f32.gmra.mxu0 %v861
          %v889 = vpop.f32.mrf.mxu0
          %v890 = vadd.f32 0.0, %v889
          %891 = vmatmul.f32.gmra.mxu0 %v864
          %v892 = vpop.f32.mrf.mxu0
          %v893 = vadd.f32 0.0, %v892
          %894 = vmatmul.f32.gmra.mxu0 %v867
          %v895 = vpop.f32.mrf.mxu0
          %v896 = vadd.f32 0.0, %v895
          %897 = vdwg.mxu0
          %v898 = vadd.f32 %v852, %v890
          %v899 = vadd.f32 %v853, %v893
          %v900 = vadd.f32 %v854, %v896
          %v901 = vld [vmem:[%s808 + $0x2] sm:$0xff]
          %v902 = vld [vmem:[%s808 + $0xa] sm:$0xff]
          %v903 = vld [vmem:[%s808 + $0x12] sm:$0xff]
          %s904 = scalar_lea.vmem %s1, 20
          %v905 = vld [vmem:[%s904] sm:$0x7]
          %v907 = vsel %vm682, %v901, 0
          %v910 = vsel %vm682, %v902, 0
          %v913 = vsel %vm682, %v903, 0
          %v916 = vsel %vm692, %v905, 0
          %918 = vmatpush.msra.mxu0 0.0
          %919 = vmatpush.msra.mxu0 0.0
          %920 = vmatpush.msra.mxu0 0.0
          %921 = vmatpush.msra.mxu0 0.0
          %922 = vmatpush.msra.mxu0 0.0
          %923 = vmatpush.msra.mxu0 0.0
          %924 = vmatpush.msra.mxu0 0.0
          %925 = vmatpush.msra.mxu0 0.0
          %926 = vmatpush.msra.mxu0 0.0
          %927 = vmatpush.msra.mxu0 0.0
          %928 = vmatpush.msra.mxu0 0.0
          %929 = vmatpush.msra.mxu0 0.0
          %930 = vmatpush.msra.mxu0 0.0
          %931 = vmatpush.msra.mxu0 0.0
          %932 = vmatpush.msra.mxu0 0.0
          %933 = vmatpush.msra.mxu0 %v916
          %934 = vmatmul.f32.gmra.mxu0 %v907
          %v935 = vpop.f32.mrf.mxu0
          %v936 = vadd.f32 0.0, %v935
          %937 = vmatmul.f32.gmra.mxu0 %v910
          %v938 = vpop.f32.mrf.mxu0
          %v939 = vadd.f32 0.0, %v938
          %940 = vmatmul.f32.gmra.mxu0 %v913
          %v941 = vpop.f32.mrf.mxu0
          %v942 = vadd.f32 0.0, %v941
          %943 = vdwg.mxu0
          %v944 = vadd.f32 %v898, %v936
          %v945 = vadd.f32 %v899, %v939
          %v946 = vadd.f32 %v900, %v942
          %s947 = sadd.s32 %s666, 2
          %s948 = smul.u32 %s947, 32
          %s949 = scalar_lea.vmem %s659, %s948
          %v950 = vld [vmem:[%s949] sm:$0xff]
          %v951 = vld [vmem:[%s949 + $0x8] sm:$0xff]
          %v952 = vld [vmem:[%s949 + $0x10] sm:$0xff]
          %s953 = scalar_lea.vmem %s1, 24
          %v954 = vld [vmem:[%s953] sm:$0x7]
          %v956 = vsel %vm682, %v950, 0
          %v959 = vsel %vm682, %v951, 0
          %v962 = vsel %vm682, %v952, 0
          %v965 = vsel %vm692, %v954, 0
          %967 = vmatpush.msra.mxu0 0.0
          %968 = vmatpush.msra.mxu0 0.0
          %969 = vmatpush.msra.mxu0 0.0
          %970 = vmatpush.msra.mxu0 0.0
          %971 = vmatpush.msra.mxu0 0.0
          %972 = vmatpush.msra.mxu0 0.0
          %973 = vmatpush.msra.mxu0 0.0
          %974 = vmatpush.msra.mxu0 0.0
          %975 = vmatpush.msra.mxu0 0.0
          %976 = vmatpush.msra.mxu0 0.0
          %977 = vmatpush.msra.mxu0 0.0
          %978 = vmatpush.msra.mxu0 0.0
          %979 = vmatpush.msra.mxu0 0.0
          %980 = vmatpush.msra.mxu0 0.0
          %981 = vmatpush.msra.mxu0 0.0
          %982 = vmatpush.msra.mxu0 %v965
          %983 = vmatmul.f32.gmra.mxu0 %v956
          %v984 = vpop.f32.mrf.mxu0
          %v985 = vadd.f32 0.0, %v984
          %986 = vmatmul.f32.gmra.mxu0 %v959
          %v987 = vpop.f32.mrf.mxu0
          %v988 = vadd.f32 0.0, %v987
          %989 = vmatmul.f32.gmra.mxu0 %v962
          %v990 = vpop.f32.mrf.mxu0
          %v991 = vadd.f32 0.0, %v990
          %992 = vdwg.mxu0
          %v993 = vadd.f32 %v944, %v985
          %v994 = vadd.f32 %v945, %v988
          %v995 = vadd.f32 %v946, %v991
          %v996 = vld [vmem:[%s949 + $0x1] sm:$0xff]
          %v997 = vld [vmem:[%s949 + $0x9] sm:$0xff]
          %v998 = vld [vmem:[%s949 + $0x11] sm:$0xff]
          %s999 = scalar_lea.vmem %s1, 28
          %v1000 = vld [vmem:[%s999] sm:$0x7]
          %v1002 = vsel %vm682, %v996, 0
          %v1005 = vsel %vm682, %v997, 0
          %v1008 = vsel %vm682, %v998, 0
          %v1011 = vsel %vm692, %v1000, 0
          %1013 = vmatpush.msra.mxu0 0.0
          %1014 = vmatpush.msra.mxu0 0.0
          %1015 = vmatpush.msra.mxu0 0.0
          %1016 = vmatpush.msra.mxu0 0.0
          %1017 = vmatpush.msra.mxu0 0.0
          %1018 = vmatpush.msra.mxu0 0.0
          %1019 = vmatpush.msra.mxu0 0.0
          %1020 = vmatpush.msra.mxu0 0.0
          %1021 = vmatpush.msra.mxu0 0.0
          %1022 = vmatpush.msra.mxu0 0.0
          %1023 = vmatpush.msra.mxu0 0.0
          %1024 = vmatpush.msra.mxu0 0.0
          %1025 = vmatpush.msra.mxu0 0.0
          %1026 = vmatpush.msra.mxu0 0.0
          %1027 = vmatpush.msra.mxu0 0.0
          %1028 = vmatpush.msra.mxu0 %v1011
          %1029 = vmatmul.f32.gmra.mxu0 %v1002
          %v1030 = vpop.f32.mrf.mxu0
          %v1031 = vadd.f32 0.0, %v1030
          %1032 = vmatmul.f32.gmra.mxu0 %v1005
          %v1033 = vpop.f32.mrf.mxu0
          %v1034 = vadd.f32 0.0, %v1033
          %1035 = vmatmul.f32.gmra.mxu0 %v1008
          %v1036 = vpop.f32.mrf.mxu0
          %v1037 = vadd.f32 0.0, %v1036
          %1038 = vdwg.mxu0
          %v1039 = vadd.f32 %v993, %v1031
          %v1040 = vadd.f32 %v994, %v1034
          %v1041 = vadd.f32 %v995, %v1037
          %v1042 = vld [vmem:[%s949 + $0x2] sm:$0xff]
          %v1043 = vld [vmem:[%s949 + $0xa] sm:$0xff]
          %v1044 = vld [vmem:[%s949 + $0x12] sm:$0xff]
          %s1045 = scalar_lea.vmem %s1, 32
          %v1046 = vld [vmem:[%s1045] sm:$0x7]
          %v1048 = vsel %vm682, %v1042, 0
          %v1051 = vsel %vm682, %v1043, 0
          %v1054 = vsel %vm682, %v1044, 0
          %v1057 = vsel %vm692, %v1046, 0
          %1059 = vmatpush.msra.mxu0 0.0
          %1060 = vmatpush.msra.mxu0 0.0
          %1061 = vmatpush.msra.mxu0 0.0
          %1062 = vmatpush.msra.mxu0 0.0
          %1063 = vmatpush.msra.mxu0 0.0
          %1064 = vmatpush.msra.mxu0 0.0
          %1065 = vmatpush.msra.mxu0 0.0
          %1066 = vmatpush.msra.mxu0 0.0
          %1067 = vmatpush.msra.mxu0 0.0
          %1068 = vmatpush.msra.mxu0 0.0
          %1069 = vmatpush.msra.mxu0 0.0
          %1070 = vmatpush.msra.mxu0 0.0
          %1071 = vmatpush.msra.mxu0 0.0
          %1072 = vmatpush.msra.mxu0 0.0
          %1073 = vmatpush.msra.mxu0 0.0
          %1074 = vmatpush.msra.mxu0 %v1057
          %1075 = vmatmul.f32.gmra.mxu0 %v1048
          %v1076 = vpop.f32.mrf.mxu0
          %v1077 = vadd.f32 0.0, %v1076
          %1078 = vmatmul.f32.gmra.mxu0 %v1051
          %v1079 = vpop.f32.mrf.mxu0
          %v1080 = vadd.f32 0.0, %v1079
          %1081 = vmatmul.f32.gmra.mxu0 %v1054
          %v1082 = vpop.f32.mrf.mxu0
          %v1083 = vadd.f32 0.0, %v1082
          %1084 = vdwg.mxu0
          %v1085 = vadd.f32 %v1039, %v1077
          %v1086 = vadd.f32 %v1040, %v1080
          %v1087 = vadd.f32 %v1041, %v1083
          %v1089 = vperm.slane %v664, 0
          %v1091 = vadd.f32 %v1085, %v1089
          %v1092 = vadd.f32 %v1086, %v1089
          %v1093 = vadd.f32 %v1087, %v1089
          %vm1094 = vcmp.gt.f32.partialorder %v1091, 0.0
          %vm1095 = vcmp.gt.f32.partialorder %v1092, 0.0
          %vm1096 = vcmp.gt.f32.partialorder %v1093, 0.0
          %v1098 = vperm.slane %v663, 0
          %1099 = vset.pattern.permute.xlu0 0
          %1100 = vperm.xlu0 %1099, %v1098
          %v1101 = vpop.permute.xlu0 %1100
          %v1103 = vmul.f32 %v1101, %v1091
          %v1104 = vmul.f32 %v1101, %v1092
          %v1105 = vmul.f32 %v1101, %v1093
          %v1106 = vsel %vm1094, %v1091, %v1103
          %v1107 = vsel %vm1095, %v1092, %v1104
          %v1108 = vsel %vm1096, %v1093, %v1105
          %s1109 = smul.u32 %s666, 24
          %s1110 = scalar_lea.vmem [#allocation2], %s1109
          %vm1111 = vcmask 228352
          %1112 = vst.msk [vmem:[%s1110] sm:$0xff] %vm1111, %v1106
          %1113 = vst.msk [vmem:[%s1110 + $0x8] sm:$0xff] %vm1111, %v1107
          %1114 = vst.msk [vmem:[%s1110 + $0x10] sm:$0xff] %vm1111, %v1108
        $region105: #{r_net_forward.1} parent=99 // loop_footer
          %s670 = sadd.s32 1, %s666
        $region106: #{r_net_forward.1} parent=99 // loop_footer_branch
          %665 = sbr.rel target = $region102
        $region107: #{r_net_forward.1} parent=99 // loop_exit
          _
        loop: start=0, step=1, limit=11
        $region108: #{r_net_forward.1} parent=99 // loop_pre_header
          _
        $region109: #{r_net_forward.1} parent=99 // loop_header
          %s1116 = sphi 0, %s1120
          %p1117 = scmp.ge.s32.totalorder %s1116, 11
        $region110: #{r_net_forward.1} parent=99 // loop_header_branch
          %1119 = sbr.rel (%p1117) target = $region114
        $region111: #{r_net_forward.1} parent=99 // loop_body
          %s1121 = smul.u32 %s1116, 2
          %s1122 = smul.u32 %s1121, 24
          %s1123 = scalar_lea.vmem [#allocation2], %s1122
          %v1124 = vld [vmem:[%s1123] sm:$0xff]
          %v1125 = vld [vmem:[%s1123 + $0x8] sm:$0xff]
          %v1126 = vld [vmem:[%s1123 + $0x10] sm:$0xff]
          %s1127 = sadd.s32 %s1121, 1
          %s1128 = smul.u32 %s1127, 24
          %s1129 = scalar_lea.vmem [#allocation2], %s1128
          %v1130 = vld [vmem:[%s1129] sm:$0xff]
          %v1131 = vld [vmem:[%s1129 + $0x8] sm:$0xff]
          %v1132 = vld [vmem:[%s1129 + $0x10] sm:$0xff]
          %v1133 = vmax.f32 %v1124, %v1130
          %v1134 = vmax.f32 %v1125, %v1131
          %v1135 = vmax.f32 %v1126, %v1132
          %s1136 = sadd.s32 %s1121, 2
          %s1137 = smul.u32 %s1136, 24
          %s1138 = scalar_lea.vmem [#allocation2], %s1137
          %v1139 = vld [vmem:[%s1138] sm:$0xff]
          %v1140 = vld [vmem:[%s1138 + $0x8] sm:$0xff]
          %v1141 = vld [vmem:[%s1138 + $0x10] sm:$0xff]
          %v1142 = vmax.f32 %v1133, %v1139
          %v1143 = vmax.f32 %v1134, %v1140
          %v1144 = vmax.f32 %v1135, %v1141
          %vm1148 = vcmask 1046528
          %v1149 = vrot.slane %v1142, 1
          %v1150 = vrot.slane %v1143, 1
          %v1151 = vsel %vm1148, %v1149, %v1150
          %v1152 = vrot.slane %v1144, 1
          %v1153 = vsel %vm1148, %v1150, %v1152
          %v1157 = vmax.f32 %v1142, %v1151
          %v1158 = vmax.f32 %v1143, %v1153
          %v1159 = vmax.f32 %v1144, %v1152
          %vm1160 = vcmask 1045504
          %v1161 = vrot.slane %v1142, 2
          %v1162 = vrot.slane %v1143, 2
          %v1163 = vsel %vm1160, %v1161, %v1162
          %v1164 = vrot.slane %v1144, 2
          %v1165 = vsel %vm1160, %v1162, %v1164
          %v1169 = vmax.f32 %v1157, %v1163
          %v1170 = vmax.f32 %v1158, %v1165
          %v1171 = vmax.f32 %v1159, %v1164
          %s1172 = smul.u32 %s1116, 16
          %s1173 = scalar_lea.vmem [#allocation3], %s1172
          %vm1174 = vcmask 221184
          %1175 = vst.msk [vmem:[%s1173] sm:$0x1] %vm1174, %v1169
          %vm1176 = vcmask 223234
          %1177 = vst.msk [vmem:[%s1173 - $0x1] sm:$0x4] %vm1176, %v1169
          %vm1178 = vcmask 225284
          %1179 = vst.msk [vmem:[%s1173 - $0x2] sm:$0x10] %vm1178, %v1169
          %vm1180 = vcmask 227334
          %1181 = vst.msk [vmem:[%s1173 - $0x3] sm:$0x40] %vm1180, %v1169
          %1182 = vst.msk [vmem:[%s1173 + $0x4] sm:$0x1] %vm1174, %v1170
          %1183 = vst.msk [vmem:[%s1173 + $0x3] sm:$0x4] %vm1176, %v1170
          %1184 = vst.msk [vmem:[%s1173 + $0x2] sm:$0x10] %vm1178, %v1170
          %1185 = vst.msk [vmem:[%s1173 + $0x1] sm:$0x40] %vm1180, %v1170
          %1186 = vst.msk [vmem:[%s1173 + $0x8] sm:$0x1] %vm1174, %v1171
          %1187 = vst.msk [vmem:[%s1173 + $0x7] sm:$0x4] %vm1176, %v1171
          %1188 = vst.msk [vmem:[%s1173 + $0x6] sm:$0x10] %vm1178, %v1171
        $region112: #{r_net_forward.1} parent=99 // loop_footer
          %s1120 = sadd.s32 1, %s1116
        $region113: #{r_net_forward.1} parent=99 // loop_footer_branch
          %1115 = sbr.rel target = $region109
        $region114: #{r_net_forward.1} parent=99 // loop_exit
          _
        %vm1189 = vcmask 113664
        %1190 = vst.msk [vmem:[#allocation4] sm:$0xff] %vm1189, 0.0
        %vm1191 = vcmask 110592
        %1192 = vst.msk [vmem:[#allocation4 + $0x8] sm:$0x1f] %vm1191, 0.0
        %1193 = vst.msk [vmem:[#allocation4 + $0x10] sm:$0xff] %vm1189, 0.0
        %1194 = vst.msk [vmem:[#allocation4 + $0x18] sm:$0x1f] %vm1191, 0.0
        %1195 = vst.msk [vmem:[#allocation4 + $0x20] sm:$0xff] %vm1189, 0.0
        %1196 = vst.msk [vmem:[#allocation4 + $0x28] sm:$0x1f] %vm1191, 0.0
        %1197 = vst.msk [vmem:[#allocation4 + $0x30] sm:$0xff] %vm1189, 0.0
        %1198 = vst.msk [vmem:[#allocation4 + $0x38] sm:$0x1f] %vm1191, 0.0
        %1199 = vst.msk [vmem:[#allocation4 + $0x40] sm:$0xff] %vm1189, 0.0
        %1200 = vst.msk [vmem:[#allocation4 + $0x48] sm:$0x1f] %vm1191, 0.0
        %1201 = vst.msk [vmem:[#allocation4 + $0x50] sm:$0xff] %vm1189, 0.0
        %1202 = vst.msk [vmem:[#allocation4 + $0x58] sm:$0x1f] %vm1191, 0.0
        %1203 = vst.msk [vmem:[#allocation4 + $0x60] sm:$0xff] %vm1189, 0.0
        %1204 = vst.msk [vmem:[#allocation4 + $0x68] sm:$0x1f] %vm1191, 0.0
        %1205 = vst.msk [vmem:[#allocation4 + $0x70] sm:$0xff] %vm1189, 0.0
        %1206 = vst.msk [vmem:[#allocation4 + $0x78] sm:$0x1f] %vm1191, 0.0
        %1207 = vst.msk [vmem:[#allocation4 + $0x80] sm:$0xff] %vm1189, 0.0
        %1208 = vst.msk [vmem:[#allocation4 + $0x88] sm:$0x1f] %vm1191, 0.0
        %1209 = vst.msk [vmem:[#allocation4 + $0x90] sm:$0xff] %vm1189, 0.0
        %1210 = vst.msk [vmem:[#allocation4 + $0x98] sm:$0x1f] %vm1191, 0.0
        %1211 = vst.msk [vmem:[#allocation4 + $0xa0] sm:$0xff] %vm1189, 0.0
        %1212 = vst.msk [vmem:[#allocation4 + $0xa8] sm:$0x1f] %vm1191, 0.0
        %1213 = vst.msk [vmem:[#allocation4 + $0xb0] sm:$0xff] %vm1189, 0.0
        %1214 = vst.msk [vmem:[#allocation4 + $0xb8] sm:$0x1f] %vm1191, 0.0
        %1215 = vst.msk [vmem:[#allocation4 + $0xc0] sm:$0xff] %vm1189, 0.0
        %1216 = vst.msk [vmem:[#allocation4 + $0xc8] sm:$0x1f] %vm1191, 0.0
        %v1217 = vld [vmem:[%s4] sm:$0x1]
        loop: start=0, step=1, limit=11
        $region115: #{r_net_forward.1} parent=99 // loop_pre_header
          _
        $region116: #{r_net_forward.1} parent=99 // loop_header
          %s1219 = sphi 0, %s1223
          %p1220 = scmp.ge.s32.totalorder %s1219, 11
        $region117: #{r_net_forward.1} parent=99 // loop_header_branch
          %1222 = sbr.rel (%p1220) target = $region121
        $region118: #{r_net_forward.1} parent=99 // loop_body
          %s1224 = smul.u32 %s1219, 16
          %s1225 = scalar_lea.vmem [#allocation3], %s1224
          %v1226 = vld [vmem:[%s1225] sm:$0xff]
          %v1227 = vld [vmem:[%s1225 + $0x8] sm:$0x7]
          %v1228 = vld [vmem:[%s3] sm:$0xff]
          %v1229 = vld [vmem:[%s3 + $0x8] sm:$0xff]
          %v1230 = vld [vmem:[%s3 + $0x10] sm:$0xff]
          %v1231 = vld [vmem:[%s3 + $0x18] sm:$0xf]
          %v1233 = vperm.slane %v1217, 0
          %vm1235 = vcmask 228352
          %v1237 = vsel %vm1235, %v1226, 0
          %v1240 = vsel %vm1235, %v1227, 0
          %vm1242 = vcmask 1043456
          %v1244 = vsel %vm1242, %v1231, 0
          %1246 = vmatpush.msra.mxu0 0.0
          %1247 = vmatpush.msra.mxu0 0.0
          %1248 = vmatpush.msra.mxu0 0.0
          %1249 = vmatpush.msra.mxu0 0.0
          %1250 = vmatpush.msra.mxu0 0.0
          %1251 = vmatpush.msra.mxu0 0.0
          %1252 = vmatpush.msra.mxu0 0.0
          %1253 = vmatpush.msra.mxu0 0.0
          %1254 = vmatpush.msra.mxu0 0.0
          %1255 = vmatpush.msra.mxu0 0.0
          %1256 = vmatpush.msra.mxu0 0.0
          %1257 = vmatpush.msra.mxu0 0.0
          %1258 = vmatpush.msra.mxu0 %v1244
          %1259 = vmatpush.msra.mxu0 %v1230
          %1260 = vmatpush.msra.mxu0 %v1229
          %1261 = vmatpush.msra.mxu0 %v1228
          %1262 = vmatmul.f32.gmra.mxu0 %v1237
          %v1263 = vpop.f32.mrf.mxu0
          %v1264 = vadd.f32 %v1233, %v1263
          %1265 = vmatmul.f32.gmra.mxu0 %v1240
          %v1266 = vpop.f32.mrf.mxu0
          %v1267 = vadd.f32 %v1233, %v1266
          %1268 = vdwg.mxu0
          %s1269 = sadd.s32 %s1219, 1
          %s1270 = smul.u32 %s1269, 16
          %s1271 = scalar_lea.vmem [#allocation4], %s1270
          %1272 = vst.msk [vmem:[%s1271 + $0x1] sm:$0xff] %vm1189, %v1264
          %vm1273 = vcmask 108544
          %1274 = vst.msk [vmem:[%s1271 + $0x9] sm:$0x7] %vm1273, %v1267
        $region119: #{r_net_forward.1} parent=99 // loop_footer
          %s1223 = sadd.s32 1, %s1219
        $region120: #{r_net_forward.1} parent=99 // loop_footer_branch
          %1218 = sbr.rel target = $region116
        $region121: #{r_net_forward.1} parent=99 // loop_exit
          _
        %v1275 = vld [vmem:[%s6] sm:$0x1]
        loop: start=0, step=1, limit=11
        $region122: #{r_net_forward.1} parent=99 // loop_pre_header
          _
        $region123: #{r_net_forward.1} parent=99 // loop_header
          %s1277 = sphi 0, %s1281
          %p1278 = scmp.ge.s32.totalorder %s1277, 11
        $region124: #{r_net_forward.1} parent=99 // loop_header_branch
          %1280 = sbr.rel (%p1278) target = $region128
        $region125: #{r_net_forward.1} parent=99 // loop_body
          %s1282 = smul.u32 %s1277, 16
          %s1283 = scalar_lea.vmem [#allocation4], %s1282
          %v1284 = vld [vmem:[%s1283] sm:$0xff]
          %v1285 = vld [vmem:[%s1283 + $0x8] sm:$0x7]
          %v1286 = vld [vmem:[%s5] sm:$0xff]
          %v1287 = vld [vmem:[%s5 + $0x8] sm:$0x3f]
          %v1288 = vld [vmem:[%s1283 + $0x1] sm:$0xff]
          %v1289 = vld [vmem:[%s1283 + $0x9] sm:$0x7]
          %s1290 = scalar_lea.vmem %s5, 16
          %v1291 = vld [vmem:[%s1290] sm:$0xff]
          %v1292 = vld [vmem:[%s1290 + $0x8] sm:$0x3f]
          %v1294 = vsel %vm1189, %v1288, 0
          %v1297 = vsel %vm1189, %v1289, 0
          %vm1299 = vcmask 1045504
          %v1301 = vsel %vm1299, %v1292, 0
          %1303 = vmatpush.msra.mxu0 0.0
          %1304 = vmatpush.msra.mxu0 0.0
          %1305 = vmatpush.msra.mxu0 0.0
          %1306 = vmatpush.msra.mxu0 0.0
          %1307 = vmatpush.msra.mxu0 0.0
          %1308 = vmatpush.msra.mxu0 0.0
          %1309 = vmatpush.msra.mxu0 0.0
          %1310 = vmatpush.msra.mxu0 0.0
          %1311 = vmatpush.msra.mxu0 0.0
          %1312 = vmatpush.msra.mxu0 0.0
          %1313 = vmatpush.msra.mxu0 0.0
          %1314 = vmatpush.msra.mxu0 0.0
          %1315 = vmatpush.msra.mxu0 0.0
          %1316 = vmatpush.msra.mxu0 0.0
          %1317 = vmatpush.msra.mxu0 %v1301
          %1318 = vmatpush.msra.mxu0 %v1291
          %1319 = vmatmul.f32.gmra.mxu0 %v1294
          %v1320 = vpop.f32.mrf.mxu0
          %v1321 = vadd.f32 0.0, %v1320
          %1322 = vmatmul.f32.gmra.mxu0 %v1297
          %v1323 = vpop.f32.mrf.mxu0
          %v1324 = vadd.f32 0.0, %v1323
          %1325 = vdwg.mxu0
          %v1327 = vsel %vm1189, %v1284, 0
          %v1330 = vsel %vm1189, %v1285, 0
          %v1333 = vsel %vm1299, %v1287, 0
          %1335 = vmatpush.msra.mxu0 0.0
          %1336 = vmatpush.msra.mxu0 0.0
          %1337 = vmatpush.msra.mxu0 0.0
          %1338 = vmatpush.msra.mxu0 0.0
          %1339 = vmatpush.msra.mxu0 0.0
          %1340 = vmatpush.msra.mxu0 0.0
          %1341 = vmatpush.msra.mxu0 0.0
          %1342 = vmatpush.msra.mxu0 0.0
          %1343 = vmatpush.msra.mxu0 0.0
          %1344 = vmatpush.msra.mxu0 0.0
          %1345 = vmatpush.msra.mxu0 0.0
          %1346 = vmatpush.msra.mxu0 0.0
          %1347 = vmatpush.msra.mxu0 0.0
          %1348 = vmatpush.msra.mxu0 0.0
          %1349 = vmatpush.msra.mxu0 %v1333
          %1350 = vmatpush.msra.mxu0 %v1286
          %1351 = vmatmul.f32.gmra.mxu0 %v1327
          %v1352 = vpop.f32.mrf.mxu0
          %v1353 = vadd.f32 %v1321, %v1352
          %1354 = vmatmul.f32.gmra.mxu0 %v1330
          %v1355 = vpop.f32.mrf.mxu0
          %v1356 = vadd.f32 %v1324, %v1355
          %1357 = vdwg.mxu0
          %v1358 = vld [vmem:[%s1283 + $0x2] sm:$0xff]
          %v1359 = vld [vmem:[%s1283 + $0xa] sm:$0x7]
          %s1360 = scalar_lea.vmem %s5, 32
          %v1361 = vld [vmem:[%s1360] sm:$0xff]
          %v1362 = vld [vmem:[%s1360 + $0x8] sm:$0x3f]
          %v1364 = vsel %vm1189, %v1358, 0
          %v1367 = vsel %vm1189, %v1359, 0
          %v1370 = vsel %vm1299, %v1362, 0
          %1372 = vmatpush.msra.mxu0 0.0
          %1373 = vmatpush.msra.mxu0 0.0
          %1374 = vmatpush.msra.mxu0 0.0
          %1375 = vmatpush.msra.mxu0 0.0
          %1376 = vmatpush.msra.mxu0 0.0
          %1377 = vmatpush.msra.mxu0 0.0
          %1378 = vmatpush.msra.mxu0 0.0
          %1379 = vmatpush.msra.mxu0 0.0
          %1380 = vmatpush.msra.mxu0 0.0
          %1381 = vmatpush.msra.mxu0 0.0
          %1382 = vmatpush.msra.mxu0 0.0
          %1383 = vmatpush.msra.mxu0 0.0
          %1384 = vmatpush.msra.mxu0 0.0
          %1385 = vmatpush.msra.mxu0 0.0
          %1386 = vmatpush.msra.mxu0 %v1370
          %1387 = vmatpush.msra.mxu0 %v1361
          %1388 = vmatmul.f32.gmra.mxu0 %v1364
          %v1389 = vpop.f32.mrf.mxu0
          %v1390 = vadd.f32 0.0, %v1389
          %1391 = vmatmul.f32.gmra.mxu0 %v1367
          %v1392 = vpop.f32.mrf.mxu0
          %v1393 = vadd.f32 0.0, %v1392
          %1394 = vdwg.mxu0
          %v1395 = vadd.f32 %v1353, %v1390
          %v1396 = vadd.f32 %v1356, %v1393
          %s1397 = sadd.s32 %s1277, 1
          %s1398 = smul.u32 %s1397, 16
          %s1399 = scalar_lea.vmem [#allocation4], %s1398
          %v1400 = vld [vmem:[%s1399] sm:$0xff]
          %v1401 = vld [vmem:[%s1399 + $0x8] sm:$0x7]
          %s1402 = scalar_lea.vmem %s5, 48
          %v1403 = vld [vmem:[%s1402] sm:$0xff]
          %v1404 = vld [vmem:[%s1402 + $0x8] sm:$0x3f]
          %v1406 = vsel %vm1189, %v1400, 0
          %v1409 = vsel %vm1189, %v1401, 0
          %v1412 = vsel %vm1299, %v1404, 0
          %1414 = vmatpush.msra.mxu0 0.0
          %1415 = vmatpush.msra.mxu0 0.0
          %1416 = vmatpush.msra.mxu0 0.0
          %1417 = vmatpush.msra.mxu0 0.0
          %1418 = vmatpush.msra.mxu0 0.0
          %1419 = vmatpush.msra.mxu0 0.0
          %1420 = vmatpush.msra.mxu0 0.0
          %1421 = vmatpush.msra.mxu0 0.0
          %1422 = vmatpush.msra.mxu0 0.0
          %1423 = vmatpush.msra.mxu0 0.0
          %1424 = vmatpush.msra.mxu0 0.0
          %1425 = vmatpush.msra.mxu0 0.0
          %1426 = vmatpush.msra.mxu0 0.0
          %1427 = vmatpush.msra.mxu0 0.0
          %1428 = vmatpush.msra.mxu0 %v1412
          %1429 = vmatpush.msra.mxu0 %v1403
          %1430 = vmatmul.f32.gmra.mxu0 %v1406
          %v1431 = vpop.f32.mrf.mxu0
          %v1432 = vadd.f32 0.0, %v1431
          %1433 = vmatmul.f32.gmra.mxu0 %v1409
          %v1434 = vpop.f32.mrf.mxu0
          %v1435 = vadd.f32 0.0, %v1434
          %1436 = vdwg.mxu0
          %v1437 = vadd.f32 %v1395, %v1432
          %v1438 = vadd.f32 %v1396, %v1435
          %v1439 = vld [vmem:[%s1399 + $0x1] sm:$0xff]
          %v1440 = vld [vmem:[%s1399 + $0x9] sm:$0x7]
          %s1441 = scalar_lea.vmem %s5, 64
          %v1442 = vld [vmem:[%s1441] sm:$0xff]
          %v1443 = vld [vmem:[%s1441 + $0x8] sm:$0x3f]
          %v1445 = vsel %vm1189, %v1439, 0
          %v1448 = vsel %vm1189, %v1440, 0
          %v1451 = vsel %vm1299, %v1443, 0
          %1453 = vmatpush.msra.mxu0 0.0
          %1454 = vmatpush.msra.mxu0 0.0
          %1455 = vmatpush.msra.mxu0 0.0
          %1456 = vmatpush.msra.mxu0 0.0
          %1457 = vmatpush.msra.mxu0 0.0
          %1458 = vmatpush.msra.mxu0 0.0
          %1459 = vmatpush.msra.mxu0 0.0
          %1460 = vmatpush.msra.mxu0 0.0
          %1461 = vmatpush.msra.mxu0 0.0
          %1462 = vmatpush.msra.mxu0 0.0
          %1463 = vmatpush.msra.mxu0 0.0
          %1464 = vmatpush.msra.mxu0 0.0
          %1465 = vmatpush.msra.mxu0 0.0
          %1466 = vmatpush.msra.mxu0 0.0
          %1467 = vmatpush.msra.mxu0 %v1451
          %1468 = vmatpush.msra.mxu0 %v1442
          %1469 = vmatmul.f32.gmra.mxu0 %v1445
          %v1470 = vpop.f32.mrf.mxu0
          %v1471 = vadd.f32 0.0, %v1470
          %1472 = vmatmul.f32.gmra.mxu0 %v1448
          %v1473 = vpop.f32.mrf.mxu0
          %v1474 = vadd.f32 0.0, %v1473
          %1475 = vdwg.mxu0
          %v1476 = vadd.f32 %v1437, %v1471
          %v1477 = vadd.f32 %v1438, %v1474
          %v1478 = vld [vmem:[%s1399 + $0x2] sm:$0xff]
          %v1479 = vld [vmem:[%s1399 + $0xa] sm:$0x7]
          %s1480 = scalar_lea.vmem %s5, 80
          %v1481 = vld [vmem:[%s1480] sm:$0xff]
          %v1482 = vld [vmem:[%s1480 + $0x8] sm:$0x3f]
          %v1484 = vsel %vm1189, %v1478, 0
          %v1487 = vsel %vm1189, %v1479, 0
          %v1490 = vsel %vm1299, %v1482, 0
          %1492 = vmatpush.msra.mxu0 0.0
          %1493 = vmatpush.msra.mxu0 0.0
          %1494 = vmatpush.msra.mxu0 0.0
          %1495 = vmatpush.msra.mxu0 0.0
          %1496 = vmatpush.msra.mxu0 0.0
          %1497 = vmatpush.msra.mxu0 0.0
          %1498 = vmatpush.msra.mxu0 0.0
          %1499 = vmatpush.msra.mxu0 0.0
          %1500 = vmatpush.msra.mxu0 0.0
          %1501 = vmatpush.msra.mxu0 0.0
          %1502 = vmatpush.msra.mxu0 0.0
          %1503 = vmatpush.msra.mxu0 0.0
          %1504 = vmatpush.msra.mxu0 0.0
          %1505 = vmatpush.msra.mxu0 0.0
          %1506 = vmatpush.msra.mxu0 %v1490
          %1507 = vmatpush.msra.mxu0 %v1481
          %1508 = vmatmul.f32.gmra.mxu0 %v1484
          %v1509 = vpop.f32.mrf.mxu0
          %v1510 = vadd.f32 0.0, %v1509
          %1511 = vmatmul.f32.gmra.mxu0 %v1487
          %v1512 = vpop.f32.mrf.mxu0
          %v1513 = vadd.f32 0.0, %v1512
          %1514 = vdwg.mxu0
          %v1515 = vadd.f32 %v1476, %v1510
          %v1516 = vadd.f32 %v1477, %v1513
          %s1517 = sadd.s32 %s1277, 2
          %s1518 = smul.u32 %s1517, 16
          %s1519 = scalar_lea.vmem [#allocation4], %s1518
          %v1520 = vld [vmem:[%s1519] sm:$0xff]
          %v1521 = vld [vmem:[%s1519 + $0x8] sm:$0x7]
          %s1522 = scalar_lea.vmem %s5, 96
          %v1523 = vld [vmem:[%s1522] sm:$0xff]
          %v1524 = vld [vmem:[%s1522 + $0x8] sm:$0x3f]
          %v1526 = vsel %vm1189, %v1520, 0
          %v1529 = vsel %vm1189, %v1521, 0
          %v1532 = vsel %vm1299, %v1524, 0
          %1534 = vmatpush.msra.mxu0 0.0
          %1535 = vmatpush.msra.mxu0 0.0
          %1536 = vmatpush.msra.mxu0 0.0
          %1537 = vmatpush.msra.mxu0 0.0
          %1538 = vmatpush.msra.mxu0 0.0
          %1539 = vmatpush.msra.mxu0 0.0
          %1540 = vmatpush.msra.mxu0 0.0
          %1541 = vmatpush.msra.mxu0 0.0
          %1542 = vmatpush.msra.mxu0 0.0
          %1543 = vmatpush.msra.mxu0 0.0
          %1544 = vmatpush.msra.mxu0 0.0
          %1545 = vmatpush.msra.mxu0 0.0
          %1546 = vmatpush.msra.mxu0 0.0
          %1547 = vmatpush.msra.mxu0 0.0
          %1548 = vmatpush.msra.mxu0 %v1532
          %1549 = vmatpush.msra.mxu0 %v1523
          %1550 = vmatmul.f32.gmra.mxu0 %v1526
          %v1551 = vpop.f32.mrf.mxu0
          %v1552 = vadd.f32 0.0, %v1551
          %1553 = vmatmul.f32.gmra.mxu0 %v1529
          %v1554 = vpop.f32.mrf.mxu0
          %v1555 = vadd.f32 0.0, %v1554
          %1556 = vdwg.mxu0
          %v1557 = vadd.f32 %v1515, %v1552
          %v1558 = vadd.f32 %v1516, %v1555
          %v1559 = vld [vmem:[%s1519 + $0x1] sm:$0xff]
          %v1560 = vld [vmem:[%s1519 + $0x9] sm:$0x7]
          %s1561 = scalar_lea.vmem %s5, 112
          %v1562 = vld [vmem:[%s1561] sm:$0xff]
          %v1563 = vld [vmem:[%s1561 + $0x8] sm:$0x3f]
          %v1565 = vsel %vm1189, %v1559, 0
          %v1568 = vsel %vm1189, %v1560, 0
          %v1571 = vsel %vm1299, %v1563, 0
          %1573 = vmatpush.msra.mxu0 0.0
          %1574 = vmatpush.msra.mxu0 0.0
          %1575 = vmatpush.msra.mxu0 0.0
          %1576 = vmatpush.msra.mxu0 0.0
          %1577 = vmatpush.msra.mxu0 0.0
          %1578 = vmatpush.msra.mxu0 0.0
          %1579 = vmatpush.msra.mxu0 0.0
          %1580 = vmatpush.msra.mxu0 0.0
          %1581 = vmatpush.msra.mxu0 0.0
          %1582 = vmatpush.msra.mxu0 0.0
          %1583 = vmatpush.msra.mxu0 0.0
          %1584 = vmatpush.msra.mxu0 0.0
          %1585 = vmatpush.msra.mxu0 0.0
          %1586 = vmatpush.msra.mxu0 0.0
          %1587 = vmatpush.msra.mxu0 %v1571
          %1588 = vmatpush.msra.mxu0 %v1562
          %1589 = vmatmul.f32.gmra.mxu0 %v1565
          %v1590 = vpop.f32.mrf.mxu0
          %v1591 = vadd.f32 0.0, %v1590
          %1592 = vmatmul.f32.gmra.mxu0 %v1568
          %v1593 = vpop.f32.mrf.mxu0
          %v1594 = vadd.f32 0.0, %v1593
          %1595 = vdwg.mxu0
          %v1596 = vadd.f32 %v1557, %v1591
          %v1597 = vadd.f32 %v1558, %v1594
          %v1598 = vld [vmem:[%s1519 + $0x2] sm:$0xff]
          %v1599 = vld [vmem:[%s1519 + $0xa] sm:$0x7]
          %s1600 = scalar_lea.vmem %s5, 128
          %v1601 = vld [vmem:[%s1600] sm:$0xff]
          %v1602 = vld [vmem:[%s1600 + $0x8] sm:$0x3f]
          %v1604 = vsel %vm1189, %v1598, 0
          %v1607 = vsel %vm1189, %v1599, 0
          %v1610 = vsel %vm1299, %v1602, 0
          %1612 = vmatpush.msra.mxu0 0.0
          %1613 = vmatpush.msra.mxu0 0.0
          %1614 = vmatpush.msra.mxu0 0.0
          %1615 = vmatpush.msra.mxu0 0.0
          %1616 = vmatpush.msra.mxu0 0.0
          %1617 = vmatpush.msra.mxu0 0.0
          %1618 = vmatpush.msra.mxu0 0.0
          %1619 = vmatpush.msra.mxu0 0.0
          %1620 = vmatpush.msra.mxu0 0.0
          %1621 = vmatpush.msra.mxu0 0.0
          %1622 = vmatpush.msra.mxu0 0.0
          %1623 = vmatpush.msra.mxu0 0.0
          %1624 = vmatpush.msra.mxu0 0.0
          %1625 = vmatpush.msra.mxu0 0.0
          %1626 = vmatpush.msra.mxu0 %v1610
          %1627 = vmatpush.msra.mxu0 %v1601
          %1628 = vmatmul.f32.gmra.mxu0 %v1604
          %v1629 = vpop.f32.mrf.mxu0
          %v1630 = vadd.f32 0.0, %v1629
          %1631 = vmatmul.f32.gmra.mxu0 %v1607
          %v1632 = vpop.f32.mrf.mxu0
          %v1633 = vadd.f32 0.0, %v1632
          %1634 = vdwg.mxu0
          %v1635 = vadd.f32 %v1596, %v1630
          %v1636 = vadd.f32 %v1597, %v1633
          %v1638 = vperm.slane %v1275, 0
          %v1640 = vadd.f32 %v1635, %v1638
          %v1641 = vadd.f32 %v1636, %v1638
          %s1642 = scalar_lea.vmem [#allocation3], %s1282
          %v1643 = vld [vmem:[%s1642] sm:$0xff]
          %v1644 = vld [vmem:[%s1642 + $0x8] sm:$0x7]
          %v1645 = vadd.f32 %v1640, %v1643
          %v1646 = vadd.f32 %v1641, %v1644
          %vm1647 = vcmask 228352
          %1648 = vst.msk [vmem:[%s1642] sm:$0xff] %vm1647, %v1645
          %vm1649 = vcmask 223232
          %1650 = vst.msk [vmem:[%s1642 + $0x8] sm:$0x7] %vm1649, %v1646
        $region126: #{r_net_forward.1} parent=99 // loop_footer
          %s1281 = sadd.s32 1, %s1277
        $region127: #{r_net_forward.1} parent=99 // loop_footer_branch
          %1276 = sbr.rel target = $region123
        $region128: #{r_net_forward.1} parent=99 // loop_exit
          _
        %v1651 = vld [vmem:[%s8] sm:$0x1]
        loop: start=0, step=1, limit=9
        $region129: #{r_net_forward.1} parent=99 // loop_pre_header
          _
        $region130: #{r_net_forward.1} parent=99 // loop_header
          %s1653 = sphi 0, %s1657
          %p1654 = scmp.ge.s32.totalorder %s1653, 9
        $region131: #{r_net_forward.1} parent=99 // loop_header_branch
          %1656 = sbr.rel (%p1654) target = $region135
        $region132: #{r_net_forward.1} parent=99 // loop_body
          %s1658 = smul.u32 %s1653, 16
          %s1659 = scalar_lea.vmem [#allocation3], %s1658
          %v1660 = vld [vmem:[%s1659] sm:$0xff]
          %v1661 = vld [vmem:[%s1659 + $0x8] sm:$0x1]
          %v1662 = vld [vmem:[%s7] sm:$0xff]
          %v1663 = vld [vmem:[%s7 + $0x8] sm:$0xff]
          %v1664 = vld [vmem:[%s7 + $0x10] sm:$0xff]
          %v1665 = vld [vmem:[%s7 + $0x18] sm:$0xf]
          %v1666 = vld [vmem:[%s1659 + $0x1] sm:$0xff]
          %v1667 = vld [vmem:[%s1659 + $0x9] sm:$0x1]
          %s1668 = scalar_lea.vmem %s7, 32
          %v1669 = vld [vmem:[%s1668] sm:$0xff]
          %v1670 = vld [vmem:[%s1668 + $0x8] sm:$0xff]
          %v1671 = vld [vmem:[%s1668 + $0x10] sm:$0xff]
          %v1672 = vld [vmem:[%s1668 + $0x18] sm:$0xf]
          %vm1673 = vcmask 228352
          %v1675 = vsel %vm1673, %v1666, 0
          %v1678 = vsel %vm1673, %v1667, 0
          %vm1680 = vcmask 1043456
          %v1682 = vsel %vm1680, %v1672, 0
          %1684 = vmatpush.msra.mxu0 0.0
          %1685 = vmatpush.msra.mxu0 0.0
          %1686 = vmatpush.msra.mxu0 0.0
          %1687 = vmatpush.msra.mxu0 0.0
          %1688 = vmatpush.msra.mxu0 0.0
          %1689 = vmatpush.msra.mxu0 0.0
          %1690 = vmatpush.msra.mxu0 0.0
          %1691 = vmatpush.msra.mxu0 0.0
          %1692 = vmatpush.msra.mxu0 0.0
          %1693 = vmatpush.msra.mxu0 0.0
          %1694 = vmatpush.msra.mxu0 0.0
          %1695 = vmatpush.msra.mxu0 0.0
          %1696 = vmatpush.msra.mxu0 %v1682
          %1697 = vmatpush.msra.mxu0 %v1671
          %1698 = vmatpush.msra.mxu0 %v1670
          %1699 = vmatpush.msra.mxu0 %v1669
          %1700 = vmatmul.f32.gmra.mxu0 %v1675
          %v1701 = vpop.f32.mrf.mxu0
          %v1702 = vadd.f32 0.0, %v1701
          %1703 = vmatmul.f32.gmra.mxu0 %v1678
          %v1704 = vpop.f32.mrf.mxu0
          %v1705 = vadd.f32 0.0, %v1704
          %1706 = vdwg.mxu0
          %v1708 = vsel %vm1673, %v1660, 0
          %v1711 = vsel %vm1673, %v1661, 0
          %v1714 = vsel %vm1680, %v1665, 0
          %1716 = vmatpush.msra.mxu0 0.0
          %1717 = vmatpush.msra.mxu0 0.0
          %1718 = vmatpush.msra.mxu0 0.0
          %1719 = vmatpush.msra.mxu0 0.0
          %1720 = vmatpush.msra.mxu0 0.0
          %1721 = vmatpush.msra.mxu0 0.0
          %1722 = vmatpush.msra.mxu0 0.0
          %1723 = vmatpush.msra.mxu0 0.0
          %1724 = vmatpush.msra.mxu0 0.0
          %1725 = vmatpush.msra.mxu0 0.0
          %1726 = vmatpush.msra.mxu0 0.0
          %1727 = vmatpush.msra.mxu0 0.0
          %1728 = vmatpush.msra.mxu0 %v1714
          %1729 = vmatpush.msra.mxu0 %v1664
          %1730 = vmatpush.msra.mxu0 %v1663
          %1731 = vmatpush.msra.mxu0 %v1662
          %1732 = vmatmul.f32.gmra.mxu0 %v1708
          %v1733 = vpop.f32.mrf.mxu0
          %v1734 = vadd.f32 %v1702, %v1733
          %1735 = vmatmul.f32.gmra.mxu0 %v1711
          %v1736 = vpop.f32.mrf.mxu0
          %v1737 = vadd.f32 %v1705, %v1736
          %1738 = vdwg.mxu0
          %v1739 = vld [vmem:[%s1659 + $0x2] sm:$0xff]
          %v1740 = vld [vmem:[%s1659 + $0xa] sm:$0x1]
          %s1741 = scalar_lea.vmem %s7, 64
          %v1742 = vld [vmem:[%s1741] sm:$0xff]
          %v1743 = vld [vmem:[%s1741 + $0x8] sm:$0xff]
          %v1744 = vld [vmem:[%s1741 + $0x10] sm:$0xff]
          %v1745 = vld [vmem:[%s1741 + $0x18] sm:$0xf]
          %v1747 = vsel %vm1673, %v1739, 0
          %v1750 = vsel %vm1673, %v1740, 0
          %v1753 = vsel %vm1680, %v1745, 0
          %1755 = vmatpush.msra.mxu0 0.0
          %1756 = vmatpush.msra.mxu0 0.0
          %1757 = vmatpush.msra.mxu0 0.0
          %1758 = vmatpush.msra.mxu0 0.0
          %1759 = vmatpush.msra.mxu0 0.0
          %1760 = vmatpush.msra.mxu0 0.0
          %1761 = vmatpush.msra.mxu0 0.0
          %1762 = vmatpush.msra.mxu0 0.0
          %1763 = vmatpush.msra.mxu0 0.0
          %1764 = vmatpush.msra.mxu0 0.0
          %1765 = vmatpush.msra.mxu0 0.0
          %1766 = vmatpush.msra.mxu0 0.0
          %1767 = vmatpush.msra.mxu0 %v1753
          %1768 = vmatpush.msra.mxu0 %v1744
          %1769 = vmatpush.msra.mxu0 %v1743
          %1770 = vmatpush.msra.mxu0 %v1742
          %1771 = vmatmul.f32.gmra.mxu0 %v1747
          %v1772 = vpop.f32.mrf.mxu0
          %v1773 = vadd.f32 0.0, %v1772
          %1774 = vmatmul.f32.gmra.mxu0 %v1750
          %v1775 = vpop.f32.mrf.mxu0
          %v1776 = vadd.f32 0.0, %v1775
          %1777 = vdwg.mxu0
          %v1778 = vadd.f32 %v1734, %v1773
          %v1779 = vadd.f32 %v1737, %v1776
          %s1780 = sadd.s32 %s1653, 1
          %s1781 = smul.u32 %s1780, 16
          %s1782 = scalar_lea.vmem [#allocation3], %s1781
          %v1783 = vld [vmem:[%s1782] sm:$0xff]
          %v1784 = vld [vmem:[%s1782 + $0x8] sm:$0x1]
          %s1785 = scalar_lea.vmem %s7, 96
          %v1786 = vld [vmem:[%s1785] sm:$0xff]
          %v1787 = vld [vmem:[%s1785 + $0x8] sm:$0xff]
          %v1788 = vld [vmem:[%s1785 + $0x10] sm:$0xff]
          %v1789 = vld [vmem:[%s1785 + $0x18] sm:$0xf]
          %v1791 = vsel %vm1673, %v1783, 0
          %v1794 = vsel %vm1673, %v1784, 0
          %v1797 = vsel %vm1680, %v1789, 0
          %1799 = vmatpush.msra.mxu0 0.0
          %1800 = vmatpush.msra.mxu0 0.0
          %1801 = vmatpush.msra.mxu0 0.0
          %1802 = vmatpush.msra.mxu0 0.0
          %1803 = vmatpush.msra.mxu0 0.0
          %1804 = vmatpush.msra.mxu0 0.0
          %1805 = vmatpush.msra.mxu0 0.0
          %1806 = vmatpush.msra.mxu0 0.0
          %1807 = vmatpush.msra.mxu0 0.0
          %1808 = vmatpush.msra.mxu0 0.0
          %1809 = vmatpush.msra.mxu0 0.0
          %1810 = vmatpush.msra.mxu0 0.0
          %1811 = vmatpush.msra.mxu0 %v1797
          %1812 = vmatpush.msra.mxu0 %v1788
          %1813 = vmatpush.msra.mxu0 %v1787
          %1814 = vmatpush.msra.mxu0 %v1786
          %1815 = vmatmul.f32.gmra.mxu0 %v1791
          %v1816 = vpop.f32.mrf.mxu0
          %v1817 = vadd.f32 0.0, %v1816
          %1818 = vmatmul.f32.gmra.mxu0 %v1794
          %v1819 = vpop.f32.mrf.mxu0
          %v1820 = vadd.f32 0.0, %v1819
          %1821 = vdwg.mxu0
          %v1822 = vadd.f32 %v1778, %v1817
          %v1823 = vadd.f32 %v1779, %v1820
          %v1824 = vld [vmem:[%s1782 + $0x1] sm:$0xff]
          %v1825 = vld [vmem:[%s1782 + $0x9] sm:$0x1]
          %s1826 = scalar_lea.vmem %s7, 128
          %v1827 = vld [vmem:[%s1826] sm:$0xff]
          %v1828 = vld [vmem:[%s1826 + $0x8] sm:$0xff]
          %v1829 = vld [vmem:[%s1826 + $0x10] sm:$0xff]
          %v1830 = vld [vmem:[%s1826 + $0x18] sm:$0xf]
          %v1832 = vsel %vm1673, %v1824, 0
          %v1835 = vsel %vm1673, %v1825, 0
          %v1838 = vsel %vm1680, %v1830, 0
          %1840 = vmatpush.msra.mxu0 0.0
          %1841 = vmatpush.msra.mxu0 0.0
          %1842 = vmatpush.msra.mxu0 0.0
          %1843 = vmatpush.msra.mxu0 0.0
          %1844 = vmatpush.msra.mxu0 0.0
          %1845 = vmatpush.msra.mxu0 0.0
          %1846 = vmatpush.msra.mxu0 0.0
          %1847 = vmatpush.msra.mxu0 0.0
          %1848 = vmatpush.msra.mxu0 0.0
          %1849 = vmatpush.msra.mxu0 0.0
          %1850 = vmatpush.msra.mxu0 0.0
          %1851 = vmatpush.msra.mxu0 0.0
          %1852 = vmatpush.msra.mxu0 %v1838
          %1853 = vmatpush.msra.mxu0 %v1829
          %1854 = vmatpush.msra.mxu0 %v1828
          %1855 = vmatpush.msra.mxu0 %v1827
          %1856 = vmatmul.f32.gmra.mxu0 %v1832
          %v1857 = vpop.f32.mrf.mxu0
          %v1858 = vadd.f32 0.0, %v1857
          %1859 = vmatmul.f32.gmra.mxu0 %v1835
          %v1860 = vpop.f32.mrf.mxu0
          %v1861 = vadd.f32 0.0, %v1860
          %1862 = vdwg.mxu0
          %v1863 = vadd.f32 %v1822, %v1858
          %v1864 = vadd.f32 %v1823, %v1861
          %v1865 = vld [vmem:[%s1782 + $0x2] sm:$0xff]
          %v1866 = vld [vmem:[%s1782 + $0xa] sm:$0x1]
          %s1867 = scalar_lea.vmem %s7, 160
          %v1868 = vld [vmem:[%s1867] sm:$0xff]
          %v1869 = vld [vmem:[%s1867 + $0x8] sm:$0xff]
          %v1870 = vld [vmem:[%s1867 + $0x10] sm:$0xff]
          %v1871 = vld [vmem:[%s1867 + $0x18] sm:$0xf]
          %v1873 = vsel %vm1673, %v1865, 0
          %v1876 = vsel %vm1673, %v1866, 0
          %v1879 = vsel %vm1680, %v1871, 0
          %1881 = vmatpush.msra.mxu0 0.0
          %1882 = vmatpush.msra.mxu0 0.0
          %1883 = vmatpush.msra.mxu0 0.0
          %1884 = vmatpush.msra.mxu0 0.0
          %1885 = vmatpush.msra.mxu0 0.0
          %1886 = vmatpush.msra.mxu0 0.0
          %1887 = vmatpush.msra.mxu0 0.0
          %1888 = vmatpush.msra.mxu0 0.0
          %1889 = vmatpush.msra.mxu0 0.0
          %1890 = vmatpush.msra.mxu0 0.0
          %1891 = vmatpush.msra.mxu0 0.0
          %1892 = vmatpush.msra.mxu0 0.0
          %1893 = vmatpush.msra.mxu0 %v1879
          %1894 = vmatpush.msra.mxu0 %v1870
          %1895 = vmatpush.msra.mxu0 %v1869
          %1896 = vmatpush.msra.mxu0 %v1868
          %1897 = vmatmul.f32.gmra.mxu0 %v1873
          %v1898 = vpop.f32.mrf.mxu0
          %v1899 = vadd.f32 0.0, %v1898
          %1900 = vmatmul.f32.gmra.mxu0 %v1876
          %v1901 = vpop.f32.mrf.mxu0
          %v1902 = vadd.f32 0.0, %v1901
          %1903 = vdwg.mxu0
          %v1904 = vadd.f32 %v1863, %v1899
          %v1905 = vadd.f32 %v1864, %v1902
          %s1906 = sadd.s32 %s1653, 2
          %s1907 = smul.u32 %s1906, 16
          %s1908 = scalar_lea.vmem [#allocation3], %s1907
          %v1909 = vld [vmem:[%s1908] sm:$0xff]
          %v1910 = vld [vmem:[%s1908 + $0x8] sm:$0x1]
          %s1911 = scalar_lea.vmem %s7, 192
          %v1912 = vld [vmem:[%s1911] sm:$0xff]
          %v1913 = vld [vmem:[%s1911 + $0x8] sm:$0xff]
          %v1914 = vld [vmem:[%s1911 + $0x10] sm:$0xff]
          %v1915 = vld [vmem:[%s1911 + $0x18] sm:$0xf]
          %v1917 = vsel %vm1673, %v1909, 0
          %v1920 = vsel %vm1673, %v1910, 0
          %v1923 = vsel %vm1680, %v1915, 0
          %1925 = vmatpush.msra.mxu0 0.0
          %1926 = vmatpush.msra.mxu0 0.0
          %1927 = vmatpush.msra.mxu0 0.0
          %1928 = vmatpush.msra.mxu0 0.0
          %1929 = vmatpush.msra.mxu0 0.0
          %1930 = vmatpush.msra.mxu0 0.0
          %1931 = vmatpush.msra.mxu0 0.0
          %1932 = vmatpush.msra.mxu0 0.0
          %1933 = vmatpush.msra.mxu0 0.0
          %1934 = vmatpush.msra.mxu0 0.0
          %1935 = vmatpush.msra.mxu0 0.0
          %1936 = vmatpush.msra.mxu0 0.0
          %1937 = vmatpush.msra.mxu0 %v1923
          %1938 = vmatpush.msra.mxu0 %v1914
          %1939 = vmatpush.msra.mxu0 %v1913
          %1940 = vmatpush.msra.mxu0 %v1912
          %1941 = vmatmul.f32.gmra.mxu0 %v1917
          %v1942 = vpop.f32.mrf.mxu0
          %v1943 = vadd.f32 0.0, %v1942
          %1944 = vmatmul.f32.gmra.mxu0 %v1920
          %v1945 = vpop.f32.mrf.mxu0
          %v1946 = vadd.f32 0.0, %v1945
          %1947 = vdwg.mxu0
          %v1948 = vadd.f32 %v1904, %v1943
          %v1949 = vadd.f32 %v1905, %v1946
          %v1950 = vld [vmem:[%s1908 + $0x1] sm:$0xff]
          %v1951 = vld [vmem:[%s1908 + $0x9] sm:$0x1]
          %s1952 = scalar_lea.vmem %s7, 224
          %v1953 = vld [vmem:[%s1952] sm:$0xff]
          %v1954 = vld [vmem:[%s1952 + $0x8] sm:$0xff]
          %v1955 = vld [vmem:[%s1952 + $0x10] sm:$0xff]
          %v1956 = vld [vmem:[%s1952 + $0x18] sm:$0xf]
          %v1958 = vsel %vm1673, %v1950, 0
          %v1961 = vsel %vm1673, %v1951, 0
          %v1964 = vsel %vm1680, %v1956, 0
          %1966 = vmatpush.msra.mxu0 0.0
          %1967 = vmatpush.msra.mxu0 0.0
          %1968 = vmatpush.msra.mxu0 0.0
          %1969 = vmatpush.msra.mxu0 0.0
          %1970 = vmatpush.msra.mxu0 0.0
          %1971 = vmatpush.msra.mxu0 0.0
          %1972 = vmatpush.msra.mxu0 0.0
          %1973 = vmatpush.msra.mxu0 0.0
          %1974 = vmatpush.msra.mxu0 0.0
          %1975 = vmatpush.msra.mxu0 0.0
          %1976 = vmatpush.msra.mxu0 0.0
          %1977 = vmatpush.msra.mxu0 0.0
          %1978 = vmatpush.msra.mxu0 %v1964
          %1979 = vmatpush.msra.mxu0 %v1955
          %1980 = vmatpush.msra.mxu0 %v1954
          %1981 = vmatpush.msra.mxu0 %v1953
          %1982 = vmatmul.f32.gmra.mxu0 %v1958
          %v1983 = vpop.f32.mrf.mxu0
          %v1984 = vadd.f32 0.0, %v1983
          %1985 = vmatmul.f32.gmra.mxu0 %v1961
          %v1986 = vpop.f32.mrf.mxu0
          %v1987 = vadd.f32 0.0, %v1986
          %1988 = vdwg.mxu0
          %v1989 = vadd.f32 %v1948, %v1984
          %v1990 = vadd.f32 %v1949, %v1987
          %v1991 = vld [vmem:[%s1908 + $0x2] sm:$0xff]
          %v1992 = vld [vmem:[%s1908 + $0xa] sm:$0x1]
          %s1993 = scalar_lea.vmem %s7, 256
          %v1994 = vld [vmem:[%s1993] sm:$0xff]
          %v1995 = vld [vmem:[%s1993 + $0x8] sm:$0xff]
          %v1996 = vld [vmem:[%s1993 + $0x10] sm:$0xff]
          %v1997 = vld [vmem:[%s1993 + $0x18] sm:$0xf]
          %v1999 = vsel %vm1673, %v1991, 0
          %v2002 = vsel %vm1673, %v1992, 0
          %v2005 = vsel %vm1680, %v1997, 0
          %2007 = vmatpush.msra.mxu0 0.0
          %2008 = vmatpush.msra.mxu0 0.0
          %2009 = vmatpush.msra.mxu0 0.0
          %2010 = vmatpush.msra.mxu0 0.0
          %2011 = vmatpush.msra.mxu0 0.0
          %2012 = vmatpush.msra.mxu0 0.0
          %2013 = vmatpush.msra.mxu0 0.0
          %2014 = vmatpush.msra.mxu0 0.0
          %2015 = vmatpush.msra.mxu0 0.0
          %2016 = vmatpush.msra.mxu0 0.0
          %2017 = vmatpush.msra.mxu0 0.0
          %2018 = vmatpush.msra.mxu0 0.0
          %2019 = vmatpush.msra.mxu0 %v2005
          %2020 = vmatpush.msra.mxu0 %v1996
          %2021 = vmatpush.msra.mxu0 %v1995
          %2022 = vmatpush.msra.mxu0 %v1994
          %2023 = vmatmul.f32.gmra.mxu0 %v1999
          %v2024 = vpop.f32.mrf.mxu0
          %v2025 = vadd.f32 0.0, %v2024
          %2026 = vmatmul.f32.gmra.mxu0 %v2002
          %v2027 = vpop.f32.mrf.mxu0
          %v2028 = vadd.f32 0.0, %v2027
          %2029 = vdwg.mxu0
          %v2030 = vadd.f32 %v1989, %v2025
          %v2031 = vadd.f32 %v1990, %v2028
          %v2033 = vperm.slane %v1651, 0
          %v2035 = vadd.f32 %v2030, %v2033
          %v2036 = vadd.f32 %v2031, %v2033
          %vm2037 = vcmp.gt.f32.partialorder %v2035, 0.0
          %vm2038 = vcmp.gt.f32.partialorder %v2036, 0.0
          %v2040 = vperm.slane %v663, 0
          %2041 = vset.pattern.permute.xlu0 1
          %2042 = vperm.xlu0 %2041, %v2040
          %v2043 = vpop.permute.xlu0 %2042
          %v2045 = vmul.f32 %v2043, %v2035
          %v2046 = vmul.f32 %v2043, %v2036
          %v2047 = vsel %vm2037, %v2035, %v2045
          %v2048 = vsel %vm2038, %v2036, %v2046
          %s2049 = scalar_lea.vmem [#allocation5], %s1658
          %vm2050 = vcmask 392192
          %2051 = vst.msk [vmem:[%s2049] sm:$0xff] %vm2050, %v2047
          %vm2052 = vcmask 385024
          %2053 = vst.msk [vmem:[%s2049 + $0x8] sm:$0x1] %vm2052, %v2048
        $region133: #{r_net_forward.1} parent=99 // loop_footer
          %s1657 = sadd.s32 1, %s1653
        $region134: #{r_net_forward.1} parent=99 // loop_footer_branch
          %1652 = sbr.rel target = $region130
        $region135: #{r_net_forward.1} parent=99 // loop_exit
          _
        loop: start=0, step=1, limit=4
        $region136: #{r_net_forward.1} parent=99 // loop_pre_header
          _
        $region137: #{r_net_forward.1} parent=99 // loop_header
          %s2055 = sphi 0, %s2059
          %p2056 = scmp.ge.s32.totalorder %s2055, 4
        $region138: #{r_net_forward.1} parent=99 // loop_header_branch
          %2058 = sbr.rel (%p2056) target = $region142
        $region139: #{r_net_forward.1} parent=99 // loop_body
          %s2060 = smul.u32 %s2055, 2
          %s2061 = smul.u32 %s2060, 16
          %s2062 = scalar_lea.vmem [#allocation5], %s2061
          %v2063 = vld [vmem:[%s2062] sm:$0xff]
          %v2064 = vld [vmem:[%s2062 + $0x8] sm:$0x1]
          %s2065 = sadd.s32 %s2060, 1
          %s2066 = smul.u32 %s2065, 16
          %s2067 = scalar_lea.vmem [#allocation5], %s2066
          %v2068 = vld [vmem:[%s2067] sm:$0xff]
          %v2069 = vld [vmem:[%s2067 + $0x8] sm:$0x1]
          %v2070 = vmax.f32 %v2063, %v2068
          %v2071 = vmax.f32 %v2064, %v2069
          %s2072 = sadd.s32 %s2060, 2
          %s2073 = smul.u32 %s2072, 16
          %s2074 = scalar_lea.vmem [#allocation5], %s2073
          %v2075 = vld [vmem:[%s2074] sm:$0xff]
          %v2076 = vld [vmem:[%s2074 + $0x8] sm:$0x1]
          %v2077 = vmax.f32 %v2070, %v2075
          %v2078 = vmax.f32 %v2071, %v2076
          %v2080 = vrot.slane %v2077, 1
          %v2082 = vmax.f32 %v2077, %v2080
          %vm2084 = vcmask 1045504
          %v2085 = vrot.slane %v2077, 2
          %v2086 = vrot.slane %v2078, 2
          %v2087 = vsel %vm2084, %v2085, %v2086
          %v2089 = vmax.f32 %v2082, %v2087
          %s2090 = smul.u32 %s2055, 4
          %s2091 = scalar_lea.vmem [#allocation6], %s2090
          %vm2092 = vcmask 385024
          %2093 = vst.msk [vmem:[%s2091] sm:$0x1] %vm2092, %v2089
          %vm2094 = vcmask 387074
          %2095 = vst.msk [vmem:[%s2091 - $0x1] sm:$0x4] %vm2094, %v2089
          %vm2096 = vcmask 389124
          %2097 = vst.msk [vmem:[%s2091 - $0x2] sm:$0x10] %vm2096, %v2089
          %vm2098 = vcmask 391174
          %2099 = vst.msk [vmem:[%s2091 - $0x3] sm:$0x40] %vm2098, %v2089
        $region140: #{r_net_forward.1} parent=99 // loop_footer
          %s2059 = sadd.s32 1, %s2055
        $region141: #{r_net_forward.1} parent=99 // loop_footer_branch
          %2054 = sbr.rel target = $region137
        $region142: #{r_net_forward.1} parent=99 // loop_exit
          _
        %vm2100 = vcmask 193536
        %2101 = vst.msk [vmem:[#allocation7] sm:$0x3f] %vm2100, 0.0
        %2102 = vst.msk [vmem:[#allocation7 + $0x8] sm:$0x3f] %vm2100, 0.0
        %2103 = vst.msk [vmem:[#allocation7 + $0x10] sm:$0x3f] %vm2100, 0.0
        %2104 = vst.msk [vmem:[#allocation7 + $0x18] sm:$0x3f] %vm2100, 0.0
        %2105 = vst.msk [vmem:[#allocation7 + $0x20] sm:$0x3f] %vm2100, 0.0
        %2106 = vst.msk [vmem:[#allocation7 + $0x28] sm:$0x3f] %vm2100, 0.0
        %v2107 = vld [vmem:[%s10] sm:$0x1]
        loop: start=0, step=1, limit=4
        $region143: #{r_net_forward.1} parent=99 // loop_pre_header
          _
        $region144: #{r_net_forward.1} parent=99 // loop_header
          %s2109 = sphi 0, %s2113
          %p2110 = scmp.ge.s32.totalorder %s2109, 4
        $region145: #{r_net_forward.1} parent=99 // loop_header_branch
          %2112 = sbr.rel (%p2110) target = $region149
        $region146: #{r_net_forward.1} parent=99 // loop_body
          %s2114 = smul.u32 %s2109, 4
          %s2115 = scalar_lea.vmem [#allocation6], %s2114
          %v2116 = vld [vmem:[%s2115] sm:$0xf]
          %v2117 = vld [vmem:[%s9] sm:$0xff]
          %v2118 = vld [vmem:[%s9 + $0x8] sm:$0xff]
          %v2119 = vld [vmem:[%s9 + $0x10] sm:$0xff]
          %v2120 = vld [vmem:[%s9 + $0x18] sm:$0xff]
          %v2121 = vld [vmem:[%s9 + $0x20] sm:$0xff]
          %v2122 = vld [vmem:[%s9 + $0x28] sm:$0xff]
          %v2124 = vperm.slane %v2107, 0
          %vm2126 = vcmask 392192
          %v2128 = vsel %vm2126, %v2116, 0
          %2130 = vmatpush.msra.mxu0 0.0
          %2131 = vmatpush.msra.mxu0 0.0
          %2132 = vmatpush.msra.mxu0 0.0
          %2133 = vmatpush.msra.mxu0 0.0
          %2134 = vmatpush.msra.mxu0 0.0
          %2135 = vmatpush.msra.mxu0 0.0
          %2136 = vmatpush.msra.mxu0 0.0
          %2137 = vmatpush.msra.mxu0 0.0
          %2138 = vmatpush.msra.mxu0 0.0
          %2139 = vmatpush.msra.mxu0 0.0
          %2140 = vmatpush.msra.mxu0 %v2122
          %2141 = vmatpush.msra.mxu0 %v2121
          %2142 = vmatpush.msra.mxu0 %v2120
          %2143 = vmatpush.msra.mxu0 %v2119
          %2144 = vmatpush.msra.mxu0 %v2118
          %2145 = vmatpush.msra.mxu0 %v2117
          %2146 = vmatmul.f32.gmra.mxu0 %v2128
          %v2147 = vpop.f32.mrf.mxu0
          %v2148 = vadd.f32 %v2124, %v2147
          %2149 = vdwg.mxu0
          %s2150 = sadd.s32 %s2109, 1
          %s2151 = smul.u32 %s2150, 8
          %s2152 = scalar_lea.vmem [#allocation7], %s2151
          %vm2153 = vcmask 191488
          %2154 = vst.msk [vmem:[%s2152 + $0x1] sm:$0xf] %vm2153, %v2148
        $region147: #{r_net_forward.1} parent=99 // loop_footer
          %s2113 = sadd.s32 1, %s2109
        $region148: #{r_net_forward.1} parent=99 // loop_footer_branch
          %2108 = sbr.rel target = $region144
        $region149: #{r_net_forward.1} parent=99 // loop_exit
          _
        %v2155 = vld [vmem:[%s12] sm:$0x1]
        loop: start=0, step=1, limit=4
        $region150: #{r_net_forward.1} parent=99 // loop_pre_header
          _
        $region151: #{r_net_forward.1} parent=99 // loop_header
          %s2157 = sphi 0, %s2161
          %p2158 = scmp.ge.s32.totalorder %s2157, 4
        $region152: #{r_net_forward.1} parent=99 // loop_header_branch
          %2160 = sbr.rel (%p2158) target = $region156
        $region153: #{r_net_forward.1} parent=99 // loop_body
          %s2162 = smul.u32 %s2157, 8
          %s2163 = scalar_lea.vmem [#allocation7], %s2162
          %v2164 = vld [vmem:[%s2163] sm:$0xf]
          %v2165 = vld [vmem:[%s11] sm:$0xff]
          %v2166 = vld [vmem:[%s11 + $0x8] sm:$0xff]
          %v2167 = vld [vmem:[%s11 + $0x10] sm:$0xff]
          %v2168 = vld [vmem:[%s2163 + $0x1] sm:$0xf]
          %s2169 = scalar_lea.vmem %s11, 24
          %v2170 = vld [vmem:[%s2169] sm:$0xff]
          %v2171 = vld [vmem:[%s2169 + $0x8] sm:$0xff]
          %v2172 = vld [vmem:[%s2169 + $0x10] sm:$0xff]
          %vm2173 = vcmask 195584
          %v2175 = vsel %vm2173, %v2168, 0
          %2177 = vmatpush.msra.mxu0 0.0
          %2178 = vmatpush.msra.mxu0 0.0
          %2179 = vmatpush.msra.mxu0 0.0
          %2180 = vmatpush.msra.mxu0 0.0
          %2181 = vmatpush.msra.mxu0 0.0
          %2182 = vmatpush.msra.mxu0 0.0
          %2183 = vmatpush.msra.mxu0 0.0
          %2184 = vmatpush.msra.mxu0 0.0
          %2185 = vmatpush.msra.mxu0 0.0
          %2186 = vmatpush.msra.mxu0 0.0
          %2187 = vmatpush.msra.mxu0 0.0
          %2188 = vmatpush.msra.mxu0 0.0
          %2189 = vmatpush.msra.mxu0 0.0
          %2190 = vmatpush.msra.mxu0 %v2172
          %2191 = vmatpush.msra.mxu0 %v2171
          %2192 = vmatpush.msra.mxu0 %v2170
          %2193 = vmatmul.f32.gmra.mxu0 %v2175
          %v2194 = vpop.f32.mrf.mxu0
          %v2195 = vadd.f32 0.0, %v2194
          %2196 = vdwg.mxu0
          %v2198 = vsel %vm2173, %v2164, 0
          %2200 = vmatpush.msra.mxu0 0.0
          %2201 = vmatpush.msra.mxu0 0.0
          %2202 = vmatpush.msra.mxu0 0.0
          %2203 = vmatpush.msra.mxu0 0.0
          %2204 = vmatpush.msra.mxu0 0.0
          %2205 = vmatpush.msra.mxu0 0.0
          %2206 = vmatpush.msra.mxu0 0.0
          %2207 = vmatpush.msra.mxu0 0.0
          %2208 = vmatpush.msra.mxu0 0.0
          %2209 = vmatpush.msra.mxu0 0.0
          %2210 = vmatpush.msra.mxu0 0.0
          %2211 = vmatpush.msra.mxu0 0.0
          %2212 = vmatpush.msra.mxu0 0.0
          %2213 = vmatpush.msra.mxu0 %v2167
          %2214 = vmatpush.msra.mxu0 %v2166
          %2215 = vmatpush.msra.mxu0 %v2165
          %2216 = vmatmul.f32.gmra.mxu0 %v2198
          %v2217 = vpop.f32.mrf.mxu0
          %v2218 = vadd.f32 %v2195, %v2217
          %2219 = vdwg.mxu0
          %v2220 = vld [vmem:[%s2163 + $0x2] sm:$0xf]
          %s2221 = scalar_lea.vmem %s11, 48
          %v2222 = vld [vmem:[%s2221] sm:$0xff]
          %v2223 = vld [vmem:[%s2221 + $0x8] sm:$0xff]
          %v2224 = vld [vmem:[%s2221 + $0x10] sm:$0xff]
          %v2226 = vsel %vm2173, %v2220, 0
          %2228 = vmatpush.msra.mxu0 0.0
          %2229 = vmatpush.msra.mxu0 0.0
          %2230 = vmatpush.msra.mxu0 0.0
          %2231 = vmatpush.msra.mxu0 0.0
          %2232 = vmatpush.msra.mxu0 0.0
          %2233 = vmatpush.msra.mxu0 0.0
          %2234 = vmatpush.msra.mxu0 0.0
          %2235 = vmatpush.msra.mxu0 0.0
          %2236 = vmatpush.msra.mxu0 0.0
          %2237 = vmatpush.msra.mxu0 0.0
          %2238 = vmatpush.msra.mxu0 0.0
          %2239 = vmatpush.msra.mxu0 0.0
          %2240 = vmatpush.msra.mxu0 0.0
          %2241 = vmatpush.msra.mxu0 %v2224
          %2242 = vmatpush.msra.mxu0 %v2223
          %2243 = vmatpush.msra.mxu0 %v2222
          %2244 = vmatmul.f32.gmra.mxu0 %v2226
          %v2245 = vpop.f32.mrf.mxu0
          %v2246 = vadd.f32 0.0, %v2245
          %2247 = vdwg.mxu0
          %v2248 = vadd.f32 %v2218, %v2246
          %s2249 = sadd.s32 %s2157, 1
          %s2250 = smul.u32 %s2249, 8
          %s2251 = scalar_lea.vmem [#allocation7], %s2250
          %v2252 = vld [vmem:[%s2251] sm:$0xf]
          %s2253 = scalar_lea.vmem %s11, 72
          %v2254 = vld [vmem:[%s2253] sm:$0xff]
          %v2255 = vld [vmem:[%s2253 + $0x8] sm:$0xff]
          %v2256 = vld [vmem:[%s2253 + $0x10] sm:$0xff]
          %v2258 = vsel %vm2173, %v2252, 0
          %2260 = vmatpush.msra.mxu0 0.0
          %2261 = vmatpush.msra.mxu0 0.0
          %2262 = vmatpush.msra.mxu0 0.0
          %2263 = vmatpush.msra.mxu0 0.0
          %2264 = vmatpush.msra.mxu0 0.0
          %2265 = vmatpush.msra.mxu0 0.0
          %2266 = vmatpush.msra.mxu0 0.0
          %2267 = vmatpush.msra.mxu0 0.0
          %2268 = vmatpush.msra.mxu0 0.0
          %2269 = vmatpush.msra.mxu0 0.0
          %2270 = vmatpush.msra.mxu0 0.0
          %2271 = vmatpush.msra.mxu0 0.0
          %2272 = vmatpush.msra.mxu0 0.0
          %2273 = vmatpush.msra.mxu0 %v2256
          %2274 = vmatpush.msra.mxu0 %v2255
          %2275 = vmatpush.msra.mxu0 %v2254
          %2276 = vmatmul.f32.gmra.mxu0 %v2258
          %v2277 = vpop.f32.mrf.mxu0
          %v2278 = vadd.f32 0.0, %v2277
          %2279 = vdwg.mxu0
          %v2280 = vadd.f32 %v2248, %v2278
          %v2281 = vld [vmem:[%s2251 + $0x1] sm:$0xf]
          %s2282 = scalar_lea.vmem %s11, 96
          %v2283 = vld [vmem:[%s2282] sm:$0xff]
          %v2284 = vld [vmem:[%s2282 + $0x8] sm:$0xff]
          %v2285 = vld [vmem:[%s2282 + $0x10] sm:$0xff]
          %v2287 = vsel %vm2173, %v2281, 0
          %2289 = vmatpush.msra.mxu0 0.0
          %2290 = vmatpush.msra.mxu0 0.0
          %2291 = vmatpush.msra.mxu0 0.0
          %2292 = vmatpush.msra.mxu0 0.0
          %2293 = vmatpush.msra.mxu0 0.0
          %2294 = vmatpush.msra.mxu0 0.0
          %2295 = vmatpush.msra.mxu0 0.0
          %2296 = vmatpush.msra.mxu0 0.0
          %2297 = vmatpush.msra.mxu0 0.0
          %2298 = vmatpush.msra.mxu0 0.0
          %2299 = vmatpush.msra.mxu0 0.0
          %2300 = vmatpush.msra.mxu0 0.0
          %2301 = vmatpush.msra.mxu0 0.0
          %2302 = vmatpush.msra.mxu0 %v2285
          %2303 = vmatpush.msra.mxu0 %v2284
          %2304 = vmatpush.msra.mxu0 %v2283
          %2305 = vmatmul.f32.gmra.mxu0 %v2287
          %v2306 = vpop.f32.mrf.mxu0
          %v2307 = vadd.f32 0.0, %v2306
          %2308 = vdwg.mxu0
          %v2309 = vadd.f32 %v2280, %v2307
          %v2310 = vld [vmem:[%s2251 + $0x2] sm:$0xf]
          %s2311 = scalar_lea.vmem %s11, 120
          %v2312 = vld [vmem:[%s2311] sm:$0xff]
          %v2313 = vld [vmem:[%s2311 + $0x8] sm:$0xff]
          %v2314 = vld [vmem:[%s2311 + $0x10] sm:$0xff]
          %v2316 = vsel %vm2173, %v2310, 0
          %2318 = vmatpush.msra.mxu0 0.0
          %2319 = vmatpush.msra.mxu0 0.0
          %2320 = vmatpush.msra.mxu0 0.0
          %2321 = vmatpush.msra.mxu0 0.0
          %2322 = vmatpush.msra.mxu0 0.0
          %2323 = vmatpush.msra.mxu0 0.0
          %2324 = vmatpush.msra.mxu0 0.0
          %2325 = vmatpush.msra.mxu0 0.0
          %2326 = vmatpush.msra.mxu0 0.0
          %2327 = vmatpush.msra.mxu0 0.0
          %2328 = vmatpush.msra.mxu0 0.0
          %2329 = vmatpush.msra.mxu0 0.0
          %2330 = vmatpush.msra.mxu0 0.0
          %2331 = vmatpush.msra.mxu0 %v2314
          %2332 = vmatpush.msra.mxu0 %v2313
          %2333 = vmatpush.msra.mxu0 %v2312
          %2334 = vmatmul.f32.gmra.mxu0 %v2316
          %v2335 = vpop.f32.mrf.mxu0
          %v2336 = vadd.f32 0.0, %v2335
          %2337 = vdwg.mxu0
          %v2338 = vadd.f32 %v2309, %v2336
          %s2339 = sadd.s32 %s2157, 2
          %s2340 = smul.u32 %s2339, 8
          %s2341 = scalar_lea.vmem [#allocation7], %s2340
          %v2342 = vld [vmem:[%s2341] sm:$0xf]
          %s2343 = scalar_lea.vmem %s11, 144
          %v2344 = vld [vmem:[%s2343] sm:$0xff]
          %v2345 = vld [vmem:[%s2343 + $0x8] sm:$0xff]
          %v2346 = vld [vmem:[%s2343 + $0x10] sm:$0xff]
          %v2348 = vsel %vm2173, %v2342, 0
          %2350 = vmatpush.msra.mxu0 0.0
          %2351 = vmatpush.msra.mxu0 0.0
          %2352 = vmatpush.msra.mxu0 0.0
          %2353 = vmatpush.msra.mxu0 0.0
          %2354 = vmatpush.msra.mxu0 0.0
          %2355 = vmatpush.msra.mxu0 0.0
          %2356 = vmatpush.msra.mxu0 0.0
          %2357 = vmatpush.msra.mxu0 0.0
          %2358 = vmatpush.msra.mxu0 0.0
          %2359 = vmatpush.msra.mxu0 0.0
          %2360 = vmatpush.msra.mxu0 0.0
          %2361 = vmatpush.msra.mxu0 0.0
          %2362 = vmatpush.msra.mxu0 0.0
          %2363 = vmatpush.msra.mxu0 %v2346
          %2364 = vmatpush.msra.mxu0 %v2345
          %2365 = vmatpush.msra.mxu0 %v2344
          %2366 = vmatmul.f32.gmra.mxu0 %v2348
          %v2367 = vpop.f32.mrf.mxu0
          %v2368 = vadd.f32 0.0, %v2367
          %2369 = vdwg.mxu0
          %v2370 = vadd.f32 %v2338, %v2368
          %v2371 = vld [vmem:[%s2341 + $0x1] sm:$0xf]
          %s2372 = scalar_lea.vmem %s11, 168
          %v2373 = vld [vmem:[%s2372] sm:$0xff]
          %v2374 = vld [vmem:[%s2372 + $0x8] sm:$0xff]
          %v2375 = vld [vmem:[%s2372 + $0x10] sm:$0xff]
          %v2377 = vsel %vm2173, %v2371, 0
          %2379 = vmatpush.msra.mxu0 0.0
          %2380 = vmatpush.msra.mxu0 0.0
          %2381 = vmatpush.msra.mxu0 0.0
          %2382 = vmatpush.msra.mxu0 0.0
          %2383 = vmatpush.msra.mxu0 0.0
          %2384 = vmatpush.msra.mxu0 0.0
          %2385 = vmatpush.msra.mxu0 0.0
          %2386 = vmatpush.msra.mxu0 0.0
          %2387 = vmatpush.msra.mxu0 0.0
          %2388 = vmatpush.msra.mxu0 0.0
          %2389 = vmatpush.msra.mxu0 0.0
          %2390 = vmatpush.msra.mxu0 0.0
          %2391 = vmatpush.msra.mxu0 0.0
          %2392 = vmatpush.msra.mxu0 %v2375
          %2393 = vmatpush.msra.mxu0 %v2374
          %2394 = vmatpush.msra.mxu0 %v2373
          %2395 = vmatmul.f32.gmra.mxu0 %v2377
          %v2396 = vpop.f32.mrf.mxu0
          %v2397 = vadd.f32 0.0, %v2396
          %2398 = vdwg.mxu0
          %v2399 = vadd.f32 %v2370, %v2397
          %v2400 = vld [vmem:[%s2341 + $0x2] sm:$0xf]
          %s2401 = scalar_lea.vmem %s11, 192
          %v2402 = vld [vmem:[%s2401] sm:$0xff]
          %v2403 = vld [vmem:[%s2401 + $0x8] sm:$0xff]
          %v2404 = vld [vmem:[%s2401 + $0x10] sm:$0xff]
          %v2406 = vsel %vm2173, %v2400, 0
          %2408 = vmatpush.msra.mxu0 0.0
          %2409 = vmatpush.msra.mxu0 0.0
          %2410 = vmatpush.msra.mxu0 0.0
          %2411 = vmatpush.msra.mxu0 0.0
          %2412 = vmatpush.msra.mxu0 0.0
          %2413 = vmatpush.msra.mxu0 0.0
          %2414 = vmatpush.msra.mxu0 0.0
          %2415 = vmatpush.msra.mxu0 0.0
          %2416 = vmatpush.msra.mxu0 0.0
          %2417 = vmatpush.msra.mxu0 0.0
          %2418 = vmatpush.msra.mxu0 0.0
          %2419 = vmatpush.msra.mxu0 0.0
          %2420 = vmatpush.msra.mxu0 0.0
          %2421 = vmatpush.msra.mxu0 %v2404
          %2422 = vmatpush.msra.mxu0 %v2403
          %2423 = vmatpush.msra.mxu0 %v2402
          %2424 = vmatmul.f32.gmra.mxu0 %v2406
          %v2425 = vpop.f32.mrf.mxu0
          %v2426 = vadd.f32 0.0, %v2425
          %2427 = vdwg.mxu0
          %v2428 = vadd.f32 %v2399, %v2426
          %v2430 = vperm.slane %v2155, 0
          %v2432 = vadd.f32 %v2428, %v2430
          %s2433 = smul.u32 %s2157, 4
          %s2434 = scalar_lea.vmem [#allocation6], %s2433
          %v2435 = vld [vmem:[%s2434] sm:$0xf]
          %v2436 = vadd.f32 %v2432, %v2435
          %vm2437 = vcmask 388096
          %2438 = vst.msk [vmem:[%s2434] sm:$0xf] %vm2437, %v2436
        $region154: #{r_net_forward.1} parent=99 // loop_footer
          %s2161 = sadd.s32 1, %s2157
        $region155: #{r_net_forward.1} parent=99 // loop_footer_branch
          %2156 = sbr.rel target = $region151
        $region156: #{r_net_forward.1} parent=99 // loop_exit
          _
        %v2439 = vld [vmem:[%s14] sm:$0x1]
        loop: start=0, step=1, limit=3
        $region157: #{r_net_forward.1} parent=99 // loop_pre_header
          _
        $region158: #{r_net_forward.1} parent=99 // loop_header
          %s2441 = sphi 0, %s2445
          %p2442 = scmp.ge.s32.totalorder %s2441, 3
        $region159: #{r_net_forward.1} parent=99 // loop_header_branch
          %2444 = sbr.rel (%p2442) target = $region163
        $region160: #{r_net_forward.1} parent=99 // loop_body
          %s2446 = smul.u32 %s2441, 4
          %s2447 = scalar_lea.vmem [#allocation6], %s2446
          %v2448 = vld [vmem:[%s2447] sm:$0x7]
          %v2449 = vld [vmem:[%s13] sm:$0xff]
          %v2450 = vld [vmem:[%s13 + $0x8] sm:$0xff]
          %v2451 = vld [vmem:[%s13 + $0x10] sm:$0xff]
          %v2452 = vld [vmem:[%s13 + $0x18] sm:$0xff]
          %v2453 = vld [vmem:[%s13 + $0x20] sm:$0xff]
          %v2454 = vld [vmem:[%s13 + $0x28] sm:$0xff]
          %v2455 = vld [vmem:[%s2447 + $0x1] sm:$0x7]
          %s2456 = scalar_lea.vmem %s13, 48
          %v2457 = vld [vmem:[%s2456] sm:$0xff]
          %v2458 = vld [vmem:[%s2456 + $0x8] sm:$0xff]
          %v2459 = vld [vmem:[%s2456 + $0x10] sm:$0xff]
          %v2460 = vld [vmem:[%s2456 + $0x18] sm:$0xff]
          %v2461 = vld [vmem:[%s2456 + $0x20] sm:$0xff]
          %v2462 = vld [vmem:[%s2456 + $0x28] sm:$0xff]
          %vm2463 = vcmask 392192
          %v2465 = vsel %vm2463, %v2455, 0
          %2467 = vmatpush.msra.mxu0 0.0
          %2468 = vmatpush.msra.mxu0 0.0
          %2469 = vmatpush.msra.mxu0 0.0
          %2470 = vmatpush.msra.mxu0 0.0
          %2471 = vmatpush.msra.mxu0 0.0
          %2472 = vmatpush.msra.mxu0 0.0
          %2473 = vmatpush.msra.mxu0 0.0
          %2474 = vmatpush.msra.mxu0 0.0
          %2475 = vmatpush.msra.mxu0 0.0
          %2476 = vmatpush.msra.mxu0 0.0
          %2477 = vmatpush.msra.mxu0 %v2462
          %2478 = vmatpush.msra.mxu0 %v2461
          %2479 = vmatpush.msra.mxu0 %v2460
          %2480 = vmatpush.msra.mxu0 %v2459
          %2481 = vmatpush.msra.mxu0 %v2458
          %2482 = vmatpush.msra.mxu0 %v2457
          %2483 = vmatmul.f32.gmra.mxu0 %v2465
          %v2484 = vpop.f32.mrf.mxu0
          %v2485 = vadd.f32 0.0, %v2484
          %2486 = vdwg.mxu0
          %v2488 = vsel %vm2463, %v2448, 0
          %2490 = vmatpush.msra.mxu0 0.0
          %2491 = vmatpush.msra.mxu0 0.0
          %2492 = vmatpush.msra.mxu0 0.0
          %2493 = vmatpush.msra.mxu0 0.0
          %2494 = vmatpush.msra.mxu0 0.0
          %2495 = vmatpush.msra.mxu0 0.0
          %2496 = vmatpush.msra.mxu0 0.0
          %2497 = vmatpush.msra.mxu0 0.0
          %2498 = vmatpush.msra.mxu0 0.0
          %2499 = vmatpush.msra.mxu0 0.0
          %2500 = vmatpush.msra.mxu0 %v2454
          %2501 = vmatpush.msra.mxu0 %v2453
          %2502 = vmatpush.msra.mxu0 %v2452
          %2503 = vmatpush.msra.mxu0 %v2451
          %2504 = vmatpush.msra.mxu0 %v2450
          %2505 = vmatpush.msra.mxu0 %v2449
          %2506 = vmatmul.f32.gmra.mxu0 %v2488
          %v2507 = vpop.f32.mrf.mxu0
          %v2508 = vadd.f32 %v2485, %v2507
          %2509 = vdwg.mxu0
          %s2510 = sadd.s32 %s2441, 1
          %s2511 = smul.u32 %s2510, 4
          %s2512 = scalar_lea.vmem [#allocation6], %s2511
          %v2513 = vld [vmem:[%s2512] sm:$0x7]
          %s2514 = scalar_lea.vmem %s13, 96
          %v2515 = vld [vmem:[%s2514] sm:$0xff]
          %v2516 = vld [vmem:[%s2514 + $0x8] sm:$0xff]
          %v2517 = vld [vmem:[%s2514 + $0x10] sm:$0xff]
          %v2518 = vld [vmem:[%s2514 + $0x18] sm:$0xff]
          %v2519 = vld [vmem:[%s2514 + $0x20] sm:$0xff]
          %v2520 = vld [vmem:[%s2514 + $0x28] sm:$0xff]
          %v2522 = vsel %vm2463, %v2513, 0
          %2524 = vmatpush.msra.mxu0 0.0
          %2525 = vmatpush.msra.mxu0 0.0
          %2526 = vmatpush.msra.mxu0 0.0
          %2527 = vmatpush.msra.mxu0 0.0
          %2528 = vmatpush.msra.mxu0 0.0
          %2529 = vmatpush.msra.mxu0 0.0
          %2530 = vmatpush.msra.mxu0 0.0
          %2531 = vmatpush.msra.mxu0 0.0
          %2532 = vmatpush.msra.mxu0 0.0
          %2533 = vmatpush.msra.mxu0 0.0
          %2534 = vmatpush.msra.mxu0 %v2520
          %2535 = vmatpush.msra.mxu0 %v2519
          %2536 = vmatpush.msra.mxu0 %v2518
          %2537 = vmatpush.msra.mxu0 %v2517
          %2538 = vmatpush.msra.mxu0 %v2516
          %2539 = vmatpush.msra.mxu0 %v2515
          %2540 = vmatmul.f32.gmra.mxu0 %v2522
          %v2541 = vpop.f32.mrf.mxu0
          %v2542 = vadd.f32 0.0, %v2541
          %2543 = vdwg.mxu0
          %v2544 = vadd.f32 %v2508, %v2542
          %v2545 = vld [vmem:[%s2512 + $0x1] sm:$0x7]
          %s2546 = scalar_lea.vmem %s13, 144
          %v2547 = vld [vmem:[%s2546] sm:$0xff]
          %v2548 = vld [vmem:[%s2546 + $0x8] sm:$0xff]
          %v2549 = vld [vmem:[%s2546 + $0x10] sm:$0xff]
          %v2550 = vld [vmem:[%s2546 + $0x18] sm:$0xff]
          %v2551 = vld [vmem:[%s2546 + $0x20] sm:$0xff]
          %v2552 = vld [vmem:[%s2546 + $0x28] sm:$0xff]
          %v2554 = vsel %vm2463, %v2545, 0
          %2556 = vmatpush.msra.mxu0 0.0
          %2557 = vmatpush.msra.mxu0 0.0
          %2558 = vmatpush.msra.mxu0 0.0
          %2559 = vmatpush.msra.mxu0 0.0
          %2560 = vmatpush.msra.mxu0 0.0
          %2561 = vmatpush.msra.mxu0 0.0
          %2562 = vmatpush.msra.mxu0 0.0
          %2563 = vmatpush.msra.mxu0 0.0
          %2564 = vmatpush.msra.mxu0 0.0
          %2565 = vmatpush.msra.mxu0 0.0
          %2566 = vmatpush.msra.mxu0 %v2552
          %2567 = vmatpush.msra.mxu0 %v2551
          %2568 = vmatpush.msra.mxu0 %v2550
          %2569 = vmatpush.msra.mxu0 %v2549
          %2570 = vmatpush.msra.mxu0 %v2548
          %2571 = vmatpush.msra.mxu0 %v2547
          %2572 = vmatmul.f32.gmra.mxu0 %v2554
          %v2573 = vpop.f32.mrf.mxu0
          %v2574 = vadd.f32 0.0, %v2573
          %2575 = vdwg.mxu0
          %v2576 = vadd.f32 %v2544, %v2574
          %v2578 = vperm.slane %v2439, 0
          %v2580 = vadd.f32 %v2576, %v2578
          %vm2581 = vcmp.gt.f32.partialorder %v2580, 0.0
          %v2583 = vperm.slane %v663, 0
          %2584 = vset.pattern.permute.xlu0 2
          %2585 = vperm.xlu0 %2584, %v2583
          %v2586 = vpop.permute.xlu0 %2585
          %v2588 = vmul.f32 %v2586, %v2580
          %v2589 = vsel %vm2581, %v2580, %v2588
          %s2590 = scalar_lea.vmem [#allocation8], %s2446
          %vm2591 = vcmask 518144
          %2592 = vst.msk [vmem:[%s2590] sm:$0x7] %vm2591, %v2589
        $region161: #{r_net_forward.1} parent=99 // loop_footer
          %s2445 = sadd.s32 1, %s2441
        $region162: #{r_net_forward.1} parent=99 // loop_footer_branch
          %2440 = sbr.rel target = $region158
        $region163: #{r_net_forward.1} parent=99 // loop_exit
          _
        %v2593 = vld [vmem:[%s16] sm:$0x1]
        %v2594 = vld [vmem:[#allocation8] sm:$0x1]
        %v2595 = vld [vmem:[%s15] sm:$0xff]
        %v2596 = vld [vmem:[%s15 + $0x8] sm:$0xff]
        %v2597 = vld [vmem:[%s15 + $0x10] sm:$0xff]
        %v2598 = vld [vmem:[%s15 + $0x18] sm:$0xff]
        %v2599 = vld [vmem:[%s15 + $0x20] sm:$0xff]
        %v2600 = vld [vmem:[%s15 + $0x28] sm:$0xff]
        %v2601 = vld [vmem:[%s15 + $0x30] sm:$0xff]
        %v2602 = vld [vmem:[%s15 + $0x38] sm:$0xff]
        %vm2603 = vcmask 523264
        %v2605 = vsel %vm2603, %v2594, 0
        %2607 = vmatpush.msra.mxu0 0.0
        %2608 = vmatpush.msra.mxu0 0.0
        %2609 = vmatpush.msra.mxu0 0.0
        %2610 = vmatpush.msra.mxu0 0.0
        %2611 = vmatpush.msra.mxu0 0.0
        %2612 = vmatpush.msra.mxu0 0.0
        %2613 = vmatpush.msra.mxu0 0.0
        %2614 = vmatpush.msra.mxu0 0.0
        %2615 = vmatpush.msra.mxu0 %v2602
        %2616 = vmatpush.msra.mxu0 %v2601
        %2617 = vmatpush.msra.mxu0 %v2600
        %2618 = vmatpush.msra.mxu0 %v2599
        %2619 = vmatpush.msra.mxu0 %v2598
        %2620 = vmatpush.msra.mxu0 %v2597
        %2621 = vmatpush.msra.mxu0 %v2596
        %2622 = vmatpush.msra.mxu0 %v2595
        %2623 = vmatmul.f32.gmra.mxu0 %v2605
        %v2624 = vpop.f32.mrf.mxu0
        %v2625 = vadd.f32 0.0, %v2624
        %2626 = vdwg.mxu0
        %v2627 = vadd.f32 %v2593, %v2625
        %v2628 = vld [vmem:[#allocation8 + $0x1] sm:$0x1]
        %s2629 = scalar_lea.vmem %s15, 64
        %v2630 = vld [vmem:[%s2629] sm:$0xff]
        %v2631 = vld [vmem:[%s2629 + $0x8] sm:$0xff]
        %v2632 = vld [vmem:[%s2629 + $0x10] sm:$0xff]
        %v2633 = vld [vmem:[%s2629 + $0x18] sm:$0xff]
        %v2634 = vld [vmem:[%s2629 + $0x20] sm:$0xff]
        %v2635 = vld [vmem:[%s2629 + $0x28] sm:$0xff]
        %v2636 = vld [vmem:[%s2629 + $0x30] sm:$0xff]
        %v2637 = vld [vmem:[%s2629 + $0x38] sm:$0xff]
        %v2639 = vsel %vm2603, %v2628, 0
        %2641 = vmatpush.msra.mxu0 0.0
        %2642 = vmatpush.msra.mxu0 0.0
        %2643 = vmatpush.msra.mxu0 0.0
        %2644 = vmatpush.msra.mxu0 0.0
        %2645 = vmatpush.msra.mxu0 0.0
        %2646 = vmatpush.msra.mxu0 0.0
        %2647 = vmatpush.msra.mxu0 0.0
        %2648 = vmatpush.msra.mxu0 0.0
        %2649 = vmatpush.msra.mxu0 %v2637
        %2650 = vmatpush.msra.mxu0 %v2636
        %2651 = vmatpush.msra.mxu0 %v2635
        %2652 = vmatpush.msra.mxu0 %v2634
        %2653 = vmatpush.msra.mxu0 %v2633
        %2654 = vmatpush.msra.mxu0 %v2632
        %2655 = vmatpush.msra.mxu0 %v2631
        %2656 = vmatpush.msra.mxu0 %v2630
        %2657 = vmatmul.f32.gmra.mxu0 %v2639
        %v2658 = vpop.f32.mrf.mxu0
        %v2659 = vadd.f32 0.0, %v2658
        %2660 = vdwg.mxu0
        %v2661 = vadd.f32 %v2627, %v2659
        %v2662 = vld [vmem:[#allocation8 + $0x2] sm:$0x1]
        %s2663 = scalar_lea.vmem %s15, 128
        %v2664 = vld [vmem:[%s2663] sm:$0xff]
        %v2665 = vld [vmem:[%s2663 + $0x8] sm:$0xff]
        %v2666 = vld [vmem:[%s2663 + $0x10] sm:$0xff]
        %v2667 = vld [vmem:[%s2663 + $0x18] sm:$0xff]
        %v2668 = vld [vmem:[%s2663 + $0x20] sm:$0xff]
        %v2669 = vld [vmem:[%s2663 + $0x28] sm:$0xff]
        %v2670 = vld [vmem:[%s2663 + $0x30] sm:$0xff]
        %v2671 = vld [vmem:[%s2663 + $0x38] sm:$0xff]
        %v2673 = vsel %vm2603, %v2662, 0
        %2675 = vmatpush.msra.mxu0 0.0
        %2676 = vmatpush.msra.mxu0 0.0
        %2677 = vmatpush.msra.mxu0 0.0
        %2678 = vmatpush.msra.mxu0 0.0
        %2679 = vmatpush.msra.mxu0 0.0
        %2680 = vmatpush.msra.mxu0 0.0
        %2681 = vmatpush.msra.mxu0 0.0
        %2682 = vmatpush.msra.mxu0 0.0
        %2683 = vmatpush.msra.mxu0 %v2671
        %2684 = vmatpush.msra.mxu0 %v2670
        %2685 = vmatpush.msra.mxu0 %v2669
        %2686 = vmatpush.msra.mxu0 %v2668
        %2687 = vmatpush.msra.mxu0 %v2667
        %2688 = vmatpush.msra.mxu0 %v2666
        %2689 = vmatpush.msra.mxu0 %v2665
        %2690 = vmatpush.msra.mxu0 %v2664
        %2691 = vmatmul.f32.gmra.mxu0 %v2673
        %v2692 = vpop.f32.mrf.mxu0
        %v2693 = vadd.f32 0.0, %v2692
        %2694 = vdwg.mxu0
        %v2695 = vadd.f32 %v2661, %v2693
        %s2696 = scalar_lea.vmem [#allocation8], 4
        %v2697 = vld [vmem:[%s2696] sm:$0x1]
        %s2698 = scalar_lea.vmem %s15, 192
        %v2699 = vld [vmem:[%s2698] sm:$0xff]
        %v2700 = vld [vmem:[%s2698 + $0x8] sm:$0xff]
        %v2701 = vld [vmem:[%s2698 + $0x10] sm:$0xff]
        %v2702 = vld [vmem:[%s2698 + $0x18] sm:$0xff]
        %v2703 = vld [vmem:[%s2698 + $0x20] sm:$0xff]
        %v2704 = vld [vmem:[%s2698 + $0x28] sm:$0xff]
        %v2705 = vld [vmem:[%s2698 + $0x30] sm:$0xff]
        %v2706 = vld [vmem:[%s2698 + $0x38] sm:$0xff]
        %v2708 = vsel %vm2603, %v2697, 0
        %2710 = vmatpush.msra.mxu0 0.0
        %2711 = vmatpush.msra.mxu0 0.0
        %2712 = vmatpush.msra.mxu0 0.0
        %2713 = vmatpush.msra.mxu0 0.0
        %2714 = vmatpush.msra.mxu0 0.0
        %2715 = vmatpush.msra.mxu0 0.0
        %2716 = vmatpush.msra.mxu0 0.0
        %2717 = vmatpush.msra.mxu0 0.0
        %2718 = vmatpush.msra.mxu0 %v2706
        %2719 = vmatpush.msra.mxu0 %v2705
        %2720 = vmatpush.msra.mxu0 %v2704
        %2721 = vmatpush.msra.mxu0 %v2703
        %2722 = vmatpush.msra.mxu0 %v2702
        %2723 = vmatpush.msra.mxu0 %v2701
        %2724 = vmatpush.msra.mxu0 %v2700
        %2725 = vmatpush.msra.mxu0 %v2699
        %2726 = vmatmul.f32.gmra.mxu0 %v2708
        %v2727 = vpop.f32.mrf.mxu0
        %v2728 = vadd.f32 0.0, %v2727
        %2729 = vdwg.mxu0
        %v2730 = vadd.f32 %v2695, %v2728
        %v2731 = vld [vmem:[%s2696 + $0x1] sm:$0x1]
        %s2732 = scalar_lea.vmem %s15, 256
        %v2733 = vld [vmem:[%s2732] sm:$0xff]
        %v2734 = vld [vmem:[%s2732 + $0x8] sm:$0xff]
        %v2735 = vld [vmem:[%s2732 + $0x10] sm:$0xff]
        %v2736 = vld [vmem:[%s2732 + $0x18] sm:$0xff]
        %v2737 = vld [vmem:[%s2732 + $0x20] sm:$0xff]
        %v2738 = vld [vmem:[%s2732 + $0x28] sm:$0xff]
        %v2739 = vld [vmem:[%s2732 + $0x30] sm:$0xff]
        %v2740 = vld [vmem:[%s2732 + $0x38] sm:$0xff]
        %v2742 = vsel %vm2603, %v2731, 0
        %2744 = vmatpush.msra.mxu0 0.0
        %2745 = vmatpush.msra.mxu0 0.0
        %2746 = vmatpush.msra.mxu0 0.0
        %2747 = vmatpush.msra.mxu0 0.0
        %2748 = vmatpush.msra.mxu0 0.0
        %2749 = vmatpush.msra.mxu0 0.0
        %2750 = vmatpush.msra.mxu0 0.0
        %2751 = vmatpush.msra.mxu0 0.0
        %2752 = vmatpush.msra.mxu0 %v2740
        %2753 = vmatpush.msra.mxu0 %v2739
        %2754 = vmatpush.msra.mxu0 %v2738
        %2755 = vmatpush.msra.mxu0 %v2737
        %2756 = vmatpush.msra.mxu0 %v2736
        %2757 = vmatpush.msra.mxu0 %v2735
        %2758 = vmatpush.msra.mxu0 %v2734
        %2759 = vmatpush.msra.mxu0 %v2733
        %2760 = vmatmul.f32.gmra.mxu0 %v2742
        %v2761 = vpop.f32.mrf.mxu0
        %v2762 = vadd.f32 0.0, %v2761
        %2763 = vdwg.mxu0
        %v2764 = vadd.f32 %v2730, %v2762
        %v2765 = vld [vmem:[%s2696 + $0x2] sm:$0x1]
        %s2766 = scalar_lea.vmem %s15, 320
        %v2767 = vld [vmem:[%s2766] sm:$0xff]
        %v2768 = vld [vmem:[%s2766 + $0x8] sm:$0xff]
        %v2769 = vld [vmem:[%s2766 + $0x10] sm:$0xff]
        %v2770 = vld [vmem:[%s2766 + $0x18] sm:$0xff]
        %v2771 = vld [vmem:[%s2766 + $0x20] sm:$0xff]
        %v2772 = vld [vmem:[%s2766 + $0x28] sm:$0xff]
        %v2773 = vld [vmem:[%s2766 + $0x30] sm:$0xff]
        %v2774 = vld [vmem:[%s2766 + $0x38] sm:$0xff]
        %v2776 = vsel %vm2603, %v2765, 0
        %2778 = vmatpush.msra.mxu0 0.0
        %2779 = vmatpush.msra.mxu0 0.0
        %2780 = vmatpush.msra.mxu0 0.0
        %2781 = vmatpush.msra.mxu0 0.0
        %2782 = vmatpush.msra.mxu0 0.0
        %2783 = vmatpush.msra.mxu0 0.0
        %2784 = vmatpush.msra.mxu0 0.0
        %2785 = vmatpush.msra.mxu0 0.0
        %2786 = vmatpush.msra.mxu0 %v2774
        %2787 = vmatpush.msra.mxu0 %v2773
        %2788 = vmatpush.msra.mxu0 %v2772
        %2789 = vmatpush.msra.mxu0 %v2771
        %2790 = vmatpush.msra.mxu0 %v2770
        %2791 = vmatpush.msra.mxu0 %v2769
        %2792 = vmatpush.msra.mxu0 %v2768
        %2793 = vmatpush.msra.mxu0 %v2767
        %2794 = vmatmul.f32.gmra.mxu0 %v2776
        %v2795 = vpop.f32.mrf.mxu0
        %v2796 = vadd.f32 0.0, %v2795
        %2797 = vdwg.mxu0
        %v2798 = vadd.f32 %v2764, %v2796
        %s2799 = scalar_lea.vmem [#allocation8], 8
        %v2800 = vld [vmem:[%s2799] sm:$0x1]
        %s2801 = scalar_lea.vmem %s15, 384
        %v2802 = vld [vmem:[%s2801] sm:$0xff]
        %v2803 = vld [vmem:[%s2801 + $0x8] sm:$0xff]
        %v2804 = vld [vmem:[%s2801 + $0x10] sm:$0xff]
        %v2805 = vld [vmem:[%s2801 + $0x18] sm:$0xff]
        %v2806 = vld [vmem:[%s2801 + $0x20] sm:$0xff]
        %v2807 = vld [vmem:[%s2801 + $0x28] sm:$0xff]
        %v2808 = vld [vmem:[%s2801 + $0x30] sm:$0xff]
        %v2809 = vld [vmem:[%s2801 + $0x38] sm:$0xff]
        %v2811 = vsel %vm2603, %v2800, 0
        %2813 = vmatpush.msra.mxu0 0.0
        %2814 = vmatpush.msra.mxu0 0.0
        %2815 = vmatpush.msra.mxu0 0.0
        %2816 = vmatpush.msra.mxu0 0.0
        %2817 = vmatpush.msra.mxu0 0.0
        %2818 = vmatpush.msra.mxu0 0.0
        %2819 = vmatpush.msra.mxu0 0.0
        %2820 = vmatpush.msra.mxu0 0.0
        %2821 = vmatpush.msra.mxu0 %v2809
        %2822 = vmatpush.msra.mxu0 %v2808
        %2823 = vmatpush.msra.mxu0 %v2807
        %2824 = vmatpush.msra.mxu0 %v2806
        %2825 = vmatpush.msra.mxu0 %v2805
        %2826 = vmatpush.msra.mxu0 %v2804
        %2827 = vmatpush.msra.mxu0 %v2803
        %2828 = vmatpush.msra.mxu0 %v2802
        %2829 = vmatmul.f32.gmra.mxu0 %v2811
        %v2830 = vpop.f32.mrf.mxu0
        %v2831 = vadd.f32 0.0, %v2830
        %2832 = vdwg.mxu0
        %v2833 = vadd.f32 %v2798, %v2831
        %v2834 = vld [vmem:[%s2799 + $0x1] sm:$0x1]
        %s2835 = scalar_lea.vmem %s15, 448
        %v2836 = vld [vmem:[%s2835] sm:$0xff]
        %v2837 = vld [vmem:[%s2835 + $0x8] sm:$0xff]
        %v2838 = vld [vmem:[%s2835 + $0x10] sm:$0xff]
        %v2839 = vld [vmem:[%s2835 + $0x18] sm:$0xff]
        %v2840 = vld [vmem:[%s2835 + $0x20] sm:$0xff]
        %v2841 = vld [vmem:[%s2835 + $0x28] sm:$0xff]
        %v2842 = vld [vmem:[%s2835 + $0x30] sm:$0xff]
        %v2843 = vld [vmem:[%s2835 + $0x38] sm:$0xff]
        %v2845 = vsel %vm2603, %v2834, 0
        %2847 = vmatpush.msra.mxu0 0.0
        %2848 = vmatpush.msra.mxu0 0.0
        %2849 = vmatpush.msra.mxu0 0.0
        %2850 = vmatpush.msra.mxu0 0.0
        %2851 = vmatpush.msra.mxu0 0.0
        %2852 = vmatpush.msra.mxu0 0.0
        %2853 = vmatpush.msra.mxu0 0.0
        %2854 = vmatpush.msra.mxu0 0.0
        %2855 = vmatpush.msra.mxu0 %v2843
        %2856 = vmatpush.msra.mxu0 %v2842
        %2857 = vmatpush.msra.mxu0 %v2841
        %2858 = vmatpush.msra.mxu0 %v2840
        %2859 = vmatpush.msra.mxu0 %v2839
        %2860 = vmatpush.msra.mxu0 %v2838
        %2861 = vmatpush.msra.mxu0 %v2837
        %2862 = vmatpush.msra.mxu0 %v2836
        %2863 = vmatmul.f32.gmra.mxu0 %v2845
        %v2864 = vpop.f32.mrf.mxu0
        %v2865 = vadd.f32 0.0, %v2864
        %2866 = vdwg.mxu0
        %v2867 = vadd.f32 %v2833, %v2865
        %v2868 = vld [vmem:[%s2799 + $0x2] sm:$0x1]
        %s2869 = scalar_lea.vmem %s15, 512
        %v2870 = vld [vmem:[%s2869] sm:$0xff]
        %v2871 = vld [vmem:[%s2869 + $0x8] sm:$0xff]
        %v2872 = vld [vmem:[%s2869 + $0x10] sm:$0xff]
        %v2873 = vld [vmem:[%s2869 + $0x18] sm:$0xff]
        %v2874 = vld [vmem:[%s2869 + $0x20] sm:$0xff]
        %v2875 = vld [vmem:[%s2869 + $0x28] sm:$0xff]
        %v2876 = vld [vmem:[%s2869 + $0x30] sm:$0xff]
        %v2877 = vld [vmem:[%s2869 + $0x38] sm:$0xff]
        %v2879 = vsel %vm2603, %v2868, 0
        %2881 = vmatpush.msra.mxu0 0.0
        %2882 = vmatpush.msra.mxu0 0.0
        %2883 = vmatpush.msra.mxu0 0.0
        %2884 = vmatpush.msra.mxu0 0.0
        %2885 = vmatpush.msra.mxu0 0.0
        %2886 = vmatpush.msra.mxu0 0.0
        %2887 = vmatpush.msra.mxu0 0.0
        %2888 = vmatpush.msra.mxu0 0.0
        %2889 = vmatpush.msra.mxu0 %v2877
        %2890 = vmatpush.msra.mxu0 %v2876
        %2891 = vmatpush.msra.mxu0 %v2875
        %2892 = vmatpush.msra.mxu0 %v2874
        %2893 = vmatpush.msra.mxu0 %v2873
        %2894 = vmatpush.msra.mxu0 %v2872
        %2895 = vmatpush.msra.mxu0 %v2871
        %2896 = vmatpush.msra.mxu0 %v2870
        %2897 = vmatmul.f32.gmra.mxu0 %v2879
        %v2898 = vpop.f32.mrf.mxu0
        %v2899 = vadd.f32 0.0, %v2898
        %2900 = vdwg.mxu0
        %v2901 = vadd.f32 %v2867, %v2899
        %vm2902 = vcmp.gt.f32.partialorder %v2901, 0.0
        %2904 = vset.pattern.permute.xlu0 3
        %2905 = vperm.xlu0 %2904, %v663
        %v2906 = vpop.permute.xlu0 %2905
        %v2908 = vperm.slane %v2906, 0
        %v2909 = vmul.f32 %v2908, %v2901
        %v2910 = vsel %vm2902, %v2901, %v2909
        %v2911 = vld [vmem:[%s17] sm:$0xff]
        %v2912 = vld [vmem:[%s17 + $0x8] sm:$0xff]
        %v2913 = vld [vmem:[%s17 + $0x10] sm:$0xff]
        %v2914 = vld [vmem:[%s17 + $0x18] sm:$0xff]
        %v2915 = vld [vmem:[%s17 + $0x20] sm:$0xff]
        %v2916 = vld [vmem:[%s17 + $0x28] sm:$0xff]
        %v2917 = vld [vmem:[%s17 + $0x30] sm:$0xff]
        %v2918 = vld [vmem:[%s17 + $0x38] sm:$0xff]
        %v2919 = vld [vmem:[%s17 + $0x40] sm:$0xff]
        %v2920 = vld [vmem:[%s17 + $0x48] sm:$0xff]
        %v2921 = vld [vmem:[%s17 + $0x50] sm:$0xff]
        %v2922 = vld [vmem:[%s17 + $0x58] sm:$0xff]
        %v2923 = vld [vmem:[%s17 + $0x60] sm:$0xff]
        %v2924 = vld [vmem:[%s17 + $0x68] sm:$0xff]
        %v2925 = vld [vmem:[%s17 + $0x70] sm:$0xff]
        %v2926 = vld [vmem:[%s17 + $0x78] sm:$0xff]
        %v2927 = vld [vmem:[%s18] sm:$0x1]
        %2928 = vmatpush.msra.mxu0 %v2926
        %2929 = vmatpush.msra.mxu0 %v2925
        %2930 = vmatpush.msra.mxu0 %v2924
        %2931 = vmatpush.msra.mxu0 %v2923
        %2932 = vmatpush.msra.mxu0 %v2922
        %2933 = vmatpush.msra.mxu0 %v2921
        %2934 = vmatpush.msra.mxu0 %v2920
        %2935 = vmatpush.msra.mxu0 %v2919
        %2936 = vmatpush.msra.mxu0 %v2918
        %2937 = vmatpush.msra.mxu0 %v2917
        %2938 = vmatpush.msra.mxu0 %v2916
        %2939 = vmatpush.msra.mxu0 %v2915
        %2940 = vmatpush.msra.mxu0 %v2914
        %2941 = vmatpush.msra.mxu0 %v2913
        %2942 = vmatpush.msra.mxu0 %v2912
        %2943 = vmatpush.msra.mxu0 %v2911
        %2944 = vmatmul.f32.gmra.mxu0 %v2910
        %v2945 = vpop.f32.mrf.mxu0
        %v2946 = vadd.f32 %v2927, %v2945
        %2947 = vdwg.mxu0
        %v2948 = vxor.u32 %v2946, 2147483648
        %v2949 = vmul.f32 %v2948, 1.442695
        %v2950 = vpow.pop %v2949
        %v2951 = vadd.f32 %v2950, 1.0
        %v2952 = vrcp.pop %v2951
        %v2953 = vmul.f32 %v2951, %v2952
        %v2954 = vsub.f32 1.0, %v2953
        %v2955 = vmul.f32 %v2952, %v2954
        %v2956 = vadd.f32 %v2952, %v2955
        %vm2957 = vweird.f32 %v2951
        %vm2958 = vweird.f32 %v2952
        %vm2959 = vmor %vm2957, %vm2958
        %v2960 = vsel %vm2959, %v2952, %v2956
        %v2961 = vand.u32 2147483647, %v2951
        %vm2962 = vcmp.eq.f32.partialorder %v2961, 8.507059e+37
        %v2963 = vand.u32 %v2951, 2147483648
        %v2964 = vor.u32 1.1754944e-38, %v2963
        %v2965 = vsel %vm2962, %v2964, %v2960
        %v2966 = vmul.f32 1.0, %v2965
        %vm2967 = vcmask 0
        %2968 = vst.msk [vmem:[%s662] sm:$0x1] %vm2967, %v2966
        %2970 = vrot.lane.b32.xlu0 %v2946, 127
        %v2971 = vpop.permute.xlu0 %2970
        %vm2973 = vcmask 24576
        %2974 = vst.msk [vmem:[%s654] sm:$0x1] %vm2973, %v2971
        %p2975 = scmp.lt.s32.totalorder %s36, 1
        %s2976 = scalar_select %p2975, %s36, 1
        %s2977 = scalar_lea.vmem %s20, %s2976
        %s2978 = sand.u32 %s495, 1
        %s2979 = scalar_lea.sflag [#allocation10], %s2978
        %s2980 = sand.u32 %s495, 1
        %s2981 = scalar_lea.vmem [#allocation9], %s2980
        // Predicated region
        $region164: #{r_net_forward.1} parent=99 // pred_check
          %p2982 = pneg %p479
        $region165: #{r_net_forward.1} parent=99 // pred_check_branch
          %2984 = sbr.rel (%p2982) target = $region167
        $region166: #{r_net_forward.1} parent=99 // pred_region
          _
        $region167: #{r_net_forward.1} parent=99 // pred_fallthru
          _
        // Predicated region
        $region168: #{r_net_forward.1} parent=99 // pred_check
          %p2985 = pneg %p505
        $region169: #{r_net_forward.1} parent=99 // pred_check_branch
          %2987 = sbr.rel (%p2985) target = $region171
        $region170: #{r_net_forward.1} parent=99 // pred_region
          %2989 = vsyncadd %s2979, 0
          %s2990 = scalar_lea.hbm %s21, %s36
          %s2992 = sshll.u32 %s2981, 4
          %s2993 = int_to_ptr.vmem [resolvable:$true] %s2992
          %s2994 = sshll.u32 %s2990, 4
          %s2995 = int_to_ptr.hbm [resolvable:$true] %s2994
          %2997 = dma.vmem_to_hbm [thread:$0]  %s2993, 16, %s2995, %s2979
        $region171: #{r_net_forward.1} parent=99 // pred_fallthru
          _
      $region100: #{r_net_forward.1} parent=5 // pred_fallthru
        _
      %p2998 = scmp.le.s32.totalorder 2, %s31
      // Predicated region
      $region172: #{r_net_forward.1} parent=5 // pred_check
        %p2999 = pneg %p2998
      $region173: #{r_net_forward.1} parent=5 // pred_check_branch
        %3001 = sbr.rel (%p2999) target = $region175
      $region174: #{r_net_forward.1} parent=5 // pred_region
        %s3002 = ssub.s32 %s31, 2
        // Predicated region
        $region176: #{r_net_forward.1} parent=174 // pred_check
          %p3003 = pneg %p485
        $region177: #{r_net_forward.1} parent=174 // pred_check_branch
          %3005 = sbr.rel (%p3003) target = $region179
        $region178: #{r_net_forward.1} parent=174 // pred_region
          %p3006 = scmp.lt.s32.totalorder %s37, 1
          %s3007 = scalar_select %p3006, %s37, 1
          %s3008 = scalar_lea.vmem %s20, %s3007
        $region179: #{r_net_forward.1} parent=174 // pred_fallthru
          _
        // Predicated region
        $region180: #{r_net_forward.1} parent=174 // pred_check
          %p3009 = pneg %p511
        $region181: #{r_net_forward.1} parent=174 // pred_check_branch
          %3011 = sbr.rel (%p3009) target = $region183
        $region182: #{r_net_forward.1} parent=174 // pred_region
          %s3012 = sand.u32 %s496, 1
          %s3013 = scalar_lea.sflag [#allocation10], %s3012
          %s3014 = sand.u32 %s496, 1
          %s3015 = scalar_lea.vmem [#allocation9], %s3014
          %3017 = dma.done %s3013, 16
        $region183: #{r_net_forward.1} parent=174 // pred_fallthru
          _
      $region175: #{r_net_forward.1} parent=5 // pred_fallthru
        _
    $region6: #{r_net_forward.1} parent=1 // loop_footer
      %s35 = sadd.s32 1, %s31
    $region7: #{r_net_forward.1} parent=1 // loop_footer_branch
      %30 = sbr.rel target = $region3
    $region8: #{r_net_forward.1} parent=1 // loop_exit
      _
    %3018 = vsyncpa [#allocation10], 1
    %s3019 = scalar_lea.sflag [#allocation10], 1
    %3020 = vsyncpa %s3019, 1

</llo_original>
